<compile_context>
chip_gen: v7x
topology: tpu7x:2x2x1
jax: 0.10.0
libtpu: 0.0.40
codegen_flags: <defaults>
</compile_context>

<pallas_src>
from functools import partial

import numpy as np

import jax
import jax.numpy as jnp
from jax.experimental import pallas as pl
from jax.experimental.pallas import tpu as pltpu


_BATCH_TILE = 128   # default images per grid step (sweep 64-128); clamped below.
_PACKED_KEYS = ("t1", "b1", "m2", "b2", "m3", "b3", "wf1", "bf1", "wf2", "bf2")


# ---------------------------------------------------------------------------
# The fused Pallas kernel
# ---------------------------------------------------------------------------
def _lenet5_kernel(x_ref, t1_ref, b1_ref, m2_ref, b2_ref, m3_ref, b3_ref,
                   wf1_ref, bf1_ref, wf2_ref, bf2_ref, out_ref):
    """Whole LeNet5 forward for one batch tile.

    x_ref: (32, TB, 32) = (image row, image-in-tile, image col), TB % 8 == 0.
    Activations live as 2-D slabs: rows = (output row, image), cols =
    (output col, channel), so every layer is a lane-dense MXU matmul.
    Weights (bf16) stay VMEM-resident (constant block index across the grid).
    """
    f32, bf16 = jnp.float32, jnp.bfloat16
    tb = x_ref.shape[1]

    def dot(a, b):
        # bf16 MXU inputs, f32 accumulation.
        return jnp.dot(a.astype(bf16), b, preferred_element_type=f32)

    # conv1 (5x5, 1->6) + tanh: lhs cols = (kernel row i, input col w),
    # t1 is the W-direction Toeplitz expansion of the conv1 weights.
    lhs1 = jnp.concatenate(
        [x_ref[pl.ds(i, 28), :, :].reshape(28 * tb, 32) for i in range(5)],
        axis=1)                                               # (28*TB, 160) f32
    a1 = jnp.tanh(dot(lhs1, t1_ref[...]) + b1_ref[...])       # (28*TB, 28*6)

    # pool1, row direction: average adjacent output-row pairs (sublane op).
    a1 = a1.reshape(14, 2, tb, 28 * 6)
    a1 = 0.5 * (a1[:, 0] + a1[:, 1])                          # (14, TB, 168)

    # pool1 column direction + conv2 (5x5, 6->16), both folded into m2.
    # m2 is a (5, 168, 160) stack of row blocks; accumulate five lane-aligned
    # dots instead of building a lane-unaligned 840-wide concat.
    acc2 = dot(a1[0:10].reshape(10 * tb, 28 * 6), m2_ref[0])
    for i in range(1, 5):
        acc2 = acc2 + dot(a1[i:i + 10].reshape(10 * tb, 28 * 6), m2_ref[i])
    a2 = jnp.tanh(acc2 + b2_ref[...])                         # (10*TB, 10*16)

    # pool2, row direction.
    a2 = a2.reshape(5, 2, tb, 10 * 16)
    a2 = 0.5 * (a2[:, 0] + a2[:, 1])                          # (5, TB, 160)

    # pool2 column direction + conv3 (5x5, 16->120), folded into m3
    # ((5, 160, 128) stack, output padded 120 -> 128 lanes).
    acc3 = dot(a2[0], m3_ref[0])
    for i in range(1, 5):
        acc3 = acc3 + dot(a2[i], m3_ref[i])
    f3 = jnp.tanh(acc3 + b3_ref[...])                          # (TB, 128)

    # classifier: Linear(120, 84) + tanh, Linear(84, n_classes); all padded to
    # 128 lanes so every store / the output DMA is unmasked.
    h = jnp.tanh(dot(f3, wf1_ref[...]) + bf1_ref[...])         # (TB, 128)
    out_ref[...] = (dot(h, wf2_ref[...]) + bf2_ref[...]).astype(out_ref.dtype)


# ---------------------------------------------------------------------------
# Forward wrapper (one pallas_call, batch-parallel grid)
# ---------------------------------------------------------------------------
def _round_up(a, b):
    return -(-a // b) * b


def _resident_spec(arr):
    """Full-array block with a constant block index -> stays VMEM-resident."""
    zeros = (0,) * arr.ndim
    return pl.BlockSpec(arr.shape, lambda i, _z=zeros: _z)


def lenet5_forward(packed, x, *, n_classes, batch_tile=_BATCH_TILE,
                   input_layout="NCHW"):
    """Forward pass. x: (N, 1, 32, 32) f32 (PyTorch NCHW) -> (N, n_classes).

    input_layout="HNW" accepts a pre-transposed (32, N, 32) array and skips
    the wrapper-side transpose (one fewer HBM pass over the batch).
    """
    if input_layout == "NCHW":
        n, c, h, w = x.shape
        assert (c, h, w) == (1, 32, 32), "classic LeNet5 expects 1x32x32 inputs"
        x = jnp.transpose(x[:, 0, :, :].astype(jnp.float32), (1, 0, 2))
    else:  # "HNW": already (32, N, 32)
        assert x.shape[0] == 32 and x.shape[2] == 32
        n = x.shape[1]
        x = x.astype(jnp.float32)

    # Pick the effective batch tile: clamp for small batches, and prefer >= 2
    # grid steps when the batch allows it (v7x has 2 TensorCores per chip).
    n8 = _round_up(n, 8)
    tile = _round_up(min(batch_tile, n8), 8)
    if n8 // tile < 2 and n8 >= 16:
        tile = _round_up(-(-n8 // 2), 8)
    n_pad = _round_up(n, tile)
    if n_pad != n:
        x = jnp.pad(x, ((0, 0), (0, n_pad - n), (0, 0)))

    weights = tuple(packed[k] for k in _PACKED_KEYS)
    ncp = packed["wf2"].shape[1]            # lane-padded logits width (>= 128)
    assert n_classes <= ncp

    in_specs = [pl.BlockSpec((32, tile, 32), lambda i: (0, i, 0))]
    in_specs += [_resident_spec(wt) for wt in weights]

    # Advisory cost model (tanh counts as transcendentals).
    flops_per_img = 2 * (28 * 160 * 168 + 10 * 840 * 160 + 5 * 160 * 128
                         + 128 * 128 + 128 * ncp)
    trans_per_img = 28 * 168 + 10 * 160 + 128 + 128
    w_bytes = sum(int(wt.size) * wt.dtype.itemsize for wt in weights)
    cost = pl.CostEstimate(
        flops=flops_per_img * n_pad,
        transcendentals=trans_per_img * n_pad,
        bytes_accessed=n_pad * (32 * 32 * 4 + ncp * 4) + w_bytes)

    out = pl.pallas_call(
        _lenet5_kernel,
        grid=(n_pad // tile,),
        in_specs=in_specs,
        out_specs=pl.BlockSpec((tile, ncp), lambda i: (i, 0)),
        out_shape=jax.ShapeDtypeStruct((n_pad, ncp), jnp.float32),
        compiler_params=pltpu.CompilerParams(
            dimension_semantics=("parallel",),
            vmem_limit_bytes=48 * 1024 * 1024),
        cost_estimate=cost,
    )(x, *weights)
    return out[:n, :n_classes]


# ---------------------------------------------------------------------------
# One-time weight packing (Toeplitz expansion along W, pooling folded in)
# ---------------------------------------------------------------------------
def _toeplitz_1d(w_kco, in_w, out_w):
    """Taps (K, C, O) -> (in_w*C, out_w*O) with
    T[w*C + c, x*O + o] = w_kco[w - x, c, o] for 0 <= w - x < K (valid xcorr)."""
    k, cc, oo = w_kco.shape
    d = np.arange(in_w)[:, None] - np.arange(out_w)[None, :]
    valid = (d >= 0) & (d < k)
    g = w_kco[np.clip(d, 0, k - 1)]                     # (in_w, out_w, C, O)
    g = np.where(valid[:, :, None, None], g, 0.0)
    return np.transpose(g, (0, 2, 1, 3)).reshape(in_w * cc, out_w * oo)


def _pool_cols(width, channels):
    """(width*C, (width//2)*C): averages adjacent column pairs (0.5*(even+odd))."""
    p = np.zeros((width, width // 2), np.float32)
    p[np.arange(width), np.arange(width) // 2] = 0.5
    return np.kron(p, np.eye(channels, dtype=np.float32))


def pack_params(raw, n_classes):
    """Convert PyTorch-layout LeNet5 weights into the kernel's packed operands.

    Matmul operands are stored in bf16 (native MXU path); biases stay f32 and
    are added to the f32 accumulators in-kernel.
    """
    w1 = np.asarray(raw["conv1_w"], np.float32)   # (6, 1, 5, 5)   (O, I, KH, KW)
    w2 = np.asarray(raw["conv2_w"], np.float32)   # (16, 6, 5, 5)
    w3 = np.asarray(raw["conv3_w"], np.float32)   # (120, 16, 5, 5)

    # conv1: per kernel-row Toeplitz along W; rows ordered (kernel row i, in col w).
    t1 = np.concatenate(
        [_toeplitz_1d(w1[:, 0, i, :].T[:, None, :], 32, 28) for i in range(5)],
        axis=0)                                                   # (160, 168)

    # conv2: per kernel-row Toeplitz on the 14-wide pooled rows, with pool1's
    # column average folded in.  Stored as a (5, 168, 160) stack of row blocks
    # so the kernel accumulates five lane-aligned dots (no 840-wide concat).
    pool1 = _pool_cols(28, 6)                                     # (168, 84)
    m2 = np.stack(
        [pool1 @ _toeplitz_1d(np.transpose(w2[:, :, i, :], (2, 1, 0)), 14, 10)
         for i in range(5)], axis=0)                              # (5, 168, 160)

    # conv3 acts as a fully-connected layer; fold pool2's column average (0.5)
    # and pad the 120 output channels to 128 lanes.  (5, 160, 128) stack.
    m3 = 0.5 * np.repeat(np.transpose(w3, (2, 3, 1, 0)), 2, axis=1)   # (5,10,16,120)
    m3 = m3.reshape(5, 160, 120)
    m3 = np.pad(m3, ((0, 0), (0, 0), (0, 8)))                         # (5,160,128)

    # Classifier, zero-padded to 128-lane widths (padded activations are
    # tanh(0)=0 and multiply zero weight rows, so results are unchanged).
    ncp = max(128, _round_up(n_classes, 128))
    wf1 = np.zeros((128, 128), np.float32)
    wf1[:120, :84] = np.asarray(raw["fc1_w"], np.float32).T
    bf1 = np.zeros((1, 128), np.float32)
    bf1[0, :84] = np.asarray(raw["fc1_b"], np.float32)
    wf2 = np.zeros((128, ncp), np.float32)
    wf2[:84, :n_classes] = np.asarray(raw["fc2_w"], np.float32).T
    bf2 = np.zeros((1, ncp), np.float32)
    bf2[0, :n_classes] = np.asarray(raw["fc2_b"], np.float32)

    b3 = np.zeros((1, 128), np.float32)
    b3[0, :120] = np.asarray(raw["conv3_b"], np.float32)

    bf16 = jnp.bfloat16
    return {
        "t1": jnp.asarray(t1, bf16),
        "b1": jnp.asarray(np.tile(np.asarray(raw["conv1_b"], np.float32)[None, :],
                                  (1, 28)), jnp.float32),
        "m2": jnp.asarray(m2, bf16),
        "b2": jnp.asarray(np.tile(np.asarray(raw["conv2_b"], np.float32)[None, :],
                                  (1, 10)), jnp.float32),
        "m3": jnp.asarray(m3, bf16),
        "b3": jnp.asarray(b3, jnp.float32),
        "wf1": jnp.asarray(wf1, bf16),
        "bf1": jnp.asarray(bf1, jnp.float32),
        "wf2": jnp.asarray(wf2, bf16),
        "bf2": jnp.asarray(bf2, jnp.float32),
    }


# ---------------------------------------------------------------------------
# Parameters (PyTorch-style init, PyTorch layouts) and a pure-JAX reference
# ---------------------------------------------------------------------------
def init_params(key, n_classes):
    keys = jax.random.split(key, 10)

    def u(k, shape, fan_in):
        bound = 1.0 / jnp.sqrt(jnp.float32(fan_in))
        return jax.random.uniform(k, shape, jnp.float32, -bound, bound)

    return {
        "conv1_w": u(keys[0], (6, 1, 5, 5), 1 * 25),
        "conv1_b": u(keys[1], (6,), 1 * 25),
        "conv2_w": u(keys[2], (16, 6, 5, 5), 6 * 25),
        "conv2_b": u(keys[3], (16,), 6 * 25),
        "conv3_w": u(keys[4], (120, 16, 5, 5), 16 * 25),
        "conv3_b": u(keys[5], (120,), 16 * 25),
        "fc1_w": u(keys[6], (84, 120), 120),   # PyTorch Linear: (out, in)
        "fc1_b": u(keys[7], (84,), 120),
        "fc2_w": u(keys[8], (n_classes, 84), 84),
        "fc2_b": u(keys[9], (n_classes,), 84),
    }


def lenet5_reference(raw, x_nchw):
    """Plain-XLA reference (mirrors the PyTorch module) for correctness checks."""
    hp = jax.lax.Precision.HIGHEST

    def conv(x, w, b):
        y = jax.lax.conv_general_dilated(
            x, w, (1, 1), "VALID",
            dimension_numbers=("NCHW", "OIHW", "NCHW"), precision=hp)
        return jnp.tanh(y + b[None, :, None, None])

    def pool(x):
        n, c, h, w = x.shape
        return x.reshape(n, c, h // 2, 2, w // 2, 2).mean(axis=(3, 5))

    y = pool(conv(x_nchw, raw["conv1_w"], raw["conv1_b"]))
    y = pool(conv(y, raw["conv2_w"], raw["conv2_b"]))
    y = conv(y, raw["conv3_w"], raw["conv3_b"])
    y = y.reshape(y.shape[0], -1)
    y = jnp.tanh(jnp.dot(y, raw["fc1_w"].T, precision=hp) + raw["fc1_b"])
    return jnp.dot(y, raw["fc2_w"].T, precision=hp) + raw["fc2_b"]


if __name__ == "__main__":
    n_classes = 10
    key = jax.random.PRNGKey(0)
    pkey, xkey = jax.random.split(key)

    raw_params = init_params(pkey, n_classes)
    packed_params = pack_params(raw_params, n_classes)

    # Classic LeNet5 expects 32x32 single-channel inputs.
    x = jax.random.normal(xkey, (2, 1, 32, 32), jnp.float32)

    fwd = jax.jit(partial(lenet5_forward, n_classes=n_classes))
    logits = jax.block_until_ready(fwd(packed_params, x))
    assert logits.shape == (2, n_classes), logits.shape
    assert logits.dtype == jnp.float32

    ref = jax.block_until_ready(lenet5_reference(raw_params, x))
    # 5e-2 tolerance kept deliberately loose because matmul operands are bf16
    # (f32 accumulation); the all-f32 variant matched to ~1e-5.
    assert float(jnp.max(jnp.abs(logits - ref))) < 5e-2, "mismatch vs reference"
    print("KERNEL_OK")
</pallas_src>

<mosaic_0001>
module attributes {stable_mosaic.version = 11 : i64} {
  func.func @_lenet5_kernel(%arg0: i32, %arg1: memref<32x8x32xf32, #tpu.memory_space<vmem>>, %arg2: memref<160x168xbf16, #tpu.memory_space<vmem>>, %arg3: memref<1x168xf32, #tpu.memory_space<vmem>>, %arg4: memref<5x168x160xbf16, #tpu.memory_space<vmem>>, %arg5: memref<1x160xf32, #tpu.memory_space<vmem>>, %arg6: memref<5x160x128xbf16, #tpu.memory_space<vmem>>, %arg7: memref<1x128xf32, #tpu.memory_space<vmem>>, %arg8: memref<128x128xbf16, #tpu.memory_space<vmem>>, %arg9: memref<1x128xf32, #tpu.memory_space<vmem>>, %arg10: memref<128x128xbf16, #tpu.memory_space<vmem>>, %arg11: memref<1x128xf32, #tpu.memory_space<vmem>>, %arg12: memref<8x128xf32, #tpu.memory_space<vmem>>) attributes {dimension_semantics = [#tpu.dimension_semantics<parallel>], iteration_bounds = array<i64: 1>, scalar_prefetch = 0 : i64, scratch_operands = 0 : i64, tpu.core_type = #tpu.core_type<tc>, window_params = [{transform_indices = @transform_0, window_bounds = array<i64: 32, 8, 32>}, {pipeline_mode = #tpu.pipeline_mode<synchronous>, transform_indices = @transform_1, window_bounds = array<i64: 160, 168>}, {pipeline_mode = #tpu.pipeline_mode<synchronous>, transform_indices = @transform_2, window_bounds = array<i64: 1, 168>}, {pipeline_mode = #tpu.pipeline_mode<synchronous>, transform_indices = @transform_3, window_bounds = array<i64: 5, 168, 160>}, {pipeline_mode = #tpu.pipeline_mode<synchronous>, transform_indices = @transform_4, window_bounds = array<i64: 1, 160>}, {pipeline_mode = #tpu.pipeline_mode<synchronous>, transform_indices = @transform_5, window_bounds = array<i64: 5, 160, 128>}, {pipeline_mode = #tpu.pipeline_mode<synchronous>, transform_indices = @transform_6, window_bounds = array<i64: 1, 128>}, {pipeline_mode = #tpu.pipeline_mode<synchronous>, transform_indices = @transform_7, window_bounds = array<i64: 128, 128>}, {pipeline_mode = #tpu.pipeline_mode<synchronous>, transform_indices = @transform_8, window_bounds = array<i64: 1, 128>}, {pipeline_mode = #tpu.pipeline_mode<synchronous>, transform_indices = @transform_9, window_bounds = array<i64: 128, 128>}, {pipeline_mode = #tpu.pipeline_mode<synchronous>, transform_indices = @transform_10, window_bounds = array<i64: 1, 128>}, {transform_indices = @transform_11, window_bounds = array<i64: 8, 128>}]} {
    %c0 = arith.constant 0 : index
    %c0_0 = arith.constant 0 : index
    %c0_1 = arith.constant 0 : index
    %0 = vector.load %arg1[%c0, %c0_0, %c0_1] : memref<32x8x32xf32, #tpu.memory_space<vmem>>, vector<28x8x32xf32>
    %1 = vector.shape_cast %0 : vector<28x8x32xf32> to vector<224x32xf32>
    %c1 = arith.constant 1 : index
    %c0_2 = arith.constant 0 : index
    %c0_3 = arith.constant 0 : index
    %2 = vector.load %arg1[%c1, %c0_2, %c0_3] : memref<32x8x32xf32, #tpu.memory_space<vmem>>, vector<28x8x32xf32>
    %3 = vector.shape_cast %2 : vector<28x8x32xf32> to vector<224x32xf32>
    %c2 = arith.constant 2 : index
    %c0_4 = arith.constant 0 : index
    %c0_5 = arith.constant 0 : index
    %4 = vector.load %arg1[%c2, %c0_4, %c0_5] : memref<32x8x32xf32, #tpu.memory_space<vmem>>, vector<28x8x32xf32>
    %5 = vector.shape_cast %4 : vector<28x8x32xf32> to vector<224x32xf32>
    %c3 = arith.constant 3 : index
    %c0_6 = arith.constant 0 : index
    %c0_7 = arith.constant 0 : index
    %6 = vector.load %arg1[%c3, %c0_6, %c0_7] : memref<32x8x32xf32, #tpu.memory_space<vmem>>, vector<28x8x32xf32>
    %7 = vector.shape_cast %6 : vector<28x8x32xf32> to vector<224x32xf32>
    %c4 = arith.constant 4 : index
    %c0_8 = arith.constant 0 : index
    %c0_9 = arith.constant 0 : index
    %8 = vector.load %arg1[%c4, %c0_8, %c0_9] : memref<32x8x32xf32, #tpu.memory_space<vmem>>, vector<28x8x32xf32>
    %9 = vector.shape_cast %8 : vector<28x8x32xf32> to vector<224x32xf32>
    %10 = tpu.concatenate %1, %3, %5, %7, %9 in 1 : vector<224x32xf32>, vector<224x32xf32>, vector<224x32xf32>, vector<224x32xf32>, vector<224x32xf32> -> vector<224x160xf32>
    %c0_10 = arith.constant 0 : index
    %c0_11 = arith.constant 0 : index
    %11 = vector.load %arg2[%c0_10, %c0_11] : memref<160x168xbf16, #tpu.memory_space<vmem>>, vector<160x168xbf16>
    %12 = arith.truncf %10 : vector<224x160xf32> to vector<224x160xbf16>
    %cst = arith.constant dense<0.000000e+00> : vector<224x168xf32>
    %13 = tpu.matmul %12, %11, %cst {dimension_numbers = #tpu.dot_dimension_numbers<[1], [0], [0], [1], [0, 0, 1, 1], [], []>} : vector<224x160xbf16>, vector<160x168xbf16>, vector<224x168xf32> -> vector<224x168xf32>
    %c0_12 = arith.constant 0 : index
    %c0_13 = arith.constant 0 : index
    %14 = vector.load %arg3[%c0_12, %c0_13] : memref<1x168xf32, #tpu.memory_space<vmem>>, vector<1x168xf32>
    %15 = vector.broadcast %14 : vector<1x168xf32> to vector<224x168xf32>
    %16 = arith.addf %13, %15 : vector<224x168xf32>
    %17 = math.tanh %16 : vector<224x168xf32>
    %18 = vector.shape_cast %17 : vector<224x168xf32> to vector<14x2x8x168xf32>
    %19 = vector.extract_strided_slice %18 {offsets = [0, 0, 0, 0], sizes = [14, 1, 8, 168], strides = [1, 1, 1, 1]} : vector<14x2x8x168xf32> to vector<14x1x8x168xf32>
    %20 = vector.shape_cast %19 : vector<14x1x8x168xf32> to vector<14x8x168xf32>
    %21 = vector.extract_strided_slice %18 {offsets = [0, 1, 0, 0], sizes = [14, 1, 8, 168], strides = [1, 1, 1, 1]} : vector<14x2x8x168xf32> to vector<14x1x8x168xf32>
    %22 = vector.shape_cast %21 : vector<14x1x8x168xf32> to vector<14x8x168xf32>
    %23 = arith.addf %20, %22 : vector<14x8x168xf32>
    %cst_14 = arith.constant 5.000000e-01 : f32
    %24 = vector.broadcast %cst_14 : f32 to vector<14x8x168xf32>
    %25 = arith.mulf %24, %23 : vector<14x8x168xf32>
    %26 = vector.extract_strided_slice %25 {offsets = [0, 0, 0], sizes = [10, 8, 168], strides = [1, 1, 1]} : vector<14x8x168xf32> to vector<10x8x168xf32>
    %27 = vector.shape_cast %26 : vector<10x8x168xf32> to vector<80x168xf32>
    %c0_15 = arith.constant 0 : index
    %c0_16 = arith.constant 0 : index
    %c0_17 = arith.constant 0 : index
    %28 = vector.load %arg4[%c0_15, %c0_16, %c0_17] : memref<5x168x160xbf16, #tpu.memory_space<vmem>>, vector<1x168x160xbf16>
    %29 = vector.shape_cast %28 : vector<1x168x160xbf16> to vector<168x160xbf16>
    %30 = arith.truncf %27 : vector<80x168xf32> to vector<80x168xbf16>
    %cst_18 = arith.constant dense<0.000000e+00> : vector<80x160xf32>
    %31 = tpu.matmul %30, %29, %cst_18 {dimension_numbers = #tpu.dot_dimension_numbers<[1], [0], [0], [1], [0, 0, 1, 1], [], []>} : vector<80x168xbf16>, vector<168x160xbf16>, vector<80x160xf32> -> vector<80x160xf32>
    %32 = vector.extract_strided_slice %25 {offsets = [1, 0, 0], sizes = [10, 8, 168], strides = [1, 1, 1]} : vector<14x8x168xf32> to vector<10x8x168xf32>
    %33 = vector.shape_cast %32 : vector<10x8x168xf32> to vector<80x168xf32>
    %c1_19 = arith.constant 1 : index
    %c0_20 = arith.constant 0 : index
    %c0_21 = arith.constant 0 : index
    %34 = vector.load %arg4[%c1_19, %c0_20, %c0_21] : memref<5x168x160xbf16, #tpu.memory_space<vmem>>, vector<1x168x160xbf16>
    %35 = vector.shape_cast %34 : vector<1x168x160xbf16> to vector<168x160xbf16>
    %36 = arith.truncf %33 : vector<80x168xf32> to vector<80x168xbf16>
    %cst_22 = arith.constant dense<0.000000e+00> : vector<80x160xf32>
    %37 = tpu.matmul %36, %35, %cst_22 {dimension_numbers = #tpu.dot_dimension_numbers<[1], [0], [0], [1], [0, 0, 1, 1], [], []>} : vector<80x168xbf16>, vector<168x160xbf16>, vector<80x160xf32> -> vector<80x160xf32>
    %38 = arith.addf %31, %37 : vector<80x160xf32>
    %39 = vector.extract_strided_slice %25 {offsets = [2, 0, 0], sizes = [10, 8, 168], strides = [1, 1, 1]} : vector<14x8x168xf32> to vector<10x8x168xf32>
    %40 = vector.shape_cast %39 : vector<10x8x168xf32> to vector<80x168xf32>
    %c2_23 = arith.constant 2 : index
    %c0_24 = arith.constant 0 : index
    %c0_25 = arith.constant 0 : index
    %41 = vector.load %arg4[%c2_23, %c0_24, %c0_25] : memref<5x168x160xbf16, #tpu.memory_space<vmem>>, vector<1x168x160xbf16>
    %42 = vector.shape_cast %41 : vector<1x168x160xbf16> to vector<168x160xbf16>
    %43 = arith.truncf %40 : vector<80x168xf32> to vector<80x168xbf16>
    %cst_26 = arith.constant dense<0.000000e+00> : vector<80x160xf32>
    %44 = tpu.matmul %43, %42, %cst_26 {dimension_numbers = #tpu.dot_dimension_numbers<[1], [0], [0], [1], [0, 0, 1, 1], [], []>} : vector<80x168xbf16>, vector<168x160xbf16>, vector<80x160xf32> -> vector<80x160xf32>
    %45 = arith.addf %38, %44 : vector<80x160xf32>
    %46 = vector.extract_strided_slice %25 {offsets = [3, 0, 0], sizes = [10, 8, 168], strides = [1, 1, 1]} : vector<14x8x168xf32> to vector<10x8x168xf32>
    %47 = vector.shape_cast %46 : vector<10x8x168xf32> to vector<80x168xf32>
    %c3_27 = arith.constant 3 : index
    %c0_28 = arith.constant 0 : index
    %c0_29 = arith.constant 0 : index
    %48 = vector.load %arg4[%c3_27, %c0_28, %c0_29] : memref<5x168x160xbf16, #tpu.memory_space<vmem>>, vector<1x168x160xbf16>
    %49 = vector.shape_cast %48 : vector<1x168x160xbf16> to vector<168x160xbf16>
    %50 = arith.truncf %47 : vector<80x168xf32> to vector<80x168xbf16>
    %cst_30 = arith.constant dense<0.000000e+00> : vector<80x160xf32>
    %51 = tpu.matmul %50, %49, %cst_30 {dimension_numbers = #tpu.dot_dimension_numbers<[1], [0], [0], [1], [0, 0, 1, 1], [], []>} : vector<80x168xbf16>, vector<168x160xbf16>, vector<80x160xf32> -> vector<80x160xf32>
    %52 = arith.addf %45, %51 : vector<80x160xf32>
    %53 = vector.extract_strided_slice %25 {offsets = [4, 0, 0], sizes = [10, 8, 168], strides = [1, 1, 1]} : vector<14x8x168xf32> to vector<10x8x168xf32>
    %54 = vector.shape_cast %53 : vector<10x8x168xf32> to vector<80x168xf32>
    %c4_31 = arith.constant 4 : index
    %c0_32 = arith.constant 0 : index
    %c0_33 = arith.constant 0 : index
    %55 = vector.load %arg4[%c4_31, %c0_32, %c0_33] : memref<5x168x160xbf16, #tpu.memory_space<vmem>>, vector<1x168x160xbf16>
    %56 = vector.shape_cast %55 : vector<1x168x160xbf16> to vector<168x160xbf16>
    %57 = arith.truncf %54 : vector<80x168xf32> to vector<80x168xbf16>
    %cst_34 = arith.constant dense<0.000000e+00> : vector<80x160xf32>
    %58 = tpu.matmul %57, %56, %cst_34 {dimension_numbers = #tpu.dot_dimension_numbers<[1], [0], [0], [1], [0, 0, 1, 1], [], []>} : vector<80x168xbf16>, vector<168x160xbf16>, vector<80x160xf32> -> vector<80x160xf32>
    %59 = arith.addf %52, %58 : vector<80x160xf32>
    %c0_35 = arith.constant 0 : index
    %c0_36 = arith.constant 0 : index
    %60 = vector.load %arg5[%c0_35, %c0_36] : memref<1x160xf32, #tpu.memory_space<vmem>>, vector<1x160xf32>
    %61 = vector.broadcast %60 : vector<1x160xf32> to vector<80x160xf32>
    %62 = arith.addf %59, %61 : vector<80x160xf32>
    %63 = math.tanh %62 : vector<80x160xf32>
    %64 = vector.shape_cast %63 : vector<80x160xf32> to vector<5x2x8x160xf32>
    %65 = vector.extract_strided_slice %64 {offsets = [0, 0, 0, 0], sizes = [5, 1, 8, 160], strides = [1, 1, 1, 1]} : vector<5x2x8x160xf32> to vector<5x1x8x160xf32>
    %66 = vector.shape_cast %65 : vector<5x1x8x160xf32> to vector<5x8x160xf32>
    %67 = vector.extract_strided_slice %64 {offsets = [0, 1, 0, 0], sizes = [5, 1, 8, 160], strides = [1, 1, 1, 1]} : vector<5x2x8x160xf32> to vector<5x1x8x160xf32>
    %68 = vector.shape_cast %67 : vector<5x1x8x160xf32> to vector<5x8x160xf32>
    %69 = arith.addf %66, %68 : vector<5x8x160xf32>
    %cst_37 = arith.constant 5.000000e-01 : f32
    %70 = vector.broadcast %cst_37 : f32 to vector<5x8x160xf32>
    %71 = arith.mulf %70, %69 : vector<5x8x160xf32>
    %72 = vector.extract_strided_slice %71 {offsets = [0, 0, 0], sizes = [1, 8, 160], strides = [1, 1, 1]} : vector<5x8x160xf32> to vector<1x8x160xf32>
    %73 = vector.shape_cast %72 : vector<1x8x160xf32> to vector<8x160xf32>
    %c0_38 = arith.constant 0 : index
    %c0_39 = arith.constant 0 : index
    %c0_40 = arith.constant 0 : index
    %74 = vector.load %arg6[%c0_38, %c0_39, %c0_40] : memref<5x160x128xbf16, #tpu.memory_space<vmem>>, vector<1x160x128xbf16>
    %75 = vector.shape_cast %74 : vector<1x160x128xbf16> to vector<160x128xbf16>
    %76 = arith.truncf %73 : vector<8x160xf32> to vector<8x160xbf16>
    %cst_41 = arith.constant dense<0.000000e+00> : vector<8x128xf32>
    %77 = tpu.matmul %76, %75, %cst_41 {dimension_numbers = #tpu.dot_dimension_numbers<[1], [0], [0], [1], [0, 0, 1, 1], [], []>} : vector<8x160xbf16>, vector<160x128xbf16>, vector<8x128xf32> -> vector<8x128xf32>
    %78 = vector.extract_strided_slice %71 {offsets = [1, 0, 0], sizes = [1, 8, 160], strides = [1, 1, 1]} : vector<5x8x160xf32> to vector<1x8x160xf32>
    %79 = vector.shape_cast %78 : vector<1x8x160xf32> to vector<8x160xf32>
    %c1_42 = arith.constant 1 : index
    %c0_43 = arith.constant 0 : index
    %c0_44 = arith.constant 0 : index
    %80 = vector.load %arg6[%c1_42, %c0_43, %c0_44] : memref<5x160x128xbf16, #tpu.memory_space<vmem>>, vector<1x160x128xbf16>
    %81 = vector.shape_cast %80 : vector<1x160x128xbf16> to vector<160x128xbf16>
    %82 = arith.truncf %79 : vector<8x160xf32> to vector<8x160xbf16>
    %cst_45 = arith.constant dense<0.000000e+00> : vector<8x128xf32>
    %83 = tpu.matmul %82, %81, %cst_45 {dimension_numbers = #tpu.dot_dimension_numbers<[1], [0], [0], [1], [0, 0, 1, 1], [], []>} : vector<8x160xbf16>, vector<160x128xbf16>, vector<8x128xf32> -> vector<8x128xf32>
    %84 = arith.addf %77, %83 : vector<8x128xf32>
    %85 = vector.extract_strided_slice %71 {offsets = [2, 0, 0], sizes = [1, 8, 160], strides = [1, 1, 1]} : vector<5x8x160xf32> to vector<1x8x160xf32>
    %86 = vector.shape_cast %85 : vector<1x8x160xf32> to vector<8x160xf32>
    %c2_46 = arith.constant 2 : index
    %c0_47 = arith.constant 0 : index
    %c0_48 = arith.constant 0 : index
    %87 = vector.load %arg6[%c2_46, %c0_47, %c0_48] : memref<5x160x128xbf16, #tpu.memory_space<vmem>>, vector<1x160x128xbf16>
    %88 = vector.shape_cast %87 : vector<1x160x128xbf16> to vector<160x128xbf16>
    %89 = arith.truncf %86 : vector<8x160xf32> to vector<8x160xbf16>
    %cst_49 = arith.constant dense<0.000000e+00> : vector<8x128xf32>
    %90 = tpu.matmul %89, %88, %cst_49 {dimension_numbers = #tpu.dot_dimension_numbers<[1], [0], [0], [1], [0, 0, 1, 1], [], []>} : vector<8x160xbf16>, vector<160x128xbf16>, vector<8x128xf32> -> vector<8x128xf32>
    %91 = arith.addf %84, %90 : vector<8x128xf32>
    %92 = vector.extract_strided_slice %71 {offsets = [3, 0, 0], sizes = [1, 8, 160], strides = [1, 1, 1]} : vector<5x8x160xf32> to vector<1x8x160xf32>
    %93 = vector.shape_cast %92 : vector<1x8x160xf32> to vector<8x160xf32>
    %c3_50 = arith.constant 3 : index
    %c0_51 = arith.constant 0 : index
    %c0_52 = arith.constant 0 : index
    %94 = vector.load %arg6[%c3_50, %c0_51, %c0_52] : memref<5x160x128xbf16, #tpu.memory_space<vmem>>, vector<1x160x128xbf16>
    %95 = vector.shape_cast %94 : vector<1x160x128xbf16> to vector<160x128xbf16>
    %96 = arith.truncf %93 : vector<8x160xf32> to vector<8x160xbf16>
    %cst_53 = arith.constant dense<0.000000e+00> : vector<8x128xf32>
    %97 = tpu.matmul %96, %95, %cst_53 {dimension_numbers = #tpu.dot_dimension_numbers<[1], [0], [0], [1], [0, 0, 1, 1], [], []>} : vector<8x160xbf16>, vector<160x128xbf16>, vector<8x128xf32> -> vector<8x128xf32>
    %98 = arith.addf %91, %97 : vector<8x128xf32>
    %99 = vector.extract_strided_slice %71 {offsets = [4, 0, 0], sizes = [1, 8, 160], strides = [1, 1, 1]} : vector<5x8x160xf32> to vector<1x8x160xf32>
    %100 = vector.shape_cast %99 : vector<1x8x160xf32> to vector<8x160xf32>
    %c4_54 = arith.constant 4 : index
    %c0_55 = arith.constant 0 : index
    %c0_56 = arith.constant 0 : index
    %101 = vector.load %arg6[%c4_54, %c0_55, %c0_56] : memref<5x160x128xbf16, #tpu.memory_space<vmem>>, vector<1x160x128xbf16>
    %102 = vector.shape_cast %101 : vector<1x160x128xbf16> to vector<160x128xbf16>
    %103 = arith.truncf %100 : vector<8x160xf32> to vector<8x160xbf16>
    %cst_57 = arith.constant dense<0.000000e+00> : vector<8x128xf32>
    %104 = tpu.matmul %103, %102, %cst_57 {dimension_numbers = #tpu.dot_dimension_numbers<[1], [0], [0], [1], [0, 0, 1, 1], [], []>} : vector<8x160xbf16>, vector<160x128xbf16>, vector<8x128xf32> -> vector<8x128xf32>
    %105 = arith.addf %98, %104 : vector<8x128xf32>
    %c0_58 = arith.constant 0 : index
    %c0_59 = arith.constant 0 : index
    %106 = vector.load %arg7[%c0_58, %c0_59] : memref<1x128xf32, #tpu.memory_space<vmem>>, vector<1x128xf32>
    %107 = vector.broadcast %106 : vector<1x128xf32> to vector<8x128xf32>
    %108 = arith.addf %105, %107 : vector<8x128xf32>
    %109 = math.tanh %108 : vector<8x128xf32>
    %c0_60 = arith.constant 0 : index
    %c0_61 = arith.constant 0 : index
    %110 = vector.load %arg8[%c0_60, %c0_61] : memref<128x128xbf16, #tpu.memory_space<vmem>>, vector<128x128xbf16>
    %111 = arith.truncf %109 : vector<8x128xf32> to vector<8x128xbf16>
    %cst_62 = arith.constant dense<0.000000e+00> : vector<8x128xf32>
    %112 = tpu.matmul %111, %110, %cst_62 {dimension_numbers = #tpu.dot_dimension_numbers<[1], [0], [0], [1], [0, 0, 1, 1], [], []>} : vector<8x128xbf16>, vector<128x128xbf16>, vector<8x128xf32> -> vector<8x128xf32>
    %c0_63 = arith.constant 0 : index
    %c0_64 = arith.constant 0 : index
    %113 = vector.load %arg9[%c0_63, %c0_64] : memref<1x128xf32, #tpu.memory_space<vmem>>, vector<1x128xf32>
    %114 = vector.broadcast %113 : vector<1x128xf32> to vector<8x128xf32>
    %115 = arith.addf %112, %114 : vector<8x128xf32>
    %116 = math.tanh %115 : vector<8x128xf32>
    %c0_65 = arith.constant 0 : index
    %c0_66 = arith.constant 0 : index
    %117 = vector.load %arg10[%c0_65, %c0_66] : memref<128x128xbf16, #tpu.memory_space<vmem>>, vector<128x128xbf16>
    %118 = arith.truncf %116 : vector<8x128xf32> to vector<8x128xbf16>
    %cst_67 = arith.constant dense<0.000000e+00> : vector<8x128xf32>
    %119 = tpu.matmul %118, %117, %cst_67 {dimension_numbers = #tpu.dot_dimension_numbers<[1], [0], [0], [1], [0, 0, 1, 1], [], []>} : vector<8x128xbf16>, vector<128x128xbf16>, vector<8x128xf32> -> vector<8x128xf32>
    %c0_68 = arith.constant 0 : index
    %c0_69 = arith.constant 0 : index
    %120 = vector.load %arg11[%c0_68, %c0_69] : memref<1x128xf32, #tpu.memory_space<vmem>>, vector<1x128xf32>
    %121 = vector.broadcast %120 : vector<1x128xf32> to vector<8x128xf32>
    %122 = arith.addf %119, %121 : vector<8x128xf32>
    %c0_70 = arith.constant 0 : index
    %c0_71 = arith.constant 0 : index
    %123 = vector.load %arg12[%c0_70, %c0_71] : memref<8x128xf32, #tpu.memory_space<vmem>>, vector<8x128xf32>
    tpu.vector_store %arg12[%c0_70, %c0_71], %122 {strides = array<i32>} : memref<8x128xf32, #tpu.memory_space<vmem>>, vector<8x128xf32>,
    return
  }
  func.func @transform_0(%arg0: i32) -> (i32, i32, i32) {
    %c0_i32 = arith.constant 0 : i32
    %c0_i32_0 = arith.constant 0 : i32
    %c0_i32_1 = arith.constant 0 : i32
    return %c0_i32, %arg0, %c0_i32_0 : i32, i32, i32
  }
  func.func @transform_1(%arg0: i32) -> (i32, i32) {
    %c0_i32 = arith.constant 0 : i32
    %c0_i32_0 = arith.constant 0 : i32
    %c0_i32_1 = arith.constant 0 : i32
    return %c0_i32, %c0_i32_0 : i32, i32
  }
  func.func @transform_2(%arg0: i32) -> (i32, i32) {
    %c0_i32 = arith.constant 0 : i32
    %c0_i32_0 = arith.constant 0 : i32
    %c0_i32_1 = arith.constant 0 : i32
    return %c0_i32, %c0_i32_0 : i32, i32
  }
  func.func @transform_3(%arg0: i32) -> (i32, i32, i32) {
    %c0_i32 = arith.constant 0 : i32
    %c0_i32_0 = arith.constant 0 : i32
    %c0_i32_1 = arith.constant 0 : i32
    %c0_i32_2 = arith.constant 0 : i32
    return %c0_i32, %c0_i32_0, %c0_i32_1 : i32, i32, i32
  }
  func.func @transform_4(%arg0: i32) -> (i32, i32) {
    %c0_i32 = arith.constant 0 : i32
    %c0_i32_0 = arith.constant 0 : i32
    %c0_i32_1 = arith.constant 0 : i32
    return %c0_i32, %c0_i32_0 : i32, i32
  }
  func.func @transform_5(%arg0: i32) -> (i32, i32, i32) {
    %c0_i32 = arith.constant 0 : i32
    %c0_i32_0 = arith.constant 0 : i32
    %c0_i32_1 = arith.constant 0 : i32
    %c0_i32_2 = arith.constant 0 : i32
    return %c0_i32, %c0_i32_0, %c0_i32_1 : i32, i32, i32
  }
  func.func @transform_6(%arg0: i32) -> (i32, i32) {
    %c0_i32 = arith.constant 0 : i32
    %c0_i32_0 = arith.constant 0 : i32
    %c0_i32_1 = arith.constant 0 : i32
    return %c0_i32, %c0_i32_0 : i32, i32
  }
  func.func @transform_7(%arg0: i32) -> (i32, i32) {
    %c0_i32 = arith.constant 0 : i32
    %c0_i32_0 = arith.constant 0 : i32
    %c0_i32_1 = arith.constant 0 : i32
    return %c0_i32, %c0_i32_0 : i32, i32
  }
  func.func @transform_8(%arg0: i32) -> (i32, i32) {
    %c0_i32 = arith.constant 0 : i32
    %c0_i32_0 = arith.constant 0 : i32
    %c0_i32_1 = arith.constant 0 : i32
    return %c0_i32, %c0_i32_0 : i32, i32
  }
  func.func @transform_9(%arg0: i32) -> (i32, i32) {
    %c0_i32 = arith.constant 0 : i32
    %c0_i32_0 = arith.constant 0 : i32
    %c0_i32_1 = arith.constant 0 : i32
    return %c0_i32, %c0_i32_0 : i32, i32
  }
  func.func @transform_10(%arg0: i32) -> (i32, i32) {
    %c0_i32 = arith.constant 0 : i32
    %c0_i32_0 = arith.constant 0 : i32
    %c0_i32_1 = arith.constant 0 : i32
    return %c0_i32, %c0_i32_0 : i32, i32
  }
  func.func @transform_11(%arg0: i32) -> (i32, i32) {
    %c0_i32 = arith.constant 0 : i32
    %c0_i32_0 = arith.constant 0 : i32
    return %arg0, %c0_i32 : i32, i32
  }
}

</mosaic_0001>

<llo_original>
// kernel: lenet5_forward.1
$region0: #{lenet5_forward.1}
  #allocation0 [shape = 'u32[]', space=smem, size = 0x4, offset = 0x4, fixed_abs, tag = 'smem constant byte address 0x4 - core index']
  #allocation1 [shape = 'u32[144,128]{1,0:T(1,128)}', space=vmem, size = 0x12000, scoped, tag = 'internal scratch']
  %s0 = inlined_call_operand.vmem [shape: f32[32,8,32], index: 0, kind: input, shape index: {}]
  %s1 = inlined_call_operand.vmem [shape: bf16[160,168], index: 1, kind: input, shape index: {}]
  %s2 = inlined_call_operand.vmem [shape: f32[1,168], index: 2, kind: input, shape index: {}]
  %s3 = inlined_call_operand.vmem [shape: bf16[5,168,160], index: 3, kind: input, shape index: {}]
  %s4 = inlined_call_operand.vmem [shape: f32[1,160], index: 4, kind: input, shape index: {}]
  %s5 = inlined_call_operand.vmem [shape: bf16[5,160,128], index: 5, kind: input, shape index: {}]
  %s6 = inlined_call_operand.vmem [shape: f32[1,128], index: 6, kind: input, shape index: {}]
  %s7 = inlined_call_operand.vmem [shape: bf16[128,128], index: 7, kind: input, shape index: {}]
  %s8 = inlined_call_operand.vmem [shape: f32[1,128], index: 8, kind: input, shape index: {}]
  %s9 = inlined_call_operand.vmem [shape: bf16[128,128], index: 9, kind: input, shape index: {}]
  %s10 = inlined_call_operand.vmem [shape: f32[1,128], index: 10, kind: input, shape index: {}]
  %s11 = inlined_call_operand.vmem [shape: f32[8,128], index: 11, kind: output, shape index: {}]
  %s12 = sld [smem:[#allocation0]]
  $region54: #{lenet5_forward.1} parent=0
    _
  %s14 = ssub.s32 1, %s12
  %s15 = scalar_select 0, %s14, %s12
  // Predicated region
  $region2: #{lenet5_forward.1} parent=0 // pred_check
    _
  $region3: #{lenet5_forward.1} parent=0 // pred_check_branch
    %17 = sbr.rel (0) target = $region5
  $region4: #{lenet5_forward.1} parent=0 // pred_region
    _
  $region5: #{lenet5_forward.1} parent=0 // pred_fallthru
    _
  // Predicated region
  $region6: #{lenet5_forward.1} parent=0 // pred_check
    _
  $region7: #{lenet5_forward.1} parent=0 // pred_check_branch
    %19 = sbr.rel (0) target = $region9
  $region8: #{lenet5_forward.1} parent=0 // pred_region
    _
  $region9: #{lenet5_forward.1} parent=0 // pred_fallthru
    _
  // Predicated region
  $region10: #{lenet5_forward.1} parent=0 // pred_check
    _
  $region11: #{lenet5_forward.1} parent=0 // pred_check_branch
    %21 = sbr.rel (0) target = $region13
  $region12: #{lenet5_forward.1} parent=0 // pred_region
    _
  $region13: #{lenet5_forward.1} parent=0 // pred_fallthru
    _
  // Predicated region
  $region14: #{lenet5_forward.1} parent=0 // pred_check
    _
  $region15: #{lenet5_forward.1} parent=0 // pred_check_branch
    %23 = sbr.rel (0) target = $region17
  $region16: #{lenet5_forward.1} parent=0 // pred_region
    _
  $region17: #{lenet5_forward.1} parent=0 // pred_fallthru
    _
  // Predicated region
  $region18: #{lenet5_forward.1} parent=0 // pred_check
    _
  $region19: #{lenet5_forward.1} parent=0 // pred_check_branch
    %25 = sbr.rel (0) target = $region21
  $region20: #{lenet5_forward.1} parent=0 // pred_region
    _
  $region21: #{lenet5_forward.1} parent=0 // pred_fallthru
    _
  // Predicated region
  $region22: #{lenet5_forward.1} parent=0 // pred_check
    _
  $region23: #{lenet5_forward.1} parent=0 // pred_check_branch
    %27 = sbr.rel (0) target = $region25
  $region24: #{lenet5_forward.1} parent=0 // pred_region
    _
  $region25: #{lenet5_forward.1} parent=0 // pred_fallthru
    _
  // Predicated region
  $region26: #{lenet5_forward.1} parent=0 // pred_check
    _
  $region27: #{lenet5_forward.1} parent=0 // pred_check_branch
    %29 = sbr.rel (0) target = $region29
  $region28: #{lenet5_forward.1} parent=0 // pred_region
    _
  $region29: #{lenet5_forward.1} parent=0 // pred_fallthru
    _
  // Predicated region
  $region30: #{lenet5_forward.1} parent=0 // pred_check
    _
  $region31: #{lenet5_forward.1} parent=0 // pred_check_branch
    %31 = sbr.rel (0) target = $region33
  $region32: #{lenet5_forward.1} parent=0 // pred_region
    _
  $region33: #{lenet5_forward.1} parent=0 // pred_fallthru
    _
  // Predicated region
  $region34: #{lenet5_forward.1} parent=0 // pred_check
    _
  $region35: #{lenet5_forward.1} parent=0 // pred_check_branch
    %33 = sbr.rel (0) target = $region37
  $region36: #{lenet5_forward.1} parent=0 // pred_region
    _
  $region37: #{lenet5_forward.1} parent=0 // pred_fallthru
    _
  // Predicated region
  $region38: #{lenet5_forward.1} parent=0 // pred_check
    _
  $region39: #{lenet5_forward.1} parent=0 // pred_check_branch
    %35 = sbr.rel (0) target = $region41
  $region40: #{lenet5_forward.1} parent=0 // pred_region
    _
  $region41: #{lenet5_forward.1} parent=0 // pred_fallthru
    _
  // Predicated region
  $region42: #{lenet5_forward.1} parent=0 // pred_check
    _
  $region43: #{lenet5_forward.1} parent=0 // pred_check_branch
    %37 = sbr.rel (0) target = $region45
  $region44: #{lenet5_forward.1} parent=0 // pred_region
    _
  $region45: #{lenet5_forward.1} parent=0 // pred_fallthru
    _
  %v39 = vld [vmem:[%s0] sm:$0xff]
  %v40 = vld [vmem:[%s0 + $0x8] sm:$0xff]
  %v41 = vld [vmem:[%s0 + $0x10] sm:$0xff]
  %v42 = vld [vmem:[%s0 + $0x18] sm:$0xff]
  %v43 = vld [vmem:[%s0 + $0x20] sm:$0xff]
  %v44 = vld [vmem:[%s0 + $0x28] sm:$0xff]
  %v45 = vld [vmem:[%s0 + $0x30] sm:$0xff]
  %v46 = vld [vmem:[%s0 + $0x38] sm:$0xff]
  %v47 = vld [vmem:[%s0 + $0x40] sm:$0xff]
  %v48 = vld [vmem:[%s0 + $0x48] sm:$0xff]
  %v49 = vld [vmem:[%s0 + $0x50] sm:$0xff]
  %v50 = vld [vmem:[%s0 + $0x58] sm:$0xff]
  %v51 = vld [vmem:[%s0 + $0x60] sm:$0xff]
  %v52 = vld [vmem:[%s0 + $0x68] sm:$0xff]
  %v53 = vld [vmem:[%s0 + $0x70] sm:$0xff]
  %v54 = vld [vmem:[%s0 + $0x78] sm:$0xff]
  %v55 = vld [vmem:[%s0 + $0x80] sm:$0xff]
  %v56 = vld [vmem:[%s0 + $0x88] sm:$0xff]
  %v57 = vld [vmem:[%s0 + $0x90] sm:$0xff]
  %v58 = vld [vmem:[%s0 + $0x98] sm:$0xff]
  %v59 = vld [vmem:[%s0 + $0xa0] sm:$0xff]
  %v60 = vld [vmem:[%s0 + $0xa8] sm:$0xff]
  %v61 = vld [vmem:[%s0 + $0xb0] sm:$0xff]
  %v62 = vld [vmem:[%s0 + $0xb8] sm:$0xff]
  %v63 = vld [vmem:[%s0 + $0xc0] sm:$0xff]
  %v64 = vld [vmem:[%s0 + $0xc8] sm:$0xff]
  %v65 = vld [vmem:[%s0 + $0xd0] sm:$0xff]
  %v66 = vld [vmem:[%s0 + $0xd8] sm:$0xff]
  %s67 = scalar_lea.vmem %s0, 8
  %v68 = vld [vmem:[%s67] sm:$0xff]
  %v69 = vld [vmem:[%s67 + $0x8] sm:$0xff]
  %v70 = vld [vmem:[%s67 + $0x10] sm:$0xff]
  %v71 = vld [vmem:[%s67 + $0x18] sm:$0xff]
  %v72 = vld [vmem:[%s67 + $0x20] sm:$0xff]
  %v73 = vld [vmem:[%s67 + $0x28] sm:$0xff]
  %v74 = vld [vmem:[%s67 + $0x30] sm:$0xff]
  %v75 = vld [vmem:[%s67 + $0x38] sm:$0xff]
  %v76 = vld [vmem:[%s67 + $0x40] sm:$0xff]
  %v77 = vld [vmem:[%s67 + $0x48] sm:$0xff]
  %v78 = vld [vmem:[%s67 + $0x50] sm:$0xff]
  %v79 = vld [vmem:[%s67 + $0x58] sm:$0xff]
  %v80 = vld [vmem:[%s67 + $0x60] sm:$0xff]
  %v81 = vld [vmem:[%s67 + $0x68] sm:$0xff]
  %v82 = vld [vmem:[%s67 + $0x70] sm:$0xff]
  %v83 = vld [vmem:[%s67 + $0x78] sm:$0xff]
  %v84 = vld [vmem:[%s67 + $0x80] sm:$0xff]
  %v85 = vld [vmem:[%s67 + $0x88] sm:$0xff]
  %v86 = vld [vmem:[%s67 + $0x90] sm:$0xff]
  %v87 = vld [vmem:[%s67 + $0x98] sm:$0xff]
  %v88 = vld [vmem:[%s67 + $0xa0] sm:$0xff]
  %v89 = vld [vmem:[%s67 + $0xa8] sm:$0xff]
  %v90 = vld [vmem:[%s67 + $0xb0] sm:$0xff]
  %v91 = vld [vmem:[%s67 + $0xb8] sm:$0xff]
  %v92 = vld [vmem:[%s67 + $0xc0] sm:$0xff]
  %v93 = vld [vmem:[%s67 + $0xc8] sm:$0xff]
  %v94 = vld [vmem:[%s67 + $0xd0] sm:$0xff]
  %v95 = vld [vmem:[%s67 + $0xd8] sm:$0xff]
  %s96 = scalar_lea.vmem %s0, 16
  %v97 = vld [vmem:[%s96] sm:$0xff]
  %v98 = vld [vmem:[%s96 + $0x8] sm:$0xff]
  %v99 = vld [vmem:[%s96 + $0x10] sm:$0xff]
  %v100 = vld [vmem:[%s96 + $0x18] sm:$0xff]
  %v101 = vld [vmem:[%s96 + $0x20] sm:$0xff]
  %v102 = vld [vmem:[%s96 + $0x28] sm:$0xff]
  %v103 = vld [vmem:[%s96 + $0x30] sm:$0xff]
  %v104 = vld [vmem:[%s96 + $0x38] sm:$0xff]
  %v105 = vld [vmem:[%s96 + $0x40] sm:$0xff]
  %v106 = vld [vmem:[%s96 + $0x48] sm:$0xff]
  %v107 = vld [vmem:[%s96 + $0x50] sm:$0xff]
  %v108 = vld [vmem:[%s96 + $0x58] sm:$0xff]
  %v109 = vld [vmem:[%s96 + $0x60] sm:$0xff]
  %v110 = vld [vmem:[%s96 + $0x68] sm:$0xff]
  %v111 = vld [vmem:[%s96 + $0x70] sm:$0xff]
  %v112 = vld [vmem:[%s96 + $0x78] sm:$0xff]
  %v113 = vld [vmem:[%s96 + $0x80] sm:$0xff]
  %v114 = vld [vmem:[%s96 + $0x88] sm:$0xff]
  %v115 = vld [vmem:[%s96 + $0x90] sm:$0xff]
  %v116 = vld [vmem:[%s96 + $0x98] sm:$0xff]
  %v117 = vld [vmem:[%s96 + $0xa0] sm:$0xff]
  %v118 = vld [vmem:[%s96 + $0xa8] sm:$0xff]
  %v119 = vld [vmem:[%s96 + $0xb0] sm:$0xff]
  %v120 = vld [vmem:[%s96 + $0xb8] sm:$0xff]
  %v121 = vld [vmem:[%s96 + $0xc0] sm:$0xff]
  %v122 = vld [vmem:[%s96 + $0xc8] sm:$0xff]
  %v123 = vld [vmem:[%s96 + $0xd0] sm:$0xff]
  %v124 = vld [vmem:[%s96 + $0xd8] sm:$0xff]
  %s125 = scalar_lea.vmem %s0, 24
  %v126 = vld [vmem:[%s125] sm:$0xff]
  %v127 = vld [vmem:[%s125 + $0x8] sm:$0xff]
  %v128 = vld [vmem:[%s125 + $0x10] sm:$0xff]
  %v129 = vld [vmem:[%s125 + $0x18] sm:$0xff]
  %v130 = vld [vmem:[%s125 + $0x20] sm:$0xff]
  %v131 = vld [vmem:[%s125 + $0x28] sm:$0xff]
  %v132 = vld [vmem:[%s125 + $0x30] sm:$0xff]
  %v133 = vld [vmem:[%s125 + $0x38] sm:$0xff]
  %v134 = vld [vmem:[%s125 + $0x40] sm:$0xff]
  %v135 = vld [vmem:[%s125 + $0x48] sm:$0xff]
  %v136 = vld [vmem:[%s125 + $0x50] sm:$0xff]
  %v137 = vld [vmem:[%s125 + $0x58] sm:$0xff]
  %v138 = vld [vmem:[%s125 + $0x60] sm:$0xff]
  %v139 = vld [vmem:[%s125 + $0x68] sm:$0xff]
  %v140 = vld [vmem:[%s125 + $0x70] sm:$0xff]
  %v141 = vld [vmem:[%s125 + $0x78] sm:$0xff]
  %v142 = vld [vmem:[%s125 + $0x80] sm:$0xff]
  %v143 = vld [vmem:[%s125 + $0x88] sm:$0xff]
  %v144 = vld [vmem:[%s125 + $0x90] sm:$0xff]
  %v145 = vld [vmem:[%s125 + $0x98] sm:$0xff]
  %v146 = vld [vmem:[%s125 + $0xa0] sm:$0xff]
  %v147 = vld [vmem:[%s125 + $0xa8] sm:$0xff]
  %v148 = vld [vmem:[%s125 + $0xb0] sm:$0xff]
  %v149 = vld [vmem:[%s125 + $0xb8] sm:$0xff]
  %v150 = vld [vmem:[%s125 + $0xc0] sm:$0xff]
  %v151 = vld [vmem:[%s125 + $0xc8] sm:$0xff]
  %v152 = vld [vmem:[%s125 + $0xd0] sm:$0xff]
  %v153 = vld [vmem:[%s125 + $0xd8] sm:$0xff]
  %s154 = scalar_lea.vmem %s0, 32
  %v155 = vld [vmem:[%s154] sm:$0xff]
  %v156 = vld [vmem:[%s154 + $0x8] sm:$0xff]
  %v157 = vld [vmem:[%s154 + $0x10] sm:$0xff]
  %v158 = vld [vmem:[%s154 + $0x18] sm:$0xff]
  %v159 = vld [vmem:[%s154 + $0x20] sm:$0xff]
  %v160 = vld [vmem:[%s154 + $0x28] sm:$0xff]
  %v161 = vld [vmem:[%s154 + $0x30] sm:$0xff]
  %v162 = vld [vmem:[%s154 + $0x38] sm:$0xff]
  %v163 = vld [vmem:[%s154 + $0x40] sm:$0xff]
  %v164 = vld [vmem:[%s154 + $0x48] sm:$0xff]
  %v165 = vld [vmem:[%s154 + $0x50] sm:$0xff]
  %v166 = vld [vmem:[%s154 + $0x58] sm:$0xff]
  %v167 = vld [vmem:[%s154 + $0x60] sm:$0xff]
  %v168 = vld [vmem:[%s154 + $0x68] sm:$0xff]
  %v169 = vld [vmem:[%s154 + $0x70] sm:$0xff]
  %v170 = vld [vmem:[%s154 + $0x78] sm:$0xff]
  %v171 = vld [vmem:[%s154 + $0x80] sm:$0xff]
  %v172 = vld [vmem:[%s154 + $0x88] sm:$0xff]
  %v173 = vld [vmem:[%s154 + $0x90] sm:$0xff]
  %v174 = vld [vmem:[%s154 + $0x98] sm:$0xff]
  %v175 = vld [vmem:[%s154 + $0xa0] sm:$0xff]
  %v176 = vld [vmem:[%s154 + $0xa8] sm:$0xff]
  %v177 = vld [vmem:[%s154 + $0xb0] sm:$0xff]
  %v178 = vld [vmem:[%s154 + $0xb8] sm:$0xff]
  %v179 = vld [vmem:[%s154 + $0xc0] sm:$0xff]
  %v180 = vld [vmem:[%s154 + $0xc8] sm:$0xff]
  %v181 = vld [vmem:[%s154 + $0xd0] sm:$0xff]
  %v182 = vld [vmem:[%s154 + $0xd8] sm:$0xff]
  %211 = vrot.lane.b32.xlu0 %v68, 32
  %v212 = vpop.permute.xlu0 %211
  %213 = vrot.lane.b32.xlu0 %v69, 32
  %v214 = vpop.permute.xlu0 %213
  %215 = vrot.lane.b32.xlu0 %v70, 32
  %v216 = vpop.permute.xlu0 %215
  %217 = vrot.lane.b32.xlu0 %v71, 32
  %v218 = vpop.permute.xlu0 %217
  %219 = vrot.lane.b32.xlu0 %v72, 32
  %v220 = vpop.permute.xlu0 %219
  %221 = vrot.lane.b32.xlu0 %v73, 32
  %v222 = vpop.permute.xlu0 %221
  %223 = vrot.lane.b32.xlu0 %v74, 32
  %v224 = vpop.permute.xlu0 %223
  %225 = vrot.lane.b32.xlu0 %v75, 32
  %v226 = vpop.permute.xlu0 %225
  %227 = vrot.lane.b32.xlu0 %v76, 32
  %v228 = vpop.permute.xlu0 %227
  %229 = vrot.lane.b32.xlu0 %v77, 32
  %v230 = vpop.permute.xlu0 %229
  %231 = vrot.lane.b32.xlu0 %v78, 32
  %v232 = vpop.permute.xlu0 %231
  %233 = vrot.lane.b32.xlu0 %v79, 32
  %v234 = vpop.permute.xlu0 %233
  %235 = vrot.lane.b32.xlu0 %v80, 32
  %v236 = vpop.permute.xlu0 %235
  %237 = vrot.lane.b32.xlu0 %v81, 32
  %v238 = vpop.permute.xlu0 %237
  %239 = vrot.lane.b32.xlu0 %v82, 32
  %v240 = vpop.permute.xlu0 %239
  %241 = vrot.lane.b32.xlu0 %v83, 32
  %v242 = vpop.permute.xlu0 %241
  %243 = vrot.lane.b32.xlu0 %v84, 32
  %v244 = vpop.permute.xlu0 %243
  %245 = vrot.lane.b32.xlu0 %v85, 32
  %v246 = vpop.permute.xlu0 %245
  %247 = vrot.lane.b32.xlu0 %v86, 32
  %v248 = vpop.permute.xlu0 %247
  %249 = vrot.lane.b32.xlu0 %v87, 32
  %v250 = vpop.permute.xlu0 %249
  %251 = vrot.lane.b32.xlu0 %v88, 32
  %v252 = vpop.permute.xlu0 %251
  %253 = vrot.lane.b32.xlu0 %v89, 32
  %v254 = vpop.permute.xlu0 %253
  %255 = vrot.lane.b32.xlu0 %v90, 32
  %v256 = vpop.permute.xlu0 %255
  %257 = vrot.lane.b32.xlu0 %v91, 32
  %v258 = vpop.permute.xlu0 %257
  %259 = vrot.lane.b32.xlu0 %v92, 32
  %v260 = vpop.permute.xlu0 %259
  %261 = vrot.lane.b32.xlu0 %v93, 32
  %v262 = vpop.permute.xlu0 %261
  %263 = vrot.lane.b32.xlu0 %v94, 32
  %v264 = vpop.permute.xlu0 %263
  %265 = vrot.lane.b32.xlu0 %v95, 32
  %v266 = vpop.permute.xlu0 %265
  %323 = vrot.lane.b32.xlu0 %v97, 64
  %v324 = vpop.permute.xlu0 %323
  %325 = vrot.lane.b32.xlu0 %v98, 64
  %v326 = vpop.permute.xlu0 %325
  %327 = vrot.lane.b32.xlu0 %v99, 64
  %v328 = vpop.permute.xlu0 %327
  %329 = vrot.lane.b32.xlu0 %v100, 64
  %v330 = vpop.permute.xlu0 %329
  %331 = vrot.lane.b32.xlu0 %v101, 64
  %v332 = vpop.permute.xlu0 %331
  %333 = vrot.lane.b32.xlu0 %v102, 64
  %v334 = vpop.permute.xlu0 %333
  %335 = vrot.lane.b32.xlu0 %v103, 64
  %v336 = vpop.permute.xlu0 %335
  %337 = vrot.lane.b32.xlu0 %v104, 64
  %v338 = vpop.permute.xlu0 %337
  %339 = vrot.lane.b32.xlu0 %v105, 64
  %v340 = vpop.permute.xlu0 %339
  %341 = vrot.lane.b32.xlu0 %v106, 64
  %v342 = vpop.permute.xlu0 %341
  %343 = vrot.lane.b32.xlu0 %v107, 64
  %v344 = vpop.permute.xlu0 %343
  %345 = vrot.lane.b32.xlu0 %v108, 64
  %v346 = vpop.permute.xlu0 %345
  %347 = vrot.lane.b32.xlu0 %v109, 64
  %v348 = vpop.permute.xlu0 %347
  %349 = vrot.lane.b32.xlu0 %v110, 64
  %v350 = vpop.permute.xlu0 %349
  %351 = vrot.lane.b32.xlu0 %v111, 64
  %v352 = vpop.permute.xlu0 %351
  %353 = vrot.lane.b32.xlu0 %v112, 64
  %v354 = vpop.permute.xlu0 %353
  %355 = vrot.lane.b32.xlu0 %v113, 64
  %v356 = vpop.permute.xlu0 %355
  %357 = vrot.lane.b32.xlu0 %v114, 64
  %v358 = vpop.permute.xlu0 %357
  %359 = vrot.lane.b32.xlu0 %v115, 64
  %v360 = vpop.permute.xlu0 %359
  %361 = vrot.lane.b32.xlu0 %v116, 64
  %v362 = vpop.permute.xlu0 %361
  %363 = vrot.lane.b32.xlu0 %v117, 64
  %v364 = vpop.permute.xlu0 %363
  %365 = vrot.lane.b32.xlu0 %v118, 64
  %v366 = vpop.permute.xlu0 %365
  %367 = vrot.lane.b32.xlu0 %v119, 64
  %v368 = vpop.permute.xlu0 %367
  %369 = vrot.lane.b32.xlu0 %v120, 64
  %v370 = vpop.permute.xlu0 %369
  %371 = vrot.lane.b32.xlu0 %v121, 64
  %v372 = vpop.permute.xlu0 %371
  %373 = vrot.lane.b32.xlu0 %v122, 64
  %v374 = vpop.permute.xlu0 %373
  %375 = vrot.lane.b32.xlu0 %v123, 64
  %v376 = vpop.permute.xlu0 %375
  %377 = vrot.lane.b32.xlu0 %v124, 64
  %v378 = vpop.permute.xlu0 %377
  %435 = vrot.lane.b32.xlu0 %v126, 96
  %v436 = vpop.permute.xlu0 %435
  %437 = vrot.lane.b32.xlu0 %v127, 96
  %v438 = vpop.permute.xlu0 %437
  %439 = vrot.lane.b32.xlu0 %v128, 96
  %v440 = vpop.permute.xlu0 %439
  %441 = vrot.lane.b32.xlu0 %v129, 96
  %v442 = vpop.permute.xlu0 %441
  %443 = vrot.lane.b32.xlu0 %v130, 96
  %v444 = vpop.permute.xlu0 %443
  %445 = vrot.lane.b32.xlu0 %v131, 96
  %v446 = vpop.permute.xlu0 %445
  %447 = vrot.lane.b32.xlu0 %v132, 96
  %v448 = vpop.permute.xlu0 %447
  %449 = vrot.lane.b32.xlu0 %v133, 96
  %v450 = vpop.permute.xlu0 %449
  %451 = vrot.lane.b32.xlu0 %v134, 96
  %v452 = vpop.permute.xlu0 %451
  %453 = vrot.lane.b32.xlu0 %v135, 96
  %v454 = vpop.permute.xlu0 %453
  %455 = vrot.lane.b32.xlu0 %v136, 96
  %v456 = vpop.permute.xlu0 %455
  %457 = vrot.lane.b32.xlu0 %v137, 96
  %v458 = vpop.permute.xlu0 %457
  %459 = vrot.lane.b32.xlu0 %v138, 96
  %v460 = vpop.permute.xlu0 %459
  %461 = vrot.lane.b32.xlu0 %v139, 96
  %v462 = vpop.permute.xlu0 %461
  %463 = vrot.lane.b32.xlu0 %v140, 96
  %v464 = vpop.permute.xlu0 %463
  %465 = vrot.lane.b32.xlu0 %v141, 96
  %v466 = vpop.permute.xlu0 %465
  %467 = vrot.lane.b32.xlu0 %v142, 96
  %v468 = vpop.permute.xlu0 %467
  %469 = vrot.lane.b32.xlu0 %v143, 96
  %v470 = vpop.permute.xlu0 %469
  %471 = vrot.lane.b32.xlu0 %v144, 96
  %v472 = vpop.permute.xlu0 %471
  %473 = vrot.lane.b32.xlu0 %v145, 96
  %v474 = vpop.permute.xlu0 %473
  %475 = vrot.lane.b32.xlu0 %v146, 96
  %v476 = vpop.permute.xlu0 %475
  %477 = vrot.lane.b32.xlu0 %v147, 96
  %v478 = vpop.permute.xlu0 %477
  %479 = vrot.lane.b32.xlu0 %v148, 96
  %v480 = vpop.permute.xlu0 %479
  %481 = vrot.lane.b32.xlu0 %v149, 96
  %v482 = vpop.permute.xlu0 %481
  %483 = vrot.lane.b32.xlu0 %v150, 96
  %v484 = vpop.permute.xlu0 %483
  %485 = vrot.lane.b32.xlu0 %v151, 96
  %v486 = vpop.permute.xlu0 %485
  %487 = vrot.lane.b32.xlu0 %v152, 96
  %v488 = vpop.permute.xlu0 %487
  %489 = vrot.lane.b32.xlu0 %v153, 96
  %v490 = vpop.permute.xlu0 %489
  %vm519 = vcmask 261120
  %v520 = vsel %vm519, %v39, %v212
  %v521 = vsel %vm519, %v40, %v214
  %v522 = vsel %vm519, %v41, %v216
  %v523 = vsel %vm519, %v42, %v218
  %v524 = vsel %vm519, %v43, %v220
  %v525 = vsel %vm519, %v44, %v222
  %v526 = vsel %vm519, %v45, %v224
  %v527 = vsel %vm519, %v46, %v226
  %v528 = vsel %vm519, %v47, %v228
  %v529 = vsel %vm519, %v48, %v230
  %v530 = vsel %vm519, %v49, %v232
  %v531 = vsel %vm519, %v50, %v234
  %v532 = vsel %vm519, %v51, %v236
  %v533 = vsel %vm519, %v52, %v238
  %v534 = vsel %vm519, %v53, %v240
  %v535 = vsel %vm519, %v54, %v242
  %v536 = vsel %vm519, %v55, %v244
  %v537 = vsel %vm519, %v56, %v246
  %v538 = vsel %vm519, %v57, %v248
  %v539 = vsel %vm519, %v58, %v250
  %v540 = vsel %vm519, %v59, %v252
  %v541 = vsel %vm519, %v60, %v254
  %v542 = vsel %vm519, %v61, %v256
  %v543 = vsel %vm519, %v62, %v258
  %v544 = vsel %vm519, %v63, %v260
  %v545 = vsel %vm519, %v64, %v262
  %v546 = vsel %vm519, %v65, %v264
  %v547 = vsel %vm519, %v66, %v266
  %vm548 = vcmask 523264
  %v549 = vsel %vm548, %v520, %v324
  %v550 = vsel %vm548, %v521, %v326
  %v551 = vsel %vm548, %v522, %v328
  %v552 = vsel %vm548, %v523, %v330
  %v553 = vsel %vm548, %v524, %v332
  %v554 = vsel %vm548, %v525, %v334
  %v555 = vsel %vm548, %v526, %v336
  %v556 = vsel %vm548, %v527, %v338
  %v557 = vsel %vm548, %v528, %v340
  %v558 = vsel %vm548, %v529, %v342
  %v559 = vsel %vm548, %v530, %v344
  %v560 = vsel %vm548, %v531, %v346
  %v561 = vsel %vm548, %v532, %v348
  %v562 = vsel %vm548, %v533, %v350
  %v563 = vsel %vm548, %v534, %v352
  %v564 = vsel %vm548, %v535, %v354
  %v565 = vsel %vm548, %v536, %v356
  %v566 = vsel %vm548, %v537, %v358
  %v567 = vsel %vm548, %v538, %v360
  %v568 = vsel %vm548, %v539, %v362
  %v569 = vsel %vm548, %v540, %v364
  %v570 = vsel %vm548, %v541, %v366
  %v571 = vsel %vm548, %v542, %v368
  %v572 = vsel %vm548, %v543, %v370
  %v573 = vsel %vm548, %v544, %v372
  %v574 = vsel %vm548, %v545, %v374
  %v575 = vsel %vm548, %v546, %v376
  %v576 = vsel %vm548, %v547, %v378
  %vm577 = vcmask 785408
  %v578 = vsel %vm577, %v549, %v436
  %v579 = vsel %vm577, %v550, %v438
  %v580 = vsel %vm577, %v551, %v440
  %v581 = vsel %vm577, %v552, %v442
  %v582 = vsel %vm577, %v553, %v444
  %v583 = vsel %vm577, %v554, %v446
  %v584 = vsel %vm577, %v555, %v448
  %v585 = vsel %vm577, %v556, %v450
  %v586 = vsel %vm577, %v557, %v452
  %v587 = vsel %vm577, %v558, %v454
  %v588 = vsel %vm577, %v559, %v456
  %v589 = vsel %vm577, %v560, %v458
  %v590 = vsel %vm577, %v561, %v460
  %v591 = vsel %vm577, %v562, %v462
  %v592 = vsel %vm577, %v563, %v464
  %v593 = vsel %vm577, %v564, %v466
  %v594 = vsel %vm577, %v565, %v468
  %v595 = vsel %vm577, %v566, %v470
  %v596 = vsel %vm577, %v567, %v472
  %v597 = vsel %vm577, %v568, %v474
  %v598 = vsel %vm577, %v569, %v476
  %v599 = vsel %vm577, %v570, %v478
  %v600 = vsel %vm577, %v571, %v480
  %v601 = vsel %vm577, %v572, %v482
  %v602 = vsel %vm577, %v573, %v484
  %v603 = vsel %vm577, %v574, %v486
  %v604 = vsel %vm577, %v575, %v488
  %v605 = vsel %vm577, %v576, %v490
  %v606 = vld [vmem:[%s1] sm:$0xff]
  %v607 = vld [vmem:[%s1 + $0x8] sm:$0xff]
  %v608 = vld [vmem:[%s1 + $0x10] sm:$0xff]
  %v609 = vld [vmem:[%s1 + $0x18] sm:$0xff]
  %v610 = vld [vmem:[%s1 + $0x20] sm:$0xff]
  %v611 = vld [vmem:[%s1 + $0x28] sm:$0xff]
  %v612 = vld [vmem:[%s1 + $0x30] sm:$0xff]
  %v613 = vld [vmem:[%s1 + $0x38] sm:$0xff]
  %v614 = vld [vmem:[%s1 + $0x40] sm:$0xff]
  %v615 = vld [vmem:[%s1 + $0x48] sm:$0xff]
  %v616 = vld [vmem:[%s1 + $0x50] sm:$0xff]
  %v617 = vld [vmem:[%s1 + $0x58] sm:$0xff]
  %v618 = vld [vmem:[%s1 + $0x60] sm:$0xff]
  %v619 = vld [vmem:[%s1 + $0x68] sm:$0xff]
  %v620 = vld [vmem:[%s1 + $0x70] sm:$0xff]
  %v621 = vld [vmem:[%s1 + $0x78] sm:$0xff]
  %v622 = vld [vmem:[%s1 + $0x80] sm:$0xff]
  %v623 = vld [vmem:[%s1 + $0x88] sm:$0xff]
  %v624 = vld [vmem:[%s1 + $0x90] sm:$0xff]
  %v625 = vld [vmem:[%s1 + $0x98] sm:$0xff]
  %v626 = vpack.c.bf16 %v579, %v578
  %v627 = vpack.c.bf16 %v156, %v155
  %v628 = vpack.c.bf16 %v581, %v580
  %v629 = vpack.c.bf16 %v158, %v157
  %v630 = vpack.c.bf16 %v583, %v582
  %v631 = vpack.c.bf16 %v160, %v159
  %v632 = vpack.c.bf16 %v585, %v584
  %v633 = vpack.c.bf16 %v162, %v161
  %v634 = vpack.c.bf16 %v587, %v586
  %v635 = vpack.c.bf16 %v164, %v163
  %v636 = vpack.c.bf16 %v589, %v588
  %v637 = vpack.c.bf16 %v166, %v165
  %v638 = vpack.c.bf16 %v591, %v590
  %v639 = vpack.c.bf16 %v168, %v167
  %v640 = vpack.c.bf16 %v593, %v592
  %v641 = vpack.c.bf16 %v170, %v169
  %v642 = vpack.c.bf16 %v595, %v594
  %v643 = vpack.c.bf16 %v172, %v171
  %v644 = vpack.c.bf16 %v597, %v596
  %v645 = vpack.c.bf16 %v174, %v173
  %v646 = vpack.c.bf16 %v599, %v598
  %v647 = vpack.c.bf16 %v176, %v175
  %v648 = vpack.c.bf16 %v601, %v600
  %v649 = vpack.c.bf16 %v178, %v177
  %v650 = vpack.c.bf16 %v603, %v602
  %v651 = vpack.c.bf16 %v180, %v179
  %v652 = vpack.c.bf16 %v605, %v604
  %v653 = vpack.c.bf16 %v182, %v181
  %v654 = vld [vmem:[%s2] sm:$0x3]
  %v656 = vlaneseq
  %v657 = vshrl.u32 %v656, 7
  %v658 = vsub.s32 0, %v657
  %v659 = vrot.slane %v654, %v658
  %v660 = vlaneseq
  %v661 = vshrl.u32 %v660, 7
  %v662 = vsub.s32 1, %v661
  %v663 = vrot.slane %v654, %v662
  %v686 = vunpack.c.l.b16 %v606
  %v687 = vunpack.c.h.b16 %v606
  %v688 = vunpack.c.l.b16 %v607
  %v689 = vunpack.c.h.b16 %v607
  %v690 = vunpack.c.l.b16 %v608
  %v691 = vunpack.c.h.b16 %v608
  %v692 = vunpack.c.l.b16 %v609
  %v693 = vunpack.c.h.b16 %v609
  %v694 = vunpack.c.l.b16 %v610
  %v695 = vunpack.c.h.b16 %v610
  %v696 = vunpack.c.l.b16 %v611
  %v697 = vunpack.c.h.b16 %v611
  %v698 = vunpack.c.l.b16 %v612
  %v699 = vunpack.c.h.b16 %v612
  %v700 = vunpack.c.l.b16 %v613
  %v701 = vunpack.c.h.b16 %v613
  %v702 = vunpack.c.l.b16 %v614
  %v703 = vunpack.c.h.b16 %v614
  %v704 = vunpack.c.l.b16 %v615
  %v705 = vunpack.c.h.b16 %v615
  %v706 = vunpack.c.l.b16 %v616
  %v707 = vunpack.c.h.b16 %v616
  %v708 = vunpack.c.l.b16 %v617
  %v709 = vunpack.c.h.b16 %v617
  %v710 = vunpack.c.l.b16 %v618
  %v711 = vunpack.c.h.b16 %v618
  %v712 = vunpack.c.l.b16 %v619
  %v713 = vunpack.c.h.b16 %v619
  %v714 = vunpack.c.l.b16 %v620
  %v715 = vunpack.c.h.b16 %v620
  %v716 = vunpack.c.l.b16 %v621
  %v717 = vunpack.c.h.b16 %v621
  %v718 = vunpack.c.l.b16 %v622
  %v719 = vunpack.c.h.b16 %v622
  %v720 = vunpack.c.l.b16 %v623
  %v721 = vunpack.c.h.b16 %v623
  %v722 = vunpack.c.l.b16 %v624
  %v723 = vunpack.c.h.b16 %v624
  %v724 = vunpack.c.l.b16 %v625
  %v725 = vunpack.c.h.b16 %v625
  %v726 = vpack.c.b16 %v688, %v686
  %v727 = vpack.c.b16 %v689, %v687
  %v728 = vpack.c.b16 %v692, %v690
  %v729 = vpack.c.b16 %v693, %v691
  %v730 = vpack.c.b16 %v696, %v694
  %v731 = vpack.c.b16 %v697, %v695
  %v732 = vpack.c.b16 %v700, %v698
  %v733 = vpack.c.b16 %v701, %v699
  %v734 = vpack.c.b16 %v704, %v702
  %v735 = vpack.c.b16 %v705, %v703
  %v736 = vpack.c.b16 %v708, %v706
  %v737 = vpack.c.b16 %v709, %v707
  %v738 = vpack.c.b16 %v712, %v710
  %v739 = vpack.c.b16 %v713, %v711
  %v740 = vpack.c.b16 %v716, %v714
  %v741 = vpack.c.b16 %v717, %v715
  %v742 = vpack.c.b16 %v720, %v718
  %v743 = vpack.c.b16 %v721, %v719
  %v744 = vpack.c.b16 %v724, %v722
  %v745 = vpack.c.b16 %v725, %v723
  %v767 = vsel %vm519, %v627, 0
  %v770 = vsel %vm519, %v629, 0
  %v773 = vsel %vm519, %v631, 0
  %v776 = vsel %vm519, %v633, 0
  %v779 = vsel %vm519, %v635, 0
  %v782 = vsel %vm519, %v637, 0
  %v785 = vsel %vm519, %v639, 0
  %v788 = vsel %vm519, %v641, 0
  %v791 = vsel %vm519, %v643, 0
  %v794 = vsel %vm519, %v645, 0
  %v797 = vsel %vm519, %v647, 0
  %v800 = vsel %vm519, %v649, 0
  %v803 = vsel %vm519, %v651, 0
  %v806 = vsel %vm519, %v653, 0
  %808 = vmatprep.subr.bf16.mxu0 %v727
  %809 = vmatpush1.bf16.msra.mxu0 %v726
  %810 = vmatprep.subr.bf16.mxu0 %v729
  %811 = vmatpush1.bf16.msra.mxu0 %v728
  %812 = vmatprep.subr.bf16.mxu0 %v731
  %813 = vmatpush1.bf16.msra.mxu0 %v730
  %814 = vmatprep.subr.bf16.mxu0 %v733
  %815 = vmatpush1.bf16.msra.mxu0 %v732
  %816 = vmatprep.subr.bf16.mxu0 %v735
  %817 = vmatpush1.bf16.msra.mxu0 %v734
  %818 = vmatprep.subr.bf16.mxu0 %v737
  %819 = vmatpush1.bf16.msra.mxu0 %v736
  %820 = vmatprep.subr.bf16.mxu0 %v739
  %821 = vmatpush1.bf16.msra.mxu0 %v738
  %822 = vmatprep.subr.bf16.mxu0 %v741
  %823 = vmatpush1.bf16.msra.mxu0 %v740
  %824 = vmatprep.subr.bf16.mxu0 %v743
  %825 = vmatpush1.bf16.msra.mxu0 %v742
  %826 = vmatprep.subr.bf16.mxu0 %v745
  %827 = vmatpush1.bf16.msra.mxu0 %v744
  %828 = vmatprep.subr.bf16.mxu0 0
  %829 = vmatpush1.bf16.msra.mxu0 0
  %830 = vmatprep.subr.bf16.mxu0 0
  %831 = vmatpush1.bf16.msra.mxu0 0
  %832 = vmatprep.subr.bf16.mxu0 0
  %833 = vmatpush1.bf16.msra.mxu0 0
  %834 = vmatprep.subr.bf16.mxu0 0
  %835 = vmatpush1.bf16.msra.mxu0 0
  %836 = vmatprep.subr.bf16.mxu0 0
  %837 = vmatpush1.bf16.msra.mxu0 0
  %838 = vmatprep.subr.bf16.mxu0 0
  %839 = vmatpush1.bf16.msra.mxu0 0
  %840 = vmatprep.mubr.bf16.mxu0 %v767
  %841 = vmatmul.mubr.bf16.gmra.mrb[0].mxu0 %v626
  %v842 = vpop.f32.mrb[0].mxu0
  %v843 = vadd.f32 %v659, %v842
  %v844 = vpop.f32.mrb[0].mxu0
  %v845 = vadd.f32 %v663, %v844
  %v846 = vpop.f32.mrb[0].mxu0
  %v847 = vadd.f32 %v659, %v846
  %v848 = vpop.f32.mrb[0].mxu0
  %v849 = vadd.f32 %v663, %v848
  %850 = vmatprep.mubr.bf16.mxu0 %v770
  %851 = vmatmul.mubr.bf16.gmra.mrb[0].mxu0 %v628
  %v852 = vpop.f32.mrb[0].mxu0
  %v853 = vadd.f32 %v659, %v852
  %v854 = vpop.f32.mrb[0].mxu0
  %v855 = vadd.f32 %v663, %v854
  %v856 = vpop.f32.mrb[0].mxu0
  %v857 = vadd.f32 %v659, %v856
  %v858 = vpop.f32.mrb[0].mxu0
  %v859 = vadd.f32 %v663, %v858
  %860 = vmatprep.mubr.bf16.mxu0 %v773
  %861 = vmatmul.mubr.bf16.gmra.mrb[0].mxu0 %v630
  %v862 = vpop.f32.mrb[0].mxu0
  %v863 = vadd.f32 %v659, %v862
  %v864 = vpop.f32.mrb[0].mxu0
  %v865 = vadd.f32 %v663, %v864
  %v866 = vpop.f32.mrb[0].mxu0
  %v867 = vadd.f32 %v659, %v866
  %v868 = vpop.f32.mrb[0].mxu0
  %v869 = vadd.f32 %v663, %v868
  %870 = vmatprep.mubr.bf16.mxu0 %v776
  %871 = vmatmul.mubr.bf16.gmra.mrb[0].mxu0 %v632
  %v872 = vpop.f32.mrb[0].mxu0
  %v873 = vadd.f32 %v659, %v872
  %v874 = vpop.f32.mrb[0].mxu0
  %v875 = vadd.f32 %v663, %v874
  %v876 = vpop.f32.mrb[0].mxu0
  %v877 = vadd.f32 %v659, %v876
  %v878 = vpop.f32.mrb[0].mxu0
  %v879 = vadd.f32 %v663, %v878
  %880 = vmatprep.mubr.bf16.mxu0 %v779
  %881 = vmatmul.mubr.bf16.gmra.mrb[0].mxu0 %v634
  %v882 = vpop.f32.mrb[0].mxu0
  %v883 = vadd.f32 %v659, %v882
  %v884 = vpop.f32.mrb[0].mxu0
  %v885 = vadd.f32 %v663, %v884
  %v886 = vpop.f32.mrb[0].mxu0
  %v887 = vadd.f32 %v659, %v886
  %v888 = vpop.f32.mrb[0].mxu0
  %v889 = vadd.f32 %v663, %v888
  %890 = vmatprep.mubr.bf16.mxu0 %v782
  %891 = vmatmul.mubr.bf16.gmra.mrb[0].mxu0 %v636
  %v892 = vpop.f32.mrb[0].mxu0
  %v893 = vadd.f32 %v659, %v892
  %v894 = vpop.f32.mrb[0].mxu0
  %v895 = vadd.f32 %v663, %v894
  %v896 = vpop.f32.mrb[0].mxu0
  %v897 = vadd.f32 %v659, %v896
  %v898 = vpop.f32.mrb[0].mxu0
  %v899 = vadd.f32 %v663, %v898
  %900 = vmatprep.mubr.bf16.mxu0 %v785
  %901 = vmatmul.mubr.bf16.gmra.mrb[0].mxu0 %v638
  %v902 = vpop.f32.mrb[0].mxu0
  %v903 = vadd.f32 %v659, %v902
  %v904 = vpop.f32.mrb[0].mxu0
  %v905 = vadd.f32 %v663, %v904
  %v906 = vpop.f32.mrb[0].mxu0
  %v907 = vadd.f32 %v659, %v906
  %v908 = vpop.f32.mrb[0].mxu0
  %v909 = vadd.f32 %v663, %v908
  %910 = vmatprep.mubr.bf16.mxu0 %v788
  %911 = vmatmul.mubr.bf16.gmra.mrb[0].mxu0 %v640
  %v912 = vpop.f32.mrb[0].mxu0
  %v913 = vadd.f32 %v659, %v912
  %v914 = vpop.f32.mrb[0].mxu0
  %v915 = vadd.f32 %v663, %v914
  %v916 = vpop.f32.mrb[0].mxu0
  %v917 = vadd.f32 %v659, %v916
  %v918 = vpop.f32.mrb[0].mxu0
  %v919 = vadd.f32 %v663, %v918
  %920 = vmatprep.mubr.bf16.mxu0 %v791
  %921 = vmatmul.mubr.bf16.gmra.mrb[0].mxu0 %v642
  %v922 = vpop.f32.mrb[0].mxu0
  %v923 = vadd.f32 %v659, %v922
  %v924 = vpop.f32.mrb[0].mxu0
  %v925 = vadd.f32 %v663, %v924
  %v926 = vpop.f32.mrb[0].mxu0
  %v927 = vadd.f32 %v659, %v926
  %v928 = vpop.f32.mrb[0].mxu0
  %v929 = vadd.f32 %v663, %v928
  %930 = vmatprep.mubr.bf16.mxu0 %v794
  %931 = vmatmul.mubr.bf16.gmra.mrb[0].mxu0 %v644
  %v932 = vpop.f32.mrb[0].mxu0
  %v933 = vadd.f32 %v659, %v932
  %v934 = vpop.f32.mrb[0].mxu0
  %v935 = vadd.f32 %v663, %v934
  %v936 = vpop.f32.mrb[0].mxu0
  %v937 = vadd.f32 %v659, %v936
  %v938 = vpop.f32.mrb[0].mxu0
  %v939 = vadd.f32 %v663, %v938
  %940 = vmatprep.mubr.bf16.mxu0 %v797
  %941 = vmatmul.mubr.bf16.gmra.mrb[0].mxu0 %v646
  %v942 = vpop.f32.mrb[0].mxu0
  %v943 = vadd.f32 %v659, %v942
  %v944 = vpop.f32.mrb[0].mxu0
  %v945 = vadd.f32 %v663, %v944
  %v946 = vpop.f32.mrb[0].mxu0
  %v947 = vadd.f32 %v659, %v946
  %v948 = vpop.f32.mrb[0].mxu0
  %v949 = vadd.f32 %v663, %v948
  %950 = vmatprep.mubr.bf16.mxu0 %v800
  %951 = vmatmul.mubr.bf16.gmra.mrb[0].mxu0 %v648
  %v952 = vpop.f32.mrb[0].mxu0
  %v953 = vadd.f32 %v659, %v952
  %v954 = vpop.f32.mrb[0].mxu0
  %v955 = vadd.f32 %v663, %v954
  %v956 = vpop.f32.mrb[0].mxu0
  %v957 = vadd.f32 %v659, %v956
  %v958 = vpop.f32.mrb[0].mxu0
  %v959 = vadd.f32 %v663, %v958
  %960 = vmatprep.mubr.bf16.mxu0 %v803
  %961 = vmatmul.mubr.bf16.gmra.mrb[0].mxu0 %v650
  %v962 = vpop.f32.mrb[0].mxu0
  %v963 = vadd.f32 %v659, %v962
  %v964 = vpop.f32.mrb[0].mxu0
  %v965 = vadd.f32 %v663, %v964
  %v966 = vpop.f32.mrb[0].mxu0
  %v967 = vadd.f32 %v659, %v966
  %v968 = vpop.f32.mrb[0].mxu0
  %v969 = vadd.f32 %v663, %v968
  %970 = vmatprep.mubr.bf16.mxu0 %v806
  %971 = vmatmul.mubr.bf16.gmra.mrb[0].mxu0 %v652
  %v972 = vpop.f32.mrb[0].mxu0
  %v973 = vadd.f32 %v659, %v972
  %v974 = vpop.f32.mrb[0].mxu0
  %v975 = vadd.f32 %v663, %v974
  %v976 = vpop.f32.mrb[0].mxu0
  %v977 = vadd.f32 %v659, %v976
  %v978 = vpop.f32.mrb[0].mxu0
  %v979 = vadd.f32 %v663, %v978
  %980 = vdwg.mxu0
  %v981 = vtanh.pop %v843
  %v982 = vtanh.pop %v845
  %v983 = vtanh.pop %v847
  %v984 = vtanh.pop %v849
  %v985 = vtanh.pop %v853
  %v986 = vtanh.pop %v855
  %v987 = vtanh.pop %v857
  %v988 = vtanh.pop %v859
  %v989 = vtanh.pop %v863
  %v990 = vtanh.pop %v865
  %v991 = vtanh.pop %v867
  %v992 = vtanh.pop %v869
  %v993 = vtanh.pop %v873
  %v994 = vtanh.pop %v875
  %v995 = vtanh.pop %v877
  %v996 = vtanh.pop %v879
  %v997 = vtanh.pop %v883
  %v998 = vtanh.pop %v885
  %v999 = vtanh.pop %v887
  %v1000 = vtanh.pop %v889
  %v1001 = vtanh.pop %v893
  %v1002 = vtanh.pop %v895
  %v1003 = vtanh.pop %v897
  %v1004 = vtanh.pop %v899
  %v1005 = vtanh.pop %v903
  %v1006 = vtanh.pop %v905
  %v1007 = vtanh.pop %v907
  %v1008 = vtanh.pop %v909
  %v1009 = vtanh.pop %v913
  %v1010 = vtanh.pop %v915
  %v1011 = vtanh.pop %v917
  %v1012 = vtanh.pop %v919
  %v1013 = vtanh.pop %v923
  %v1014 = vtanh.pop %v925
  %v1015 = vtanh.pop %v927
  %v1016 = vtanh.pop %v929
  %v1017 = vtanh.pop %v933
  %v1018 = vtanh.pop %v935
  %v1019 = vtanh.pop %v937
  %v1020 = vtanh.pop %v939
  %v1021 = vtanh.pop %v943
  %v1022 = vtanh.pop %v945
  %v1023 = vtanh.pop %v947
  %v1024 = vtanh.pop %v949
  %v1025 = vtanh.pop %v953
  %v1026 = vtanh.pop %v955
  %v1027 = vtanh.pop %v957
  %v1028 = vtanh.pop %v959
  %v1029 = vtanh.pop %v963
  %v1030 = vtanh.pop %v965
  %v1031 = vtanh.pop %v967
  %v1032 = vtanh.pop %v969
  %v1033 = vtanh.pop %v973
  %v1034 = vtanh.pop %v975
  %v1035 = vtanh.pop %v977
  %v1036 = vtanh.pop %v979
  %v1037 = vadd.f32 %v981, %v983
  %v1038 = vadd.f32 %v982, %v984
  %v1039 = vadd.f32 %v985, %v987
  %v1040 = vadd.f32 %v986, %v988
  %v1041 = vadd.f32 %v989, %v991
  %v1042 = vadd.f32 %v990, %v992
  %v1043 = vadd.f32 %v993, %v995
  %v1044 = vadd.f32 %v994, %v996
  %v1045 = vadd.f32 %v997, %v999
  %v1046 = vadd.f32 %v998, %v1000
  %v1047 = vadd.f32 %v1001, %v1003
  %v1048 = vadd.f32 %v1002, %v1004
  %v1049 = vadd.f32 %v1005, %v1007
  %v1050 = vadd.f32 %v1006, %v1008
  %v1051 = vadd.f32 %v1009, %v1011
  %v1052 = vadd.f32 %v1010, %v1012
  %v1053 = vadd.f32 %v1013, %v1015
  %v1054 = vadd.f32 %v1014, %v1016
  %v1055 = vadd.f32 %v1017, %v1019
  %v1056 = vadd.f32 %v1018, %v1020
  %v1057 = vadd.f32 %v1021, %v1023
  %v1058 = vadd.f32 %v1022, %v1024
  %v1059 = vadd.f32 %v1025, %v1027
  %v1060 = vadd.f32 %v1026, %v1028
  %v1061 = vadd.f32 %v1029, %v1031
  %v1062 = vadd.f32 %v1030, %v1032
  %v1063 = vadd.f32 %v1033, %v1035
  %v1064 = vadd.f32 %v1034, %v1036
  %v1065 = vmul.f32 %v1037, 0.5
  %v1066 = vmul.f32 %v1038, 0.5
  %v1067 = vmul.f32 %v1039, 0.5
  %v1068 = vmul.f32 %v1040, 0.5
  %v1069 = vmul.f32 %v1041, 0.5
  %v1070 = vmul.f32 %v1042, 0.5
  %v1071 = vmul.f32 %v1043, 0.5
  %v1072 = vmul.f32 %v1044, 0.5
  %v1073 = vmul.f32 %v1045, 0.5
  %v1074 = vmul.f32 %v1046, 0.5
  %v1075 = vmul.f32 %v1047, 0.5
  %v1076 = vmul.f32 %v1048, 0.5
  %v1077 = vmul.f32 %v1049, 0.5
  %v1078 = vmul.f32 %v1050, 0.5
  %v1079 = vmul.f32 %v1051, 0.5
  %v1080 = vmul.f32 %v1052, 0.5
  %v1081 = vmul.f32 %v1053, 0.5
  %v1082 = vmul.f32 %v1054, 0.5
  %v1083 = vmul.f32 %v1055, 0.5
  %v1084 = vmul.f32 %v1056, 0.5
  %v1085 = vmul.f32 %v1057, 0.5
  %v1086 = vmul.f32 %v1058, 0.5
  %v1087 = vmul.f32 %v1059, 0.5
  %v1088 = vmul.f32 %v1060, 0.5
  %v1089 = vmul.f32 %v1061, 0.5
  %v1090 = vmul.f32 %v1062, 0.5
  %v1091 = vmul.f32 %v1063, 0.5
  %v1092 = vmul.f32 %v1064, 0.5
  %v1093 = vld [vmem:[%s3] sm:$0xff]
  %v1094 = vld [vmem:[%s3 + $0x8] sm:$0xff]
  %v1095 = vld [vmem:[%s3 + $0x10] sm:$0xff]
  %v1096 = vld [vmem:[%s3 + $0x18] sm:$0xff]
  %v1097 = vld [vmem:[%s3 + $0x20] sm:$0xff]
  %v1098 = vld [vmem:[%s3 + $0x28] sm:$0xff]
  %v1099 = vld [vmem:[%s3 + $0x30] sm:$0xff]
  %v1100 = vld [vmem:[%s3 + $0x38] sm:$0xff]
  %v1101 = vld [vmem:[%s3 + $0x40] sm:$0xff]
  %v1102 = vld [vmem:[%s3 + $0x48] sm:$0xff]
  %v1103 = vld [vmem:[%s3 + $0x50] sm:$0xff]
  %v1104 = vld [vmem:[%s3 + $0x58] sm:$0xff]
  %v1105 = vld [vmem:[%s3 + $0x60] sm:$0xff]
  %v1106 = vld [vmem:[%s3 + $0x68] sm:$0xff]
  %v1107 = vld [vmem:[%s3 + $0x70] sm:$0xff]
  %v1108 = vld [vmem:[%s3 + $0x78] sm:$0xff]
  %v1109 = vld [vmem:[%s3 + $0x80] sm:$0xff]
  %v1110 = vld [vmem:[%s3 + $0x88] sm:$0xff]
  %v1111 = vld [vmem:[%s3 + $0x90] sm:$0xff]
  %v1112 = vld [vmem:[%s3 + $0x98] sm:$0xff]
  %v1113 = vld [vmem:[%s3 + $0xa0] sm:$0xff]
  %v1114 = vpack.c.bf16 %v1067, %v1065
  %v1115 = vpack.c.bf16 %v1068, %v1066
  %v1116 = vpack.c.bf16 %v1071, %v1069
  %v1117 = vpack.c.bf16 %v1072, %v1070
  %v1118 = vpack.c.bf16 %v1075, %v1073
  %v1119 = vpack.c.bf16 %v1076, %v1074
  %v1120 = vpack.c.bf16 %v1079, %v1077
  %v1121 = vpack.c.bf16 %v1080, %v1078
  %v1122 = vpack.c.bf16 %v1083, %v1081
  %v1123 = vpack.c.bf16 %v1084, %v1082
  %s1124 = scalar_lea.vmem %s3, 168
  %v1125 = vld [vmem:[%s1124] sm:$0xff]
  %v1126 = vld [vmem:[%s1124 + $0x8] sm:$0xff]
  %v1127 = vld [vmem:[%s1124 + $0x10] sm:$0xff]
  %v1128 = vld [vmem:[%s1124 + $0x18] sm:$0xff]
  %v1129 = vld [vmem:[%s1124 + $0x20] sm:$0xff]
  %v1130 = vld [vmem:[%s1124 + $0x28] sm:$0xff]
  %v1131 = vld [vmem:[%s1124 + $0x30] sm:$0xff]
  %v1132 = vld [vmem:[%s1124 + $0x38] sm:$0xff]
  %v1133 = vld [vmem:[%s1124 + $0x40] sm:$0xff]
  %v1134 = vld [vmem:[%s1124 + $0x48] sm:$0xff]
  %v1135 = vld [vmem:[%s1124 + $0x50] sm:$0xff]
  %v1136 = vld [vmem:[%s1124 + $0x58] sm:$0xff]
  %v1137 = vld [vmem:[%s1124 + $0x60] sm:$0xff]
  %v1138 = vld [vmem:[%s1124 + $0x68] sm:$0xff]
  %v1139 = vld [vmem:[%s1124 + $0x70] sm:$0xff]
  %v1140 = vld [vmem:[%s1124 + $0x78] sm:$0xff]
  %v1141 = vld [vmem:[%s1124 + $0x80] sm:$0xff]
  %v1142 = vld [vmem:[%s1124 + $0x88] sm:$0xff]
  %v1143 = vld [vmem:[%s1124 + $0x90] sm:$0xff]
  %v1144 = vld [vmem:[%s1124 + $0x98] sm:$0xff]
  %v1145 = vld [vmem:[%s1124 + $0xa0] sm:$0xff]
  %v1146 = vpack.c.bf16 %v1069, %v1067
  %v1147 = vpack.c.bf16 %v1070, %v1068
  %v1148 = vpack.c.bf16 %v1073, %v1071
  %v1149 = vpack.c.bf16 %v1074, %v1072
  %v1150 = vpack.c.bf16 %v1077, %v1075
  %v1151 = vpack.c.bf16 %v1078, %v1076
  %v1152 = vpack.c.bf16 %v1081, %v1079
  %v1153 = vpack.c.bf16 %v1082, %v1080
  %v1154 = vpack.c.bf16 %v1085, %v1083
  %v1155 = vpack.c.bf16 %v1086, %v1084
  %v1177 = vunpack.c.l.b16 %v1125
  %v1178 = vunpack.c.h.b16 %v1125
  %v1179 = vunpack.c.l.b16 %v1126
  %v1180 = vunpack.c.h.b16 %v1126
  %v1181 = vunpack.c.l.b16 %v1127
  %v1182 = vunpack.c.h.b16 %v1127
  %v1183 = vunpack.c.l.b16 %v1128
  %v1184 = vunpack.c.h.b16 %v1128
  %v1185 = vunpack.c.l.b16 %v1129
  %v1186 = vunpack.c.h.b16 %v1129
  %v1187 = vunpack.c.l.b16 %v1130
  %v1188 = vunpack.c.h.b16 %v1130
  %v1189 = vunpack.c.l.b16 %v1131
  %v1190 = vunpack.c.h.b16 %v1131
  %v1191 = vunpack.c.l.b16 %v1132
  %v1192 = vunpack.c.h.b16 %v1132
  %v1193 = vunpack.c.l.b16 %v1133
  %v1194 = vunpack.c.h.b16 %v1133
  %v1195 = vunpack.c.l.b16 %v1134
  %v1196 = vunpack.c.h.b16 %v1134
  %v1197 = vunpack.c.l.b16 %v1135
  %v1198 = vunpack.c.h.b16 %v1135
  %v1199 = vunpack.c.l.b16 %v1136
  %v1200 = vunpack.c.h.b16 %v1136
  %v1201 = vunpack.c.l.b16 %v1137
  %v1202 = vunpack.c.h.b16 %v1137
  %v1203 = vunpack.c.l.b16 %v1138
  %v1204 = vunpack.c.h.b16 %v1138
  %v1205 = vunpack.c.l.b16 %v1139
  %v1206 = vunpack.c.h.b16 %v1139
  %v1207 = vunpack.c.l.b16 %v1140
  %v1208 = vunpack.c.h.b16 %v1140
  %v1209 = vunpack.c.l.b16 %v1141
  %v1210 = vunpack.c.h.b16 %v1141
  %v1211 = vunpack.c.l.b16 %v1142
  %v1212 = vunpack.c.h.b16 %v1142
  %v1213 = vunpack.c.l.b16 %v1143
  %v1214 = vunpack.c.h.b16 %v1143
  %v1215 = vunpack.c.l.b16 %v1144
  %v1216 = vunpack.c.h.b16 %v1144
  %v1217 = vunpack.c.l.b16 %v1145
  %v1218 = vunpack.c.h.b16 %v1145
  %v1219 = vpack.c.b16 %v1179, %v1177
  %v1220 = vpack.c.b16 %v1180, %v1178
  %v1221 = vpack.c.b16 %v1183, %v1181
  %v1222 = vpack.c.b16 %v1184, %v1182
  %v1223 = vpack.c.b16 %v1187, %v1185
  %v1224 = vpack.c.b16 %v1188, %v1186
  %v1225 = vpack.c.b16 %v1191, %v1189
  %v1226 = vpack.c.b16 %v1192, %v1190
  %v1227 = vpack.c.b16 %v1195, %v1193
  %v1228 = vpack.c.b16 %v1196, %v1194
  %v1229 = vpack.c.b16 %v1199, %v1197
  %v1230 = vpack.c.b16 %v1200, %v1198
  %v1231 = vpack.c.b16 %v1203, %v1201
  %v1232 = vpack.c.b16 %v1204, %v1202
  %v1233 = vpack.c.b16 %v1207, %v1205
  %v1234 = vpack.c.b16 %v1208, %v1206
  %v1235 = vpack.c.b16 %v1211, %v1209
  %v1236 = vpack.c.b16 %v1212, %v1210
  %v1237 = vpack.c.b16 %v1215, %v1213
  %v1238 = vpack.c.b16 %v1216, %v1214
  %v1239 = vpack.c.b16 %v1217, %v1217
  %v1240 = vpack.c.b16 %v1218, %v1218
  %vm1261 = vcmask 326656
  %v1263 = vsel %vm1261, %v1147, 0
  %v1266 = vsel %vm1261, %v1149, 0
  %v1269 = vsel %vm1261, %v1151, 0
  %v1272 = vsel %vm1261, %v1153, 0
  %v1275 = vsel %vm1261, %v1155, 0
  %vm1277 = vcmask 1043456
  %v1279 = vsel %vm1277, %v1239, 0
  %v1282 = vsel %vm1277, %v1240, 0
  %1284 = vmatprep.subr.bf16.mxu0 %v1220
  %1285 = vmatpush1.bf16.msra.mxu0 %v1219
  %1286 = vmatprep.subr.bf16.mxu0 %v1222
  %1287 = vmatpush1.bf16.msra.mxu0 %v1221
  %1288 = vmatprep.subr.bf16.mxu0 %v1224
  %1289 = vmatpush1.bf16.msra.mxu0 %v1223
  %1290 = vmatprep.subr.bf16.mxu0 %v1226
  %1291 = vmatpush1.bf16.msra.mxu0 %v1225
  %1292 = vmatprep.subr.bf16.mxu0 %v1228
  %1293 = vmatpush1.bf16.msra.mxu0 %v1227
  %1294 = vmatprep.subr.bf16.mxu0 %v1230
  %1295 = vmatpush1.bf16.msra.mxu0 %v1229
  %1296 = vmatprep.subr.bf16.mxu0 %v1232
  %1297 = vmatpush1.bf16.msra.mxu0 %v1231
  %1298 = vmatprep.subr.bf16.mxu0 %v1234
  %1299 = vmatpush1.bf16.msra.mxu0 %v1233
  %1300 = vmatprep.subr.bf16.mxu0 %v1236
  %1301 = vmatpush1.bf16.msra.mxu0 %v1235
  %1302 = vmatprep.subr.bf16.mxu0 %v1238
  %1303 = vmatpush1.bf16.msra.mxu0 %v1237
  %1304 = vmatprep.subr.bf16.mxu0 %v1282
  %1305 = vmatpush1.bf16.msra.mxu0 %v1279
  %1306 = vmatprep.subr.bf16.mxu0 0
  %1307 = vmatpush1.bf16.msra.mxu0 0
  %1308 = vmatprep.subr.bf16.mxu0 0
  %1309 = vmatpush1.bf16.msra.mxu0 0
  %1310 = vmatprep.subr.bf16.mxu0 0
  %1311 = vmatpush1.bf16.msra.mxu0 0
  %1312 = vmatprep.subr.bf16.mxu0 0
  %1313 = vmatpush1.bf16.msra.mxu0 0
  %1314 = vmatprep.subr.bf16.mxu0 0
  %1315 = vmatpush1.bf16.msra.mxu0 0
  %1316 = vmatprep.mubr.bf16.mxu0 %v1263
  %1317 = vmatmul.mubr.bf16.gmra.mrb[0].mxu0 %v1146
  %v1318 = vpop.f32.mrb[0].mxu0
  %v1319 = vadd.f32 0.0, %v1318
  %v1320 = vpop.f32.mrb[0].mxu0
  %v1321 = vadd.f32 0.0, %v1320
  %v1322 = vpop.f32.mrb[0].mxu0
  %v1323 = vadd.f32 0.0, %v1322
  %v1324 = vpop.f32.mrb[0].mxu0
  %v1325 = vadd.f32 0.0, %v1324
  %1326 = vmatprep.mubr.bf16.mxu0 %v1266
  %1327 = vmatmul.mubr.bf16.gmra.mrb[0].mxu0 %v1148
  %v1328 = vpop.f32.mrb[0].mxu0
  %v1329 = vadd.f32 0.0, %v1328
  %v1330 = vpop.f32.mrb[0].mxu0
  %v1331 = vadd.f32 0.0, %v1330
  %v1332 = vpop.f32.mrb[0].mxu0
  %v1333 = vadd.f32 0.0, %v1332
  %v1334 = vpop.f32.mrb[0].mxu0
  %v1335 = vadd.f32 0.0, %v1334
  %1336 = vmatprep.mubr.bf16.mxu0 %v1269
  %1337 = vmatmul.mubr.bf16.gmra.mrb[0].mxu0 %v1150
  %v1338 = vpop.f32.mrb[0].mxu0
  %v1339 = vadd.f32 0.0, %v1338
  %v1340 = vpop.f32.mrb[0].mxu0
  %v1341 = vadd.f32 0.0, %v1340
  %v1342 = vpop.f32.mrb[0].mxu0
  %v1343 = vadd.f32 0.0, %v1342
  %v1344 = vpop.f32.mrb[0].mxu0
  %v1345 = vadd.f32 0.0, %v1344
  %1346 = vmatprep.mubr.bf16.mxu0 %v1272
  %1347 = vmatmul.mubr.bf16.gmra.mrb[0].mxu0 %v1152
  %v1348 = vpop.f32.mrb[0].mxu0
  %v1349 = vadd.f32 0.0, %v1348
  %v1350 = vpop.f32.mrb[0].mxu0
  %v1351 = vadd.f32 0.0, %v1350
  %v1352 = vpop.f32.mrb[0].mxu0
  %v1353 = vadd.f32 0.0, %v1352
  %v1354 = vpop.f32.mrb[0].mxu0
  %v1355 = vadd.f32 0.0, %v1354
  %1356 = vmatprep.mubr.bf16.mxu0 %v1275
  %1357 = vmatmul.mubr.bf16.gmra.mrb[0].mxu0 %v1154
  %v1358 = vpop.f32.mrb[0].mxu0
  %v1359 = vadd.f32 0.0, %v1358
  %v1360 = vpop.f32.mrb[0].mxu0
  %v1361 = vadd.f32 0.0, %v1360
  %v1362 = vpop.f32.mrb[0].mxu0
  %v1363 = vadd.f32 0.0, %v1362
  %v1364 = vpop.f32.mrb[0].mxu0
  %v1365 = vadd.f32 0.0, %v1364
  %1366 = vdwg.mxu0
  %v1388 = vunpack.c.l.b16 %v1093
  %v1389 = vunpack.c.h.b16 %v1093
  %v1390 = vunpack.c.l.b16 %v1094
  %v1391 = vunpack.c.h.b16 %v1094
  %v1392 = vunpack.c.l.b16 %v1095
  %v1393 = vunpack.c.h.b16 %v1095
  %v1394 = vunpack.c.l.b16 %v1096
  %v1395 = vunpack.c.h.b16 %v1096
  %v1396 = vunpack.c.l.b16 %v1097
  %v1397 = vunpack.c.h.b16 %v1097
  %v1398 = vunpack.c.l.b16 %v1098
  %v1399 = vunpack.c.h.b16 %v1098
  %v1400 = vunpack.c.l.b16 %v1099
  %v1401 = vunpack.c.h.b16 %v1099
  %v1402 = vunpack.c.l.b16 %v1100
  %v1403 = vunpack.c.h.b16 %v1100
  %v1404 = vunpack.c.l.b16 %v1101
  %v1405 = vunpack.c.h.b16 %v1101
  %v1406 = vunpack.c.l.b16 %v1102
  %v1407 = vunpack.c.h.b16 %v1102
  %v1408 = vunpack.c.l.b16 %v1103
  %v1409 = vunpack.c.h.b16 %v1103
  %v1410 = vunpack.c.l.b16 %v1104
  %v1411 = vunpack.c.h.b16 %v1104
  %v1412 = vunpack.c.l.b16 %v1105
  %v1413 = vunpack.c.h.b16 %v1105
  %v1414 = vunpack.c.l.b16 %v1106
  %v1415 = vunpack.c.h.b16 %v1106
  %v1416 = vunpack.c.l.b16 %v1107
  %v1417 = vunpack.c.h.b16 %v1107
  %v1418 = vunpack.c.l.b16 %v1108
  %v1419 = vunpack.c.h.b16 %v1108
  %v1420 = vunpack.c.l.b16 %v1109
  %v1421 = vunpack.c.h.b16 %v1109
  %v1422 = vunpack.c.l.b16 %v1110
  %v1423 = vunpack.c.h.b16 %v1110
  %v1424 = vunpack.c.l.b16 %v1111
  %v1425 = vunpack.c.h.b16 %v1111
  %v1426 = vunpack.c.l.b16 %v1112
  %v1427 = vunpack.c.h.b16 %v1112
  %v1428 = vunpack.c.l.b16 %v1113
  %v1429 = vunpack.c.h.b16 %v1113
  %v1430 = vpack.c.b16 %v1390, %v1388
  %v1431 = vpack.c.b16 %v1391, %v1389
  %v1432 = vpack.c.b16 %v1394, %v1392
  %v1433 = vpack.c.b16 %v1395, %v1393
  %v1434 = vpack.c.b16 %v1398, %v1396
  %v1435 = vpack.c.b16 %v1399, %v1397
  %v1436 = vpack.c.b16 %v1402, %v1400
  %v1437 = vpack.c.b16 %v1403, %v1401
  %v1438 = vpack.c.b16 %v1406, %v1404
  %v1439 = vpack.c.b16 %v1407, %v1405
  %v1440 = vpack.c.b16 %v1410, %v1408
  %v1441 = vpack.c.b16 %v1411, %v1409
  %v1442 = vpack.c.b16 %v1414, %v1412
  %v1443 = vpack.c.b16 %v1415, %v1413
  %v1444 = vpack.c.b16 %v1418, %v1416
  %v1445 = vpack.c.b16 %v1419, %v1417
  %v1446 = vpack.c.b16 %v1422, %v1420
  %v1447 = vpack.c.b16 %v1423, %v1421
  %v1448 = vpack.c.b16 %v1426, %v1424
  %v1449 = vpack.c.b16 %v1427, %v1425
  %v1450 = vpack.c.b16 %v1428, %v1428
  %v1451 = vpack.c.b16 %v1429, %v1429
  %v1473 = vsel %vm1261, %v1115, 0
  %v1476 = vsel %vm1261, %v1117, 0
  %v1479 = vsel %vm1261, %v1119, 0
  %v1482 = vsel %vm1261, %v1121, 0
  %v1485 = vsel %vm1261, %v1123, 0
  %v1488 = vsel %vm1277, %v1450, 0
  %v1491 = vsel %vm1277, %v1451, 0
  %1493 = vmatprep.subr.bf16.mxu0 %v1431
  %1494 = vmatpush1.bf16.msra.mxu0 %v1430
  %1495 = vmatprep.subr.bf16.mxu0 %v1433
  %1496 = vmatpush1.bf16.msra.mxu0 %v1432
  %1497 = vmatprep.subr.bf16.mxu0 %v1435
  %1498 = vmatpush1.bf16.msra.mxu0 %v1434
  %1499 = vmatprep.subr.bf16.mxu0 %v1437
  %1500 = vmatpush1.bf16.msra.mxu0 %v1436
  %1501 = vmatprep.subr.bf16.mxu0 %v1439
  %1502 = vmatpush1.bf16.msra.mxu0 %v1438
  %1503 = vmatprep.subr.bf16.mxu0 %v1441
  %1504 = vmatpush1.bf16.msra.mxu0 %v1440
  %1505 = vmatprep.subr.bf16.mxu0 %v1443
  %1506 = vmatpush1.bf16.msra.mxu0 %v1442
  %1507 = vmatprep.subr.bf16.mxu0 %v1445
  %1508 = vmatpush1.bf16.msra.mxu0 %v1444
  %1509 = vmatprep.subr.bf16.mxu0 %v1447
  %1510 = vmatpush1.bf16.msra.mxu0 %v1446
  %1511 = vmatprep.subr.bf16.mxu0 %v1449
  %1512 = vmatpush1.bf16.msra.mxu0 %v1448
  %1513 = vmatprep.subr.bf16.mxu0 %v1491
  %1514 = vmatpush1.bf16.msra.mxu0 %v1488
  %1515 = vmatprep.subr.bf16.mxu0 0
  %1516 = vmatpush1.bf16.msra.mxu0 0
  %1517 = vmatprep.subr.bf16.mxu0 0
  %1518 = vmatpush1.bf16.msra.mxu0 0
  %1519 = vmatprep.subr.bf16.mxu0 0
  %1520 = vmatpush1.bf16.msra.mxu0 0
  %1521 = vmatprep.subr.bf16.mxu0 0
  %1522 = vmatpush1.bf16.msra.mxu0 0
  %1523 = vmatprep.subr.bf16.mxu0 0
  %1524 = vmatpush1.bf16.msra.mxu0 0
  %1525 = vmatprep.mubr.bf16.mxu0 %v1473
  %1526 = vmatmul.mubr.bf16.gmra.mrb[0].mxu0 %v1114
  %v1527 = vpop.f32.mrb[0].mxu0
  %v1528 = vadd.f32 %v1319, %v1527
  %v1529 = vpop.f32.mrb[0].mxu0
  %v1530 = vadd.f32 %v1321, %v1529
  %v1531 = vpop.f32.mrb[0].mxu0
  %v1532 = vadd.f32 %v1323, %v1531
  %v1533 = vpop.f32.mrb[0].mxu0
  %v1534 = vadd.f32 %v1325, %v1533
  %1535 = vmatprep.mubr.bf16.mxu0 %v1476
  %1536 = vmatmul.mubr.bf16.gmra.mrb[0].mxu0 %v1116
  %v1537 = vpop.f32.mrb[0].mxu0
  %v1538 = vadd.f32 %v1329, %v1537
  %v1539 = vpop.f32.mrb[0].mxu0
  %v1540 = vadd.f32 %v1331, %v1539
  %v1541 = vpop.f32.mrb[0].mxu0
  %v1542 = vadd.f32 %v1333, %v1541
  %v1543 = vpop.f32.mrb[0].mxu0
  %v1544 = vadd.f32 %v1335, %v1543
  %1545 = vmatprep.mubr.bf16.mxu0 %v1479
  %1546 = vmatmul.mubr.bf16.gmra.mrb[0].mxu0 %v1118
  %v1547 = vpop.f32.mrb[0].mxu0
  %v1548 = vadd.f32 %v1339, %v1547
  %v1549 = vpop.f32.mrb[0].mxu0
  %v1550 = vadd.f32 %v1341, %v1549
  %v1551 = vpop.f32.mrb[0].mxu0
  %v1552 = vadd.f32 %v1343, %v1551
  %v1553 = vpop.f32.mrb[0].mxu0
  %v1554 = vadd.f32 %v1345, %v1553
  %1555 = vmatprep.mubr.bf16.mxu0 %v1482
  %1556 = vmatmul.mubr.bf16.gmra.mrb[0].mxu0 %v1120
  %v1557 = vpop.f32.mrb[0].mxu0
  %v1558 = vadd.f32 %v1349, %v1557
  %v1559 = vpop.f32.mrb[0].mxu0
  %v1560 = vadd.f32 %v1351, %v1559
  %v1561 = vpop.f32.mrb[0].mxu0
  %v1562 = vadd.f32 %v1353, %v1561
  %v1563 = vpop.f32.mrb[0].mxu0
  %v1564 = vadd.f32 %v1355, %v1563
  %1565 = vmatprep.mubr.bf16.mxu0 %v1485
  %1566 = vmatmul.mubr.bf16.gmra.mrb[0].mxu0 %v1122
  %v1567 = vpop.f32.mrb[0].mxu0
  %v1568 = vadd.f32 %v1359, %v1567
  %v1569 = vpop.f32.mrb[0].mxu0
  %v1570 = vadd.f32 %v1361, %v1569
  %v1571 = vpop.f32.mrb[0].mxu0
  %v1572 = vadd.f32 %v1363, %v1571
  %v1573 = vpop.f32.mrb[0].mxu0
  %v1574 = vadd.f32 %v1365, %v1573
  %1575 = vdwg.mxu0
  %s1576 = scalar_lea.vmem %s3, 336
  %v1577 = vld [vmem:[%s1576] sm:$0xff]
  %v1578 = vld [vmem:[%s1576 + $0x8] sm:$0xff]
  %v1579 = vld [vmem:[%s1576 + $0x10] sm:$0xff]
  %v1580 = vld [vmem:[%s1576 + $0x18] sm:$0xff]
  %v1581 = vld [vmem:[%s1576 + $0x20] sm:$0xff]
  %v1582 = vld [vmem:[%s1576 + $0x28] sm:$0xff]
  %v1583 = vld [vmem:[%s1576 + $0x30] sm:$0xff]
  %v1584 = vld [vmem:[%s1576 + $0x38] sm:$0xff]
  %v1585 = vld [vmem:[%s1576 + $0x40] sm:$0xff]
  %v1586 = vld [vmem:[%s1576 + $0x48] sm:$0xff]
  %v1587 = vld [vmem:[%s1576 + $0x50] sm:$0xff]
  %v1588 = vld [vmem:[%s1576 + $0x58] sm:$0xff]
  %v1589 = vld [vmem:[%s1576 + $0x60] sm:$0xff]
  %v1590 = vld [vmem:[%s1576 + $0x68] sm:$0xff]
  %v1591 = vld [vmem:[%s1576 + $0x70] sm:$0xff]
  %v1592 = vld [vmem:[%s1576 + $0x78] sm:$0xff]
  %v1593 = vld [vmem:[%s1576 + $0x80] sm:$0xff]
  %v1594 = vld [vmem:[%s1576 + $0x88] sm:$0xff]
  %v1595 = vld [vmem:[%s1576 + $0x90] sm:$0xff]
  %v1596 = vld [vmem:[%s1576 + $0x98] sm:$0xff]
  %v1597 = vld [vmem:[%s1576 + $0xa0] sm:$0xff]
  %v1598 = vpack.c.bf16 %v1087, %v1085
  %v1599 = vpack.c.bf16 %v1088, %v1086
  %v1621 = vunpack.c.l.b16 %v1577
  %v1622 = vunpack.c.h.b16 %v1577
  %v1623 = vunpack.c.l.b16 %v1578
  %v1624 = vunpack.c.h.b16 %v1578
  %v1625 = vunpack.c.l.b16 %v1579
  %v1626 = vunpack.c.h.b16 %v1579
  %v1627 = vunpack.c.l.b16 %v1580
  %v1628 = vunpack.c.h.b16 %v1580
  %v1629 = vunpack.c.l.b16 %v1581
  %v1630 = vunpack.c.h.b16 %v1581
  %v1631 = vunpack.c.l.b16 %v1582
  %v1632 = vunpack.c.h.b16 %v1582
  %v1633 = vunpack.c.l.b16 %v1583
  %v1634 = vunpack.c.h.b16 %v1583
  %v1635 = vunpack.c.l.b16 %v1584
  %v1636 = vunpack.c.h.b16 %v1584
  %v1637 = vunpack.c.l.b16 %v1585
  %v1638 = vunpack.c.h.b16 %v1585
  %v1639 = vunpack.c.l.b16 %v1586
  %v1640 = vunpack.c.h.b16 %v1586
  %v1641 = vunpack.c.l.b16 %v1587
  %v1642 = vunpack.c.h.b16 %v1587
  %v1643 = vunpack.c.l.b16 %v1588
  %v1644 = vunpack.c.h.b16 %v1588
  %v1645 = vunpack.c.l.b16 %v1589
  %v1646 = vunpack.c.h.b16 %v1589
  %v1647 = vunpack.c.l.b16 %v1590
  %v1648 = vunpack.c.h.b16 %v1590
  %v1649 = vunpack.c.l.b16 %v1591
  %v1650 = vunpack.c.h.b16 %v1591
  %v1651 = vunpack.c.l.b16 %v1592
  %v1652 = vunpack.c.h.b16 %v1592
  %v1653 = vunpack.c.l.b16 %v1593
  %v1654 = vunpack.c.h.b16 %v1593
  %v1655 = vunpack.c.l.b16 %v1594
  %v1656 = vunpack.c.h.b16 %v1594
  %v1657 = vunpack.c.l.b16 %v1595
  %v1658 = vunpack.c.h.b16 %v1595
  %v1659 = vunpack.c.l.b16 %v1596
  %v1660 = vunpack.c.h.b16 %v1596
  %v1661 = vunpack.c.l.b16 %v1597
  %v1662 = vunpack.c.h.b16 %v1597
  %v1663 = vpack.c.b16 %v1623, %v1621
  %v1664 = vpack.c.b16 %v1624, %v1622
  %v1665 = vpack.c.b16 %v1627, %v1625
  %v1666 = vpack.c.b16 %v1628, %v1626
  %v1667 = vpack.c.b16 %v1631, %v1629
  %v1668 = vpack.c.b16 %v1632, %v1630
  %v1669 = vpack.c.b16 %v1635, %v1633
  %v1670 = vpack.c.b16 %v1636, %v1634
  %v1671 = vpack.c.b16 %v1639, %v1637
  %v1672 = vpack.c.b16 %v1640, %v1638
  %v1673 = vpack.c.b16 %v1643, %v1641
  %v1674 = vpack.c.b16 %v1644, %v1642
  %v1675 = vpack.c.b16 %v1647, %v1645
  %v1676 = vpack.c.b16 %v1648, %v1646
  %v1677 = vpack.c.b16 %v1651, %v1649
  %v1678 = vpack.c.b16 %v1652, %v1650
  %v1679 = vpack.c.b16 %v1655, %v1653
  %v1680 = vpack.c.b16 %v1656, %v1654
  %v1681 = vpack.c.b16 %v1659, %v1657
  %v1682 = vpack.c.b16 %v1660, %v1658
  %v1683 = vpack.c.b16 %v1661, %v1661
  %v1684 = vpack.c.b16 %v1662, %v1662
  %v1706 = vsel %vm1261, %v1599, 0
  %v1709 = vsel %vm1277, %v1683, 0
  %v1712 = vsel %vm1277, %v1684, 0
  %1714 = vmatprep.subr.bf16.mxu0 %v1664
  %1715 = vmatpush1.bf16.msra.mxu0 %v1663
  %1716 = vmatprep.subr.bf16.mxu0 %v1666
  %1717 = vmatpush1.bf16.msra.mxu0 %v1665
  %1718 = vmatprep.subr.bf16.mxu0 %v1668
  %1719 = vmatpush1.bf16.msra.mxu0 %v1667
  %1720 = vmatprep.subr.bf16.mxu0 %v1670
  %1721 = vmatpush1.bf16.msra.mxu0 %v1669
  %1722 = vmatprep.subr.bf16.mxu0 %v1672
  %1723 = vmatpush1.bf16.msra.mxu0 %v1671
  %1724 = vmatprep.subr.bf16.mxu0 %v1674
  %1725 = vmatpush1.bf16.msra.mxu0 %v1673
  %1726 = vmatprep.subr.bf16.mxu0 %v1676
  %1727 = vmatpush1.bf16.msra.mxu0 %v1675
  %1728 = vmatprep.subr.bf16.mxu0 %v1678
  %1729 = vmatpush1.bf16.msra.mxu0 %v1677
  %1730 = vmatprep.subr.bf16.mxu0 %v1680
  %1731 = vmatpush1.bf16.msra.mxu0 %v1679
  %1732 = vmatprep.subr.bf16.mxu0 %v1682
  %1733 = vmatpush1.bf16.msra.mxu0 %v1681
  %1734 = vmatprep.subr.bf16.mxu0 %v1712
  %1735 = vmatpush1.bf16.msra.mxu0 %v1709
  %1736 = vmatprep.subr.bf16.mxu0 0
  %1737 = vmatpush1.bf16.msra.mxu0 0
  %1738 = vmatprep.subr.bf16.mxu0 0
  %1739 = vmatpush1.bf16.msra.mxu0 0
  %1740 = vmatprep.subr.bf16.mxu0 0
  %1741 = vmatpush1.bf16.msra.mxu0 0
  %1742 = vmatprep.subr.bf16.mxu0 0
  %1743 = vmatpush1.bf16.msra.mxu0 0
  %1744 = vmatprep.subr.bf16.mxu0 0
  %1745 = vmatpush1.bf16.msra.mxu0 0
  %1746 = vmatprep.mubr.bf16.mxu0 %v1476
  %1747 = vmatmul.mubr.bf16.gmra.mrb[0].mxu0 %v1116
  %v1748 = vpop.f32.mrb[0].mxu0
  %v1749 = vadd.f32 0.0, %v1748
  %v1750 = vpop.f32.mrb[0].mxu0
  %v1751 = vadd.f32 0.0, %v1750
  %v1752 = vpop.f32.mrb[0].mxu0
  %v1753 = vadd.f32 0.0, %v1752
  %v1754 = vpop.f32.mrb[0].mxu0
  %v1755 = vadd.f32 0.0, %v1754
  %1756 = vmatprep.mubr.bf16.mxu0 %v1479
  %1757 = vmatmul.mubr.bf16.gmra.mrb[0].mxu0 %v1118
  %v1758 = vpop.f32.mrb[0].mxu0
  %v1759 = vadd.f32 0.0, %v1758
  %v1760 = vpop.f32.mrb[0].mxu0
  %v1761 = vadd.f32 0.0, %v1760
  %v1762 = vpop.f32.mrb[0].mxu0
  %v1763 = vadd.f32 0.0, %v1762
  %v1764 = vpop.f32.mrb[0].mxu0
  %v1765 = vadd.f32 0.0, %v1764
  %1766 = vmatprep.mubr.bf16.mxu0 %v1482
  %1767 = vmatmul.mubr.bf16.gmra.mrb[0].mxu0 %v1120
  %v1768 = vpop.f32.mrb[0].mxu0
  %v1769 = vadd.f32 0.0, %v1768
  %v1770 = vpop.f32.mrb[0].mxu0
  %v1771 = vadd.f32 0.0, %v1770
  %v1772 = vpop.f32.mrb[0].mxu0
  %v1773 = vadd.f32 0.0, %v1772
  %v1774 = vpop.f32.mrb[0].mxu0
  %v1775 = vadd.f32 0.0, %v1774
  %1776 = vmatprep.mubr.bf16.mxu0 %v1485
  %1777 = vmatmul.mubr.bf16.gmra.mrb[0].mxu0 %v1122
  %v1778 = vpop.f32.mrb[0].mxu0
  %v1779 = vadd.f32 0.0, %v1778
  %v1780 = vpop.f32.mrb[0].mxu0
  %v1781 = vadd.f32 0.0, %v1780
  %v1782 = vpop.f32.mrb[0].mxu0
  %v1783 = vadd.f32 0.0, %v1782
  %v1784 = vpop.f32.mrb[0].mxu0
  %v1785 = vadd.f32 0.0, %v1784
  %1786 = vmatprep.mubr.bf16.mxu0 %v1706
  %1787 = vmatmul.mubr.bf16.gmra.mrb[0].mxu0 %v1598
  %v1788 = vpop.f32.mrb[0].mxu0
  %v1789 = vadd.f32 0.0, %v1788
  %v1790 = vpop.f32.mrb[0].mxu0
  %v1791 = vadd.f32 0.0, %v1790
  %v1792 = vpop.f32.mrb[0].mxu0
  %v1793 = vadd.f32 0.0, %v1792
  %v1794 = vpop.f32.mrb[0].mxu0
  %v1795 = vadd.f32 0.0, %v1794
  %1796 = vdwg.mxu0
  %v1797 = vadd.f32 %v1528, %v1749
  %v1798 = vadd.f32 %v1530, %v1751
  %v1799 = vadd.f32 %v1532, %v1753
  %v1800 = vadd.f32 %v1534, %v1755
  %v1801 = vadd.f32 %v1538, %v1759
  %v1802 = vadd.f32 %v1540, %v1761
  %v1803 = vadd.f32 %v1542, %v1763
  %v1804 = vadd.f32 %v1544, %v1765
  %v1805 = vadd.f32 %v1548, %v1769
  %v1806 = vadd.f32 %v1550, %v1771
  %v1807 = vadd.f32 %v1552, %v1773
  %v1808 = vadd.f32 %v1554, %v1775
  %v1809 = vadd.f32 %v1558, %v1779
  %v1810 = vadd.f32 %v1560, %v1781
  %v1811 = vadd.f32 %v1562, %v1783
  %v1812 = vadd.f32 %v1564, %v1785
  %v1813 = vadd.f32 %v1568, %v1789
  %v1814 = vadd.f32 %v1570, %v1791
  %v1815 = vadd.f32 %v1572, %v1793
  %v1816 = vadd.f32 %v1574, %v1795
  %s1817 = scalar_lea.vmem %s3, 504
  %v1818 = vld [vmem:[%s1817] sm:$0xff]
  %v1819 = vld [vmem:[%s1817 + $0x8] sm:$0xff]
  %v1820 = vld [vmem:[%s1817 + $0x10] sm:$0xff]
  %v1821 = vld [vmem:[%s1817 + $0x18] sm:$0xff]
  %v1822 = vld [vmem:[%s1817 + $0x20] sm:$0xff]
  %v1823 = vld [vmem:[%s1817 + $0x28] sm:$0xff]
  %v1824 = vld [vmem:[%s1817 + $0x30] sm:$0xff]
  %v1825 = vld [vmem:[%s1817 + $0x38] sm:$0xff]
  %v1826 = vld [vmem:[%s1817 + $0x40] sm:$0xff]
  %v1827 = vld [vmem:[%s1817 + $0x48] sm:$0xff]
  %v1828 = vld [vmem:[%s1817 + $0x50] sm:$0xff]
  %v1829 = vld [vmem:[%s1817 + $0x58] sm:$0xff]
  %v1830 = vld [vmem:[%s1817 + $0x60] sm:$0xff]
  %v1831 = vld [vmem:[%s1817 + $0x68] sm:$0xff]
  %v1832 = vld [vmem:[%s1817 + $0x70] sm:$0xff]
  %v1833 = vld [vmem:[%s1817 + $0x78] sm:$0xff]
  %v1834 = vld [vmem:[%s1817 + $0x80] sm:$0xff]
  %v1835 = vld [vmem:[%s1817 + $0x88] sm:$0xff]
  %v1836 = vld [vmem:[%s1817 + $0x90] sm:$0xff]
  %v1837 = vld [vmem:[%s1817 + $0x98] sm:$0xff]
  %v1838 = vld [vmem:[%s1817 + $0xa0] sm:$0xff]
  %v1839 = vpack.c.bf16 %v1089, %v1087
  %v1840 = vpack.c.bf16 %v1090, %v1088
  %v1862 = vunpack.c.l.b16 %v1818
  %v1863 = vunpack.c.h.b16 %v1818
  %v1864 = vunpack.c.l.b16 %v1819
  %v1865 = vunpack.c.h.b16 %v1819
  %v1866 = vunpack.c.l.b16 %v1820
  %v1867 = vunpack.c.h.b16 %v1820
  %v1868 = vunpack.c.l.b16 %v1821
  %v1869 = vunpack.c.h.b16 %v1821
  %v1870 = vunpack.c.l.b16 %v1822
  %v1871 = vunpack.c.h.b16 %v1822
  %v1872 = vunpack.c.l.b16 %v1823
  %v1873 = vunpack.c.h.b16 %v1823
  %v1874 = vunpack.c.l.b16 %v1824
  %v1875 = vunpack.c.h.b16 %v1824
  %v1876 = vunpack.c.l.b16 %v1825
  %v1877 = vunpack.c.h.b16 %v1825
  %v1878 = vunpack.c.l.b16 %v1826
  %v1879 = vunpack.c.h.b16 %v1826
  %v1880 = vunpack.c.l.b16 %v1827
  %v1881 = vunpack.c.h.b16 %v1827
  %v1882 = vunpack.c.l.b16 %v1828
  %v1883 = vunpack.c.h.b16 %v1828
  %v1884 = vunpack.c.l.b16 %v1829
  %v1885 = vunpack.c.h.b16 %v1829
  %v1886 = vunpack.c.l.b16 %v1830
  %v1887 = vunpack.c.h.b16 %v1830
  %v1888 = vunpack.c.l.b16 %v1831
  %v1889 = vunpack.c.h.b16 %v1831
  %v1890 = vunpack.c.l.b16 %v1832
  %v1891 = vunpack.c.h.b16 %v1832
  %v1892 = vunpack.c.l.b16 %v1833
  %v1893 = vunpack.c.h.b16 %v1833
  %v1894 = vunpack.c.l.b16 %v1834
  %v1895 = vunpack.c.h.b16 %v1834
  %v1896 = vunpack.c.l.b16 %v1835
  %v1897 = vunpack.c.h.b16 %v1835
  %v1898 = vunpack.c.l.b16 %v1836
  %v1899 = vunpack.c.h.b16 %v1836
  %v1900 = vunpack.c.l.b16 %v1837
  %v1901 = vunpack.c.h.b16 %v1837
  %v1902 = vunpack.c.l.b16 %v1838
  %v1903 = vunpack.c.h.b16 %v1838
  %v1904 = vpack.c.b16 %v1864, %v1862
  %v1905 = vpack.c.b16 %v1865, %v1863
  %v1906 = vpack.c.b16 %v1868, %v1866
  %v1907 = vpack.c.b16 %v1869, %v1867
  %v1908 = vpack.c.b16 %v1872, %v1870
  %v1909 = vpack.c.b16 %v1873, %v1871
  %v1910 = vpack.c.b16 %v1876, %v1874
  %v1911 = vpack.c.b16 %v1877, %v1875
  %v1912 = vpack.c.b16 %v1880, %v1878
  %v1913 = vpack.c.b16 %v1881, %v1879
  %v1914 = vpack.c.b16 %v1884, %v1882
  %v1915 = vpack.c.b16 %v1885, %v1883
  %v1916 = vpack.c.b16 %v1888, %v1886
  %v1917 = vpack.c.b16 %v1889, %v1887
  %v1918 = vpack.c.b16 %v1892, %v1890
  %v1919 = vpack.c.b16 %v1893, %v1891
  %v1920 = vpack.c.b16 %v1896, %v1894
  %v1921 = vpack.c.b16 %v1897, %v1895
  %v1922 = vpack.c.b16 %v1900, %v1898
  %v1923 = vpack.c.b16 %v1901, %v1899
  %v1924 = vpack.c.b16 %v1902, %v1902
  %v1925 = vpack.c.b16 %v1903, %v1903
  %v1947 = vsel %vm1261, %v1840, 0
  %v1950 = vsel %vm1277, %v1924, 0
  %v1953 = vsel %vm1277, %v1925, 0
  %1955 = vmatprep.subr.bf16.mxu0 %v1905
  %1956 = vmatpush1.bf16.msra.mxu0 %v1904
  %1957 = vmatprep.subr.bf16.mxu0 %v1907
  %1958 = vmatpush1.bf16.msra.mxu0 %v1906
  %1959 = vmatprep.subr.bf16.mxu0 %v1909
  %1960 = vmatpush1.bf16.msra.mxu0 %v1908
  %1961 = vmatprep.subr.bf16.mxu0 %v1911
  %1962 = vmatpush1.bf16.msra.mxu0 %v1910
  %1963 = vmatprep.subr.bf16.mxu0 %v1913
  %1964 = vmatpush1.bf16.msra.mxu0 %v1912
  %1965 = vmatprep.subr.bf16.mxu0 %v1915
  %1966 = vmatpush1.bf16.msra.mxu0 %v1914
  %1967 = vmatprep.subr.bf16.mxu0 %v1917
  %1968 = vmatpush1.bf16.msra.mxu0 %v1916
  %1969 = vmatprep.subr.bf16.mxu0 %v1919
  %1970 = vmatpush1.bf16.msra.mxu0 %v1918
  %1971 = vmatprep.subr.bf16.mxu0 %v1921
  %1972 = vmatpush1.bf16.msra.mxu0 %v1920
  %1973 = vmatprep.subr.bf16.mxu0 %v1923
  %1974 = vmatpush1.bf16.msra.mxu0 %v1922
  %1975 = vmatprep.subr.bf16.mxu0 %v1953
  %1976 = vmatpush1.bf16.msra.mxu0 %v1950
  %1977 = vmatprep.subr.bf16.mxu0 0
  %1978 = vmatpush1.bf16.msra.mxu0 0
  %1979 = vmatprep.subr.bf16.mxu0 0
  %1980 = vmatpush1.bf16.msra.mxu0 0
  %1981 = vmatprep.subr.bf16.mxu0 0
  %1982 = vmatpush1.bf16.msra.mxu0 0
  %1983 = vmatprep.subr.bf16.mxu0 0
  %1984 = vmatpush1.bf16.msra.mxu0 0
  %1985 = vmatprep.subr.bf16.mxu0 0
  %1986 = vmatpush1.bf16.msra.mxu0 0
  %1987 = vmatprep.mubr.bf16.mxu0 %v1266
  %1988 = vmatmul.mubr.bf16.gmra.mrb[0].mxu0 %v1148
  %v1989 = vpop.f32.mrb[0].mxu0
  %v1990 = vadd.f32 0.0, %v1989
  %v1991 = vpop.f32.mrb[0].mxu0
  %v1992 = vadd.f32 0.0, %v1991
  %v1993 = vpop.f32.mrb[0].mxu0
  %v1994 = vadd.f32 0.0, %v1993
  %v1995 = vpop.f32.mrb[0].mxu0
  %v1996 = vadd.f32 0.0, %v1995
  %1997 = vmatprep.mubr.bf16.mxu0 %v1269
  %1998 = vmatmul.mubr.bf16.gmra.mrb[0].mxu0 %v1150
  %v1999 = vpop.f32.mrb[0].mxu0
  %v2000 = vadd.f32 0.0, %v1999
  %v2001 = vpop.f32.mrb[0].mxu0
  %v2002 = vadd.f32 0.0, %v2001
  %v2003 = vpop.f32.mrb[0].mxu0
  %v2004 = vadd.f32 0.0, %v2003
  %v2005 = vpop.f32.mrb[0].mxu0
  %v2006 = vadd.f32 0.0, %v2005
  %2007 = vmatprep.mubr.bf16.mxu0 %v1272
  %2008 = vmatmul.mubr.bf16.gmra.mrb[0].mxu0 %v1152
  %v2009 = vpop.f32.mrb[0].mxu0
  %v2010 = vadd.f32 0.0, %v2009
  %v2011 = vpop.f32.mrb[0].mxu0
  %v2012 = vadd.f32 0.0, %v2011
  %v2013 = vpop.f32.mrb[0].mxu0
  %v2014 = vadd.f32 0.0, %v2013
  %v2015 = vpop.f32.mrb[0].mxu0
  %v2016 = vadd.f32 0.0, %v2015
  %2017 = vmatprep.mubr.bf16.mxu0 %v1275
  %2018 = vmatmul.mubr.bf16.gmra.mrb[0].mxu0 %v1154
  %v2019 = vpop.f32.mrb[0].mxu0
  %v2020 = vadd.f32 0.0, %v2019
  %v2021 = vpop.f32.mrb[0].mxu0
  %v2022 = vadd.f32 0.0, %v2021
  %v2023 = vpop.f32.mrb[0].mxu0
  %v2024 = vadd.f32 0.0, %v2023
  %v2025 = vpop.f32.mrb[0].mxu0
  %v2026 = vadd.f32 0.0, %v2025
  %2027 = vmatprep.mubr.bf16.mxu0 %v1947
  %2028 = vmatmul.mubr.bf16.gmra.mrb[0].mxu0 %v1839
  %v2029 = vpop.f32.mrb[0].mxu0
  %v2030 = vadd.f32 0.0, %v2029
  %v2031 = vpop.f32.mrb[0].mxu0
  %v2032 = vadd.f32 0.0, %v2031
  %v2033 = vpop.f32.mrb[0].mxu0
  %v2034 = vadd.f32 0.0, %v2033
  %v2035 = vpop.f32.mrb[0].mxu0
  %v2036 = vadd.f32 0.0, %v2035
  %2037 = vdwg.mxu0
  %v2038 = vadd.f32 %v1797, %v1990
  %v2039 = vadd.f32 %v1798, %v1992
  %v2040 = vadd.f32 %v1799, %v1994
  %v2041 = vadd.f32 %v1800, %v1996
  %v2042 = vadd.f32 %v1801, %v2000
  %v2043 = vadd.f32 %v1802, %v2002
  %v2044 = vadd.f32 %v1803, %v2004
  %v2045 = vadd.f32 %v1804, %v2006
  %v2046 = vadd.f32 %v1805, %v2010
  %v2047 = vadd.f32 %v1806, %v2012
  %v2048 = vadd.f32 %v1807, %v2014
  %v2049 = vadd.f32 %v1808, %v2016
  %v2050 = vadd.f32 %v1809, %v2020
  %v2051 = vadd.f32 %v1810, %v2022
  %v2052 = vadd.f32 %v1811, %v2024
  %v2053 = vadd.f32 %v1812, %v2026
  %v2054 = vadd.f32 %v1813, %v2030
  %v2055 = vadd.f32 %v1814, %v2032
  %v2056 = vadd.f32 %v1815, %v2034
  %v2057 = vadd.f32 %v1816, %v2036
  %s2058 = scalar_lea.vmem %s3, 672
  %v2059 = vld [vmem:[%s2058] sm:$0xff]
  %v2060 = vld [vmem:[%s2058 + $0x8] sm:$0xff]
  %v2061 = vld [vmem:[%s2058 + $0x10] sm:$0xff]
  %v2062 = vld [vmem:[%s2058 + $0x18] sm:$0xff]
  %v2063 = vld [vmem:[%s2058 + $0x20] sm:$0xff]
  %v2064 = vld [vmem:[%s2058 + $0x28] sm:$0xff]
  %v2065 = vld [vmem:[%s2058 + $0x30] sm:$0xff]
  %v2066 = vld [vmem:[%s2058 + $0x38] sm:$0xff]
  %v2067 = vld [vmem:[%s2058 + $0x40] sm:$0xff]
  %v2068 = vld [vmem:[%s2058 + $0x48] sm:$0xff]
  %v2069 = vld [vmem:[%s2058 + $0x50] sm:$0xff]
  %v2070 = vld [vmem:[%s2058 + $0x58] sm:$0xff]
  %v2071 = vld [vmem:[%s2058 + $0x60] sm:$0xff]
  %v2072 = vld [vmem:[%s2058 + $0x68] sm:$0xff]
  %v2073 = vld [vmem:[%s2058 + $0x70] sm:$0xff]
  %v2074 = vld [vmem:[%s2058 + $0x78] sm:$0xff]
  %v2075 = vld [vmem:[%s2058 + $0x80] sm:$0xff]
  %v2076 = vld [vmem:[%s2058 + $0x88] sm:$0xff]
  %v2077 = vld [vmem:[%s2058 + $0x90] sm:$0xff]
  %v2078 = vld [vmem:[%s2058 + $0x98] sm:$0xff]
  %v2079 = vld [vmem:[%s2058 + $0xa0] sm:$0xff]
  %v2080 = vpack.c.bf16 %v1091, %v1089
  %v2081 = vpack.c.bf16 %v1092, %v1090
  %v2103 = vunpack.c.l.b16 %v2059
  %v2104 = vunpack.c.h.b16 %v2059
  %v2105 = vunpack.c.l.b16 %v2060
  %v2106 = vunpack.c.h.b16 %v2060
  %v2107 = vunpack.c.l.b16 %v2061
  %v2108 = vunpack.c.h.b16 %v2061
  %v2109 = vunpack.c.l.b16 %v2062
  %v2110 = vunpack.c.h.b16 %v2062
  %v2111 = vunpack.c.l.b16 %v2063
  %v2112 = vunpack.c.h.b16 %v2063
  %v2113 = vunpack.c.l.b16 %v2064
  %v2114 = vunpack.c.h.b16 %v2064
  %v2115 = vunpack.c.l.b16 %v2065
  %v2116 = vunpack.c.h.b16 %v2065
  %v2117 = vunpack.c.l.b16 %v2066
  %v2118 = vunpack.c.h.b16 %v2066
  %v2119 = vunpack.c.l.b16 %v2067
  %v2120 = vunpack.c.h.b16 %v2067
  %v2121 = vunpack.c.l.b16 %v2068
  %v2122 = vunpack.c.h.b16 %v2068
  %v2123 = vunpack.c.l.b16 %v2069
  %v2124 = vunpack.c.h.b16 %v2069
  %v2125 = vunpack.c.l.b16 %v2070
  %v2126 = vunpack.c.h.b16 %v2070
  %v2127 = vunpack.c.l.b16 %v2071
  %v2128 = vunpack.c.h.b16 %v2071
  %v2129 = vunpack.c.l.b16 %v2072
  %v2130 = vunpack.c.h.b16 %v2072
  %v2131 = vunpack.c.l.b16 %v2073
  %v2132 = vunpack.c.h.b16 %v2073
  %v2133 = vunpack.c.l.b16 %v2074
  %v2134 = vunpack.c.h.b16 %v2074
  %v2135 = vunpack.c.l.b16 %v2075
  %v2136 = vunpack.c.h.b16 %v2075
  %v2137 = vunpack.c.l.b16 %v2076
  %v2138 = vunpack.c.h.b16 %v2076
  %v2139 = vunpack.c.l.b16 %v2077
  %v2140 = vunpack.c.h.b16 %v2077
  %v2141 = vunpack.c.l.b16 %v2078
  %v2142 = vunpack.c.h.b16 %v2078
  %v2143 = vunpack.c.l.b16 %v2079
  %v2144 = vunpack.c.h.b16 %v2079
  %v2145 = vpack.c.b16 %v2105, %v2103
  %v2146 = vpack.c.b16 %v2106, %v2104
  %v2147 = vpack.c.b16 %v2109, %v2107
  %v2148 = vpack.c.b16 %v2110, %v2108
  %v2149 = vpack.c.b16 %v2113, %v2111
  %v2150 = vpack.c.b16 %v2114, %v2112
  %v2151 = vpack.c.b16 %v2117, %v2115
  %v2152 = vpack.c.b16 %v2118, %v2116
  %v2153 = vpack.c.b16 %v2121, %v2119
  %v2154 = vpack.c.b16 %v2122, %v2120
  %v2155 = vpack.c.b16 %v2125, %v2123
  %v2156 = vpack.c.b16 %v2126, %v2124
  %v2157 = vpack.c.b16 %v2129, %v2127
  %v2158 = vpack.c.b16 %v2130, %v2128
  %v2159 = vpack.c.b16 %v2133, %v2131
  %v2160 = vpack.c.b16 %v2134, %v2132
  %v2161 = vpack.c.b16 %v2137, %v2135
  %v2162 = vpack.c.b16 %v2138, %v2136
  %v2163 = vpack.c.b16 %v2141, %v2139
  %v2164 = vpack.c.b16 %v2142, %v2140
  %v2165 = vpack.c.b16 %v2143, %v2143
  %v2166 = vpack.c.b16 %v2144, %v2144
  %v2188 = vsel %vm1261, %v2081, 0
  %v2191 = vsel %vm1277, %v2165, 0
  %v2194 = vsel %vm1277, %v2166, 0
  %2196 = vmatprep.subr.bf16.mxu0 %v2146
  %2197 = vmatpush1.bf16.msra.mxu0 %v2145
  %2198 = vmatprep.subr.bf16.mxu0 %v2148
  %2199 = vmatpush1.bf16.msra.mxu0 %v2147
  %2200 = vmatprep.subr.bf16.mxu0 %v2150
  %2201 = vmatpush1.bf16.msra.mxu0 %v2149
  %2202 = vmatprep.subr.bf16.mxu0 %v2152
  %2203 = vmatpush1.bf16.msra.mxu0 %v2151
  %2204 = vmatprep.subr.bf16.mxu0 %v2154
  %2205 = vmatpush1.bf16.msra.mxu0 %v2153
  %2206 = vmatprep.subr.bf16.mxu0 %v2156
  %2207 = vmatpush1.bf16.msra.mxu0 %v2155
  %2208 = vmatprep.subr.bf16.mxu0 %v2158
  %2209 = vmatpush1.bf16.msra.mxu0 %v2157
  %2210 = vmatprep.subr.bf16.mxu0 %v2160
  %2211 = vmatpush1.bf16.msra.mxu0 %v2159
  %2212 = vmatprep.subr.bf16.mxu0 %v2162
  %2213 = vmatpush1.bf16.msra.mxu0 %v2161
  %2214 = vmatprep.subr.bf16.mxu0 %v2164
  %2215 = vmatpush1.bf16.msra.mxu0 %v2163
  %2216 = vmatprep.subr.bf16.mxu0 %v2194
  %2217 = vmatpush1.bf16.msra.mxu0 %v2191
  %2218 = vmatprep.subr.bf16.mxu0 0
  %2219 = vmatpush1.bf16.msra.mxu0 0
  %2220 = vmatprep.subr.bf16.mxu0 0
  %2221 = vmatpush1.bf16.msra.mxu0 0
  %2222 = vmatprep.subr.bf16.mxu0 0
  %2223 = vmatpush1.bf16.msra.mxu0 0
  %2224 = vmatprep.subr.bf16.mxu0 0
  %2225 = vmatpush1.bf16.msra.mxu0 0
  %2226 = vmatprep.subr.bf16.mxu0 0
  %2227 = vmatpush1.bf16.msra.mxu0 0
  %2228 = vmatprep.mubr.bf16.mxu0 %v1479
  %2229 = vmatmul.mubr.bf16.gmra.mrb[0].mxu0 %v1118
  %v2230 = vpop.f32.mrb[0].mxu0
  %v2231 = vadd.f32 0.0, %v2230
  %v2232 = vpop.f32.mrb[0].mxu0
  %v2233 = vadd.f32 0.0, %v2232
  %v2234 = vpop.f32.mrb[0].mxu0
  %v2235 = vadd.f32 0.0, %v2234
  %v2236 = vpop.f32.mrb[0].mxu0
  %v2237 = vadd.f32 0.0, %v2236
  %2238 = vmatprep.mubr.bf16.mxu0 %v1482
  %2239 = vmatmul.mubr.bf16.gmra.mrb[0].mxu0 %v1120
  %v2240 = vpop.f32.mrb[0].mxu0
  %v2241 = vadd.f32 0.0, %v2240
  %v2242 = vpop.f32.mrb[0].mxu0
  %v2243 = vadd.f32 0.0, %v2242
  %v2244 = vpop.f32.mrb[0].mxu0
  %v2245 = vadd.f32 0.0, %v2244
  %v2246 = vpop.f32.mrb[0].mxu0
  %v2247 = vadd.f32 0.0, %v2246
  %2248 = vmatprep.mubr.bf16.mxu0 %v1485
  %2249 = vmatmul.mubr.bf16.gmra.mrb[0].mxu0 %v1122
  %v2250 = vpop.f32.mrb[0].mxu0
  %v2251 = vadd.f32 0.0, %v2250
  %v2252 = vpop.f32.mrb[0].mxu0
  %v2253 = vadd.f32 0.0, %v2252
  %v2254 = vpop.f32.mrb[0].mxu0
  %v2255 = vadd.f32 0.0, %v2254
  %v2256 = vpop.f32.mrb[0].mxu0
  %v2257 = vadd.f32 0.0, %v2256
  %2258 = vmatprep.mubr.bf16.mxu0 %v1706
  %2259 = vmatmul.mubr.bf16.gmra.mrb[0].mxu0 %v1598
  %v2260 = vpop.f32.mrb[0].mxu0
  %v2261 = vadd.f32 0.0, %v2260
  %v2262 = vpop.f32.mrb[0].mxu0
  %v2263 = vadd.f32 0.0, %v2262
  %v2264 = vpop.f32.mrb[0].mxu0
  %v2265 = vadd.f32 0.0, %v2264
  %v2266 = vpop.f32.mrb[0].mxu0
  %v2267 = vadd.f32 0.0, %v2266
  %2268 = vmatprep.mubr.bf16.mxu0 %v2188
  %2269 = vmatmul.mubr.bf16.gmra.mrb[0].mxu0 %v2080
  %v2270 = vpop.f32.mrb[0].mxu0
  %v2271 = vadd.f32 0.0, %v2270
  %v2272 = vpop.f32.mrb[0].mxu0
  %v2273 = vadd.f32 0.0, %v2272
  %v2274 = vpop.f32.mrb[0].mxu0
  %v2275 = vadd.f32 0.0, %v2274
  %v2276 = vpop.f32.mrb[0].mxu0
  %v2277 = vadd.f32 0.0, %v2276
  %2278 = vdwg.mxu0
  %v2279 = vadd.f32 %v2038, %v2231
  %v2280 = vadd.f32 %v2039, %v2233
  %v2281 = vadd.f32 %v2040, %v2235
  %v2282 = vadd.f32 %v2041, %v2237
  %v2283 = vadd.f32 %v2042, %v2241
  %v2284 = vadd.f32 %v2043, %v2243
  %v2285 = vadd.f32 %v2044, %v2245
  %v2286 = vadd.f32 %v2045, %v2247
  %v2287 = vadd.f32 %v2046, %v2251
  %v2288 = vadd.f32 %v2047, %v2253
  %v2289 = vadd.f32 %v2048, %v2255
  %v2290 = vadd.f32 %v2049, %v2257
  %v2291 = vadd.f32 %v2050, %v2261
  %v2292 = vadd.f32 %v2051, %v2263
  %v2293 = vadd.f32 %v2052, %v2265
  %v2294 = vadd.f32 %v2053, %v2267
  %v2295 = vadd.f32 %v2054, %v2271
  %v2296 = vadd.f32 %v2055, %v2273
  %v2297 = vadd.f32 %v2056, %v2275
  %v2298 = vadd.f32 %v2057, %v2277
  %v2299 = vld [vmem:[%s4] sm:$0x3]
  %v2301 = vlaneseq
  %v2302 = vshrl.u32 %v2301, 7
  %v2303 = vsub.s32 0, %v2302
  %v2304 = vrot.slane %v2299, %v2303
  %v2305 = vlaneseq
  %v2306 = vshrl.u32 %v2305, 7
  %v2307 = vsub.s32 1, %v2306
  %v2308 = vrot.slane %v2299, %v2307
  %v2311 = vadd.f32 %v2279, %v2304
  %v2312 = vadd.f32 %v2280, %v2308
  %v2313 = vadd.f32 %v2281, %v2304
  %v2314 = vadd.f32 %v2282, %v2308
  %v2315 = vadd.f32 %v2283, %v2304
  %v2316 = vadd.f32 %v2284, %v2308
  %v2317 = vadd.f32 %v2285, %v2304
  %v2318 = vadd.f32 %v2286, %v2308
  %v2319 = vadd.f32 %v2287, %v2304
  %v2320 = vadd.f32 %v2288, %v2308
  %v2321 = vadd.f32 %v2289, %v2304
  %v2322 = vadd.f32 %v2290, %v2308
  %v2323 = vadd.f32 %v2291, %v2304
  %v2324 = vadd.f32 %v2292, %v2308
  %v2325 = vadd.f32 %v2293, %v2304
  %v2326 = vadd.f32 %v2294, %v2308
  %v2327 = vadd.f32 %v2295, %v2304
  %v2328 = vadd.f32 %v2296, %v2308
  %v2329 = vadd.f32 %v2297, %v2304
  %v2330 = vadd.f32 %v2298, %v2308
  %v2331 = vtanh.pop %v2311
  %v2332 = vtanh.pop %v2312
  %v2333 = vtanh.pop %v2313
  %v2334 = vtanh.pop %v2314
  %v2335 = vtanh.pop %v2315
  %v2336 = vtanh.pop %v2316
  %v2337 = vtanh.pop %v2317
  %v2338 = vtanh.pop %v2318
  %v2339 = vtanh.pop %v2319
  %v2340 = vtanh.pop %v2320
  %v2341 = vtanh.pop %v2321
  %v2342 = vtanh.pop %v2322
  %v2343 = vtanh.pop %v2323
  %v2344 = vtanh.pop %v2324
  %v2345 = vtanh.pop %v2325
  %v2346 = vtanh.pop %v2326
  %v2347 = vtanh.pop %v2327
  %v2348 = vtanh.pop %v2328
  %v2349 = vtanh.pop %v2329
  %v2350 = vtanh.pop %v2330
  %v2351 = vadd.f32 %v2331, %v2333
  %v2352 = vadd.f32 %v2332, %v2334
  %v2353 = vadd.f32 %v2335, %v2337
  %v2354 = vadd.f32 %v2336, %v2338
  %v2355 = vadd.f32 %v2339, %v2341
  %v2356 = vadd.f32 %v2340, %v2342
  %v2357 = vadd.f32 %v2343, %v2345
  %v2358 = vadd.f32 %v2344, %v2346
  %v2359 = vadd.f32 %v2347, %v2349
  %v2360 = vadd.f32 %v2348, %v2350
  %v2361 = vmul.f32 %v2351, 0.5
  %v2362 = vmul.f32 %v2352, 0.5
  %v2363 = vmul.f32 %v2353, 0.5
  %v2364 = vmul.f32 %v2354, 0.5
  %v2365 = vmul.f32 %v2355, 0.5
  %v2366 = vmul.f32 %v2356, 0.5
  %v2367 = vmul.f32 %v2357, 0.5
  %v2368 = vmul.f32 %v2358, 0.5
  %v2369 = vmul.f32 %v2359, 0.5
  %v2370 = vmul.f32 %v2360, 0.5
  %v2371 = vld [vmem:[%s5] sm:$0xf]
  %v2372 = vld [vmem:[%s5 + $0x4] sm:$0xf]
  %v2373 = vld [vmem:[%s5 + $0x8] sm:$0xf]
  %v2374 = vld [vmem:[%s5 + $0xc] sm:$0xf]
  %v2375 = vld [vmem:[%s5 + $0x10] sm:$0xf]
  %v2376 = vld [vmem:[%s5 + $0x14] sm:$0xf]
  %v2377 = vld [vmem:[%s5 + $0x18] sm:$0xf]
  %v2378 = vld [vmem:[%s5 + $0x1c] sm:$0xf]
  %v2379 = vld [vmem:[%s5 + $0x20] sm:$0xf]
  %v2380 = vld [vmem:[%s5 + $0x24] sm:$0xf]
  %v2381 = vld [vmem:[%s5 + $0x28] sm:$0xf]
  %v2382 = vld [vmem:[%s5 + $0x2c] sm:$0xf]
  %v2383 = vld [vmem:[%s5 + $0x30] sm:$0xf]
  %v2384 = vld [vmem:[%s5 + $0x34] sm:$0xf]
  %v2385 = vld [vmem:[%s5 + $0x38] sm:$0xf]
  %v2386 = vld [vmem:[%s5 + $0x3c] sm:$0xf]
  %v2387 = vld [vmem:[%s5 + $0x40] sm:$0xf]
  %v2388 = vld [vmem:[%s5 + $0x44] sm:$0xf]
  %v2389 = vld [vmem:[%s5 + $0x48] sm:$0xf]
  %v2390 = vld [vmem:[%s5 + $0x4c] sm:$0xf]
  %v2391 = vpack.c.bf16 %v2361, %v2361
  %v2392 = vpack.c.bf16 %v2362, %v2362
  %s2393 = scalar_lea.vmem %s5, 80
  %v2394 = vld [vmem:[%s2393] sm:$0xf]
  %v2395 = vld [vmem:[%s2393 + $0x4] sm:$0xf]
  %v2396 = vld [vmem:[%s2393 + $0x8] sm:$0xf]
  %v2397 = vld [vmem:[%s2393 + $0xc] sm:$0xf]
  %v2398 = vld [vmem:[%s2393 + $0x10] sm:$0xf]
  %v2399 = vld [vmem:[%s2393 + $0x14] sm:$0xf]
  %v2400 = vld [vmem:[%s2393 + $0x18] sm:$0xf]
  %v2401 = vld [vmem:[%s2393 + $0x1c] sm:$0xf]
  %v2402 = vld [vmem:[%s2393 + $0x20] sm:$0xf]
  %v2403 = vld [vmem:[%s2393 + $0x24] sm:$0xf]
  %v2404 = vld [vmem:[%s2393 + $0x28] sm:$0xf]
  %v2405 = vld [vmem:[%s2393 + $0x2c] sm:$0xf]
  %v2406 = vld [vmem:[%s2393 + $0x30] sm:$0xf]
  %v2407 = vld [vmem:[%s2393 + $0x34] sm:$0xf]
  %v2408 = vld [vmem:[%s2393 + $0x38] sm:$0xf]
  %v2409 = vld [vmem:[%s2393 + $0x3c] sm:$0xf]
  %v2410 = vld [vmem:[%s2393 + $0x40] sm:$0xf]
  %v2411 = vld [vmem:[%s2393 + $0x44] sm:$0xf]
  %v2412 = vld [vmem:[%s2393 + $0x48] sm:$0xf]
  %v2413 = vld [vmem:[%s2393 + $0x4c] sm:$0xf]
  %v2414 = vpack.c.bf16 %v2363, %v2363
  %v2415 = vpack.c.bf16 %v2364, %v2364
  %v2436 = vunpack.c.l.b16 %v2394
  %v2437 = vunpack.c.l.b16 %v2395
  %v2438 = vunpack.c.l.b16 %v2396
  %v2439 = vunpack.c.l.b16 %v2397
  %v2440 = vunpack.c.l.b16 %v2398
  %v2441 = vunpack.c.l.b16 %v2399
  %v2442 = vunpack.c.l.b16 %v2400
  %v2443 = vunpack.c.l.b16 %v2401
  %v2444 = vunpack.c.l.b16 %v2402
  %v2445 = vunpack.c.l.b16 %v2403
  %v2446 = vunpack.c.l.b16 %v2404
  %v2447 = vunpack.c.l.b16 %v2405
  %v2448 = vunpack.c.l.b16 %v2406
  %v2449 = vunpack.c.l.b16 %v2407
  %v2450 = vunpack.c.l.b16 %v2408
  %v2451 = vunpack.c.l.b16 %v2409
  %v2452 = vunpack.c.l.b16 %v2410
  %v2453 = vunpack.c.l.b16 %v2411
  %v2454 = vunpack.c.l.b16 %v2412
  %v2455 = vunpack.c.l.b16 %v2413
  %v2456 = vpack.c.b16 %v2437, %v2436
  %v2457 = vpack.c.b16 %v2439, %v2438
  %v2458 = vpack.c.b16 %v2441, %v2440
  %v2459 = vpack.c.b16 %v2443, %v2442
  %v2460 = vpack.c.b16 %v2445, %v2444
  %v2461 = vpack.c.b16 %v2447, %v2446
  %v2462 = vpack.c.b16 %v2449, %v2448
  %v2463 = vpack.c.b16 %v2451, %v2450
  %v2464 = vpack.c.b16 %v2453, %v2452
  %v2465 = vpack.c.b16 %v2455, %v2454
  %v2477 = vsel %vm519, %v2415, 0
  %2479 = vmatprep.subr.bf16.mxu0 0
  %2480 = vmatpush1.bf16.msra.mxu0 %v2456
  %2481 = vmatprep.subr.bf16.mxu0 0
  %2482 = vmatpush1.bf16.msra.mxu0 %v2457
  %2483 = vmatprep.subr.bf16.mxu0 0
  %2484 = vmatpush1.bf16.msra.mxu0 %v2458
  %2485 = vmatprep.subr.bf16.mxu0 0
  %2486 = vmatpush1.bf16.msra.mxu0 %v2459
  %2487 = vmatprep.subr.bf16.mxu0 0
  %2488 = vmatpush1.bf16.msra.mxu0 %v2460
  %2489 = vmatprep.subr.bf16.mxu0 0
  %2490 = vmatpush1.bf16.msra.mxu0 %v2461
  %2491 = vmatprep.subr.bf16.mxu0 0
  %2492 = vmatpush1.bf16.msra.mxu0 %v2462
  %2493 = vmatprep.subr.bf16.mxu0 0
  %2494 = vmatpush1.bf16.msra.mxu0 %v2463
  %2495 = vmatprep.subr.bf16.mxu0 0
  %2496 = vmatpush1.bf16.msra.mxu0 %v2464
  %2497 = vmatprep.subr.bf16.mxu0 0
  %2498 = vmatpush1.bf16.msra.mxu0 %v2465
  %2499 = vmatprep.subr.bf16.mxu0 0
  %2500 = vmatpush1.bf16.msra.mxu0 0
  %2501 = vmatprep.subr.bf16.mxu0 0
  %2502 = vmatpush1.bf16.msra.mxu0 0
  %2503 = vmatprep.subr.bf16.mxu0 0
  %2504 = vmatpush1.bf16.msra.mxu0 0
  %2505 = vmatprep.subr.bf16.mxu0 0
  %2506 = vmatpush1.bf16.msra.mxu0 0
  %2507 = vmatprep.subr.bf16.mxu0 0
  %2508 = vmatpush1.bf16.msra.mxu0 0
  %2509 = vmatprep.subr.bf16.mxu0 0
  %2510 = vmatpush1.bf16.msra.mxu0 0
  %2511 = vmatprep.mubr.bf16.mxu0 %v2477
  %2512 = vmatmul.mubr.bf16.gmra.mrb[0].mxu0 %v2414
  %v2513 = vpop.f32.mrb[0].mxu0
  %v2514 = vadd.f32 0.0, %v2513
  %v2515 = vpop.f32.mrb[0].mxu0
  %v2516 = vpop.f32.mrb[0].mxu0
  %v2517 = vpop.f32.mrb[0].mxu0
  %2518 = vdwg.mxu0
  %v2539 = vunpack.c.l.b16 %v2371
  %v2540 = vunpack.c.l.b16 %v2372
  %v2541 = vunpack.c.l.b16 %v2373
  %v2542 = vunpack.c.l.b16 %v2374
  %v2543 = vunpack.c.l.b16 %v2375
  %v2544 = vunpack.c.l.b16 %v2376
  %v2545 = vunpack.c.l.b16 %v2377
  %v2546 = vunpack.c.l.b16 %v2378
  %v2547 = vunpack.c.l.b16 %v2379
  %v2548 = vunpack.c.l.b16 %v2380
  %v2549 = vunpack.c.l.b16 %v2381
  %v2550 = vunpack.c.l.b16 %v2382
  %v2551 = vunpack.c.l.b16 %v2383
  %v2552 = vunpack.c.l.b16 %v2384
  %v2553 = vunpack.c.l.b16 %v2385
  %v2554 = vunpack.c.l.b16 %v2386
  %v2555 = vunpack.c.l.b16 %v2387
  %v2556 = vunpack.c.l.b16 %v2388
  %v2557 = vunpack.c.l.b16 %v2389
  %v2558 = vunpack.c.l.b16 %v2390
  %v2559 = vpack.c.b16 %v2540, %v2539
  %v2560 = vpack.c.b16 %v2542, %v2541
  %v2561 = vpack.c.b16 %v2544, %v2543
  %v2562 = vpack.c.b16 %v2546, %v2545
  %v2563 = vpack.c.b16 %v2548, %v2547
  %v2564 = vpack.c.b16 %v2550, %v2549
  %v2565 = vpack.c.b16 %v2552, %v2551
  %v2566 = vpack.c.b16 %v2554, %v2553
  %v2567 = vpack.c.b16 %v2556, %v2555
  %v2568 = vpack.c.b16 %v2558, %v2557
  %v2580 = vsel %vm519, %v2392, 0
  %2582 = vmatprep.subr.bf16.mxu0 0
  %2583 = vmatpush1.bf16.msra.mxu0 %v2559
  %2584 = vmatprep.subr.bf16.mxu0 0
  %2585 = vmatpush1.bf16.msra.mxu0 %v2560
  %2586 = vmatprep.subr.bf16.mxu0 0
  %2587 = vmatpush1.bf16.msra.mxu0 %v2561
  %2588 = vmatprep.subr.bf16.mxu0 0
  %2589 = vmatpush1.bf16.msra.mxu0 %v2562
  %2590 = vmatprep.subr.bf16.mxu0 0
  %2591 = vmatpush1.bf16.msra.mxu0 %v2563
  %2592 = vmatprep.subr.bf16.mxu0 0
  %2593 = vmatpush1.bf16.msra.mxu0 %v2564
  %2594 = vmatprep.subr.bf16.mxu0 0
  %2595 = vmatpush1.bf16.msra.mxu0 %v2565
  %2596 = vmatprep.subr.bf16.mxu0 0
  %2597 = vmatpush1.bf16.msra.mxu0 %v2566
  %2598 = vmatprep.subr.bf16.mxu0 0
  %2599 = vmatpush1.bf16.msra.mxu0 %v2567
  %2600 = vmatprep.subr.bf16.mxu0 0
  %2601 = vmatpush1.bf16.msra.mxu0 %v2568
  %2602 = vmatprep.subr.bf16.mxu0 0
  %2603 = vmatpush1.bf16.msra.mxu0 0
  %2604 = vmatprep.subr.bf16.mxu0 0
  %2605 = vmatpush1.bf16.msra.mxu0 0
  %2606 = vmatprep.subr.bf16.mxu0 0
  %2607 = vmatpush1.bf16.msra.mxu0 0
  %2608 = vmatprep.subr.bf16.mxu0 0
  %2609 = vmatpush1.bf16.msra.mxu0 0
  %2610 = vmatprep.subr.bf16.mxu0 0
  %2611 = vmatpush1.bf16.msra.mxu0 0
  %2612 = vmatprep.subr.bf16.mxu0 0
  %2613 = vmatpush1.bf16.msra.mxu0 0
  %2614 = vmatprep.mubr.bf16.mxu0 %v2580
  %2615 = vmatmul.mubr.bf16.gmra.mrb[0].mxu0 %v2391
  %v2616 = vpop.f32.mrb[0].mxu0
  %v2617 = vadd.f32 %v2514, %v2616
  %v2618 = vpop.f32.mrb[0].mxu0
  %v2619 = vpop.f32.mrb[0].mxu0
  %v2620 = vpop.f32.mrb[0].mxu0
  %2621 = vdwg.mxu0
  %s2622 = scalar_lea.vmem %s5, 160
  %v2623 = vld [vmem:[%s2622] sm:$0xf]
  %v2624 = vld [vmem:[%s2622 + $0x4] sm:$0xf]
  %v2625 = vld [vmem:[%s2622 + $0x8] sm:$0xf]
  %v2626 = vld [vmem:[%s2622 + $0xc] sm:$0xf]
  %v2627 = vld [vmem:[%s2622 + $0x10] sm:$0xf]
  %v2628 = vld [vmem:[%s2622 + $0x14] sm:$0xf]
  %v2629 = vld [vmem:[%s2622 + $0x18] sm:$0xf]
  %v2630 = vld [vmem:[%s2622 + $0x1c] sm:$0xf]
  %v2631 = vld [vmem:[%s2622 + $0x20] sm:$0xf]
  %v2632 = vld [vmem:[%s2622 + $0x24] sm:$0xf]
  %v2633 = vld [vmem:[%s2622 + $0x28] sm:$0xf]
  %v2634 = vld [vmem:[%s2622 + $0x2c] sm:$0xf]
  %v2635 = vld [vmem:[%s2622 + $0x30] sm:$0xf]
  %v2636 = vld [vmem:[%s2622 + $0x34] sm:$0xf]
  %v2637 = vld [vmem:[%s2622 + $0x38] sm:$0xf]
  %v2638 = vld [vmem:[%s2622 + $0x3c] sm:$0xf]
  %v2639 = vld [vmem:[%s2622 + $0x40] sm:$0xf]
  %v2640 = vld [vmem:[%s2622 + $0x44] sm:$0xf]
  %v2641 = vld [vmem:[%s2622 + $0x48] sm:$0xf]
  %v2642 = vld [vmem:[%s2622 + $0x4c] sm:$0xf]
  %v2643 = vpack.c.bf16 %v2365, %v2365
  %v2644 = vpack.c.bf16 %v2366, %v2366
  %v2665 = vunpack.c.l.b16 %v2623
  %v2666 = vunpack.c.l.b16 %v2624
  %v2667 = vunpack.c.l.b16 %v2625
  %v2668 = vunpack.c.l.b16 %v2626
  %v2669 = vunpack.c.l.b16 %v2627
  %v2670 = vunpack.c.l.b16 %v2628
  %v2671 = vunpack.c.l.b16 %v2629
  %v2672 = vunpack.c.l.b16 %v2630
  %v2673 = vunpack.c.l.b16 %v2631
  %v2674 = vunpack.c.l.b16 %v2632
  %v2675 = vunpack.c.l.b16 %v2633
  %v2676 = vunpack.c.l.b16 %v2634
  %v2677 = vunpack.c.l.b16 %v2635
  %v2678 = vunpack.c.l.b16 %v2636
  %v2679 = vunpack.c.l.b16 %v2637
  %v2680 = vunpack.c.l.b16 %v2638
  %v2681 = vunpack.c.l.b16 %v2639
  %v2682 = vunpack.c.l.b16 %v2640
  %v2683 = vunpack.c.l.b16 %v2641
  %v2684 = vunpack.c.l.b16 %v2642
  %v2685 = vpack.c.b16 %v2666, %v2665
  %v2686 = vpack.c.b16 %v2668, %v2667
  %v2687 = vpack.c.b16 %v2670, %v2669
  %v2688 = vpack.c.b16 %v2672, %v2671
  %v2689 = vpack.c.b16 %v2674, %v2673
  %v2690 = vpack.c.b16 %v2676, %v2675
  %v2691 = vpack.c.b16 %v2678, %v2677
  %v2692 = vpack.c.b16 %v2680, %v2679
  %v2693 = vpack.c.b16 %v2682, %v2681
  %v2694 = vpack.c.b16 %v2684, %v2683
  %v2706 = vsel %vm519, %v2644, 0
  %2708 = vmatprep.subr.bf16.mxu0 0
  %2709 = vmatpush1.bf16.msra.mxu0 %v2685
  %2710 = vmatprep.subr.bf16.mxu0 0
  %2711 = vmatpush1.bf16.msra.mxu0 %v2686
  %2712 = vmatprep.subr.bf16.mxu0 0
  %2713 = vmatpush1.bf16.msra.mxu0 %v2687
  %2714 = vmatprep.subr.bf16.mxu0 0
  %2715 = vmatpush1.bf16.msra.mxu0 %v2688
  %2716 = vmatprep.subr.bf16.mxu0 0
  %2717 = vmatpush1.bf16.msra.mxu0 %v2689
  %2718 = vmatprep.subr.bf16.mxu0 0
  %2719 = vmatpush1.bf16.msra.mxu0 %v2690
  %2720 = vmatprep.subr.bf16.mxu0 0
  %2721 = vmatpush1.bf16.msra.mxu0 %v2691
  %2722 = vmatprep.subr.bf16.mxu0 0
  %2723 = vmatpush1.bf16.msra.mxu0 %v2692
  %2724 = vmatprep.subr.bf16.mxu0 0
  %2725 = vmatpush1.bf16.msra.mxu0 %v2693
  %2726 = vmatprep.subr.bf16.mxu0 0
  %2727 = vmatpush1.bf16.msra.mxu0 %v2694
  %2728 = vmatprep.subr.bf16.mxu0 0
  %2729 = vmatpush1.bf16.msra.mxu0 0
  %2730 = vmatprep.subr.bf16.mxu0 0
  %2731 = vmatpush1.bf16.msra.mxu0 0
  %2732 = vmatprep.subr.bf16.mxu0 0
  %2733 = vmatpush1.bf16.msra.mxu0 0
  %2734 = vmatprep.subr.bf16.mxu0 0
  %2735 = vmatpush1.bf16.msra.mxu0 0
  %2736 = vmatprep.subr.bf16.mxu0 0
  %2737 = vmatpush1.bf16.msra.mxu0 0
  %2738 = vmatprep.subr.bf16.mxu0 0
  %2739 = vmatpush1.bf16.msra.mxu0 0
  %2740 = vmatprep.mubr.bf16.mxu0 %v2706
  %2741 = vmatmul.mubr.bf16.gmra.mrb[0].mxu0 %v2643
  %v2742 = vpop.f32.mrb[0].mxu0
  %v2743 = vadd.f32 0.0, %v2742
  %v2744 = vpop.f32.mrb[0].mxu0
  %v2745 = vpop.f32.mrb[0].mxu0
  %v2746 = vpop.f32.mrb[0].mxu0
  %2747 = vdwg.mxu0
  %v2748 = vadd.f32 %v2617, %v2743
  %s2749 = scalar_lea.vmem %s5, 240
  %v2750 = vld [vmem:[%s2749] sm:$0xf]
  %v2751 = vld [vmem:[%s2749 + $0x4] sm:$0xf]
  %v2752 = vld [vmem:[%s2749 + $0x8] sm:$0xf]
  %v2753 = vld [vmem:[%s2749 + $0xc] sm:$0xf]
  %v2754 = vld [vmem:[%s2749 + $0x10] sm:$0xf]
  %v2755 = vld [vmem:[%s2749 + $0x14] sm:$0xf]
  %v2756 = vld [vmem:[%s2749 + $0x18] sm:$0xf]
  %v2757 = vld [vmem:[%s2749 + $0x1c] sm:$0xf]
  %v2758 = vld [vmem:[%s2749 + $0x20] sm:$0xf]
  %v2759 = vld [vmem:[%s2749 + $0x24] sm:$0xf]
  %v2760 = vld [vmem:[%s2749 + $0x28] sm:$0xf]
  %v2761 = vld [vmem:[%s2749 + $0x2c] sm:$0xf]
  %v2762 = vld [vmem:[%s2749 + $0x30] sm:$0xf]
  %v2763 = vld [vmem:[%s2749 + $0x34] sm:$0xf]
  %v2764 = vld [vmem:[%s2749 + $0x38] sm:$0xf]
  %v2765 = vld [vmem:[%s2749 + $0x3c] sm:$0xf]
  %v2766 = vld [vmem:[%s2749 + $0x40] sm:$0xf]
  %v2767 = vld [vmem:[%s2749 + $0x44] sm:$0xf]
  %v2768 = vld [vmem:[%s2749 + $0x48] sm:$0xf]
  %v2769 = vld [vmem:[%s2749 + $0x4c] sm:$0xf]
  %v2770 = vpack.c.bf16 %v2367, %v2367
  %v2771 = vpack.c.bf16 %v2368, %v2368
  %v2792 = vunpack.c.l.b16 %v2750
  %v2793 = vunpack.c.l.b16 %v2751
  %v2794 = vunpack.c.l.b16 %v2752
  %v2795 = vunpack.c.l.b16 %v2753
  %v2796 = vunpack.c.l.b16 %v2754
  %v2797 = vunpack.c.l.b16 %v2755
  %v2798 = vunpack.c.l.b16 %v2756
  %v2799 = vunpack.c.l.b16 %v2757
  %v2800 = vunpack.c.l.b16 %v2758
  %v2801 = vunpack.c.l.b16 %v2759
  %v2802 = vunpack.c.l.b16 %v2760
  %v2803 = vunpack.c.l.b16 %v2761
  %v2804 = vunpack.c.l.b16 %v2762
  %v2805 = vunpack.c.l.b16 %v2763
  %v2806 = vunpack.c.l.b16 %v2764
  %v2807 = vunpack.c.l.b16 %v2765
  %v2808 = vunpack.c.l.b16 %v2766
  %v2809 = vunpack.c.l.b16 %v2767
  %v2810 = vunpack.c.l.b16 %v2768
  %v2811 = vunpack.c.l.b16 %v2769
  %v2812 = vpack.c.b16 %v2793, %v2792
  %v2813 = vpack.c.b16 %v2795, %v2794
  %v2814 = vpack.c.b16 %v2797, %v2796
  %v2815 = vpack.c.b16 %v2799, %v2798
  %v2816 = vpack.c.b16 %v2801, %v2800
  %v2817 = vpack.c.b16 %v2803, %v2802
  %v2818 = vpack.c.b16 %v2805, %v2804
  %v2819 = vpack.c.b16 %v2807, %v2806
  %v2820 = vpack.c.b16 %v2809, %v2808
  %v2821 = vpack.c.b16 %v2811, %v2810
  %v2833 = vsel %vm519, %v2771, 0
  %2835 = vmatprep.subr.bf16.mxu0 0
  %2836 = vmatpush1.bf16.msra.mxu0 %v2812
  %2837 = vmatprep.subr.bf16.mxu0 0
  %2838 = vmatpush1.bf16.msra.mxu0 %v2813
  %2839 = vmatprep.subr.bf16.mxu0 0
  %2840 = vmatpush1.bf16.msra.mxu0 %v2814
  %2841 = vmatprep.subr.bf16.mxu0 0
  %2842 = vmatpush1.bf16.msra.mxu0 %v2815
  %2843 = vmatprep.subr.bf16.mxu0 0
  %2844 = vmatpush1.bf16.msra.mxu0 %v2816
  %2845 = vmatprep.subr.bf16.mxu0 0
  %2846 = vmatpush1.bf16.msra.mxu0 %v2817
  %2847 = vmatprep.subr.bf16.mxu0 0
  %2848 = vmatpush1.bf16.msra.mxu0 %v2818
  %2849 = vmatprep.subr.bf16.mxu0 0
  %2850 = vmatpush1.bf16.msra.mxu0 %v2819
  %2851 = vmatprep.subr.bf16.mxu0 0
  %2852 = vmatpush1.bf16.msra.mxu0 %v2820
  %2853 = vmatprep.subr.bf16.mxu0 0
  %2854 = vmatpush1.bf16.msra.mxu0 %v2821
  %2855 = vmatprep.subr.bf16.mxu0 0
  %2856 = vmatpush1.bf16.msra.mxu0 0
  %2857 = vmatprep.subr.bf16.mxu0 0
  %2858 = vmatpush1.bf16.msra.mxu0 0
  %2859 = vmatprep.subr.bf16.mxu0 0
  %2860 = vmatpush1.bf16.msra.mxu0 0
  %2861 = vmatprep.subr.bf16.mxu0 0
  %2862 = vmatpush1.bf16.msra.mxu0 0
  %2863 = vmatprep.subr.bf16.mxu0 0
  %2864 = vmatpush1.bf16.msra.mxu0 0
  %2865 = vmatprep.subr.bf16.mxu0 0
  %2866 = vmatpush1.bf16.msra.mxu0 0
  %2867 = vmatprep.mubr.bf16.mxu0 %v2833
  %2868 = vmatmul.mubr.bf16.gmra.mrb[0].mxu0 %v2770
  %v2869 = vpop.f32.mrb[0].mxu0
  %v2870 = vadd.f32 0.0, %v2869
  %v2871 = vpop.f32.mrb[0].mxu0
  %v2872 = vpop.f32.mrb[0].mxu0
  %v2873 = vpop.f32.mrb[0].mxu0
  %2874 = vdwg.mxu0
  %v2875 = vadd.f32 %v2748, %v2870
  %s2876 = scalar_lea.vmem %s5, 320
  %v2877 = vld [vmem:[%s2876] sm:$0xf]
  %v2878 = vld [vmem:[%s2876 + $0x4] sm:$0xf]
  %v2879 = vld [vmem:[%s2876 + $0x8] sm:$0xf]
  %v2880 = vld [vmem:[%s2876 + $0xc] sm:$0xf]
  %v2881 = vld [vmem:[%s2876 + $0x10] sm:$0xf]
  %v2882 = vld [vmem:[%s2876 + $0x14] sm:$0xf]
  %v2883 = vld [vmem:[%s2876 + $0x18] sm:$0xf]
  %v2884 = vld [vmem:[%s2876 + $0x1c] sm:$0xf]
  %v2885 = vld [vmem:[%s2876 + $0x20] sm:$0xf]
  %v2886 = vld [vmem:[%s2876 + $0x24] sm:$0xf]
  %v2887 = vld [vmem:[%s2876 + $0x28] sm:$0xf]
  %v2888 = vld [vmem:[%s2876 + $0x2c] sm:$0xf]
  %v2889 = vld [vmem:[%s2876 + $0x30] sm:$0xf]
  %v2890 = vld [vmem:[%s2876 + $0x34] sm:$0xf]
  %v2891 = vld [vmem:[%s2876 + $0x38] sm:$0xf]
  %v2892 = vld [vmem:[%s2876 + $0x3c] sm:$0xf]
  %v2893 = vld [vmem:[%s2876 + $0x40] sm:$0xf]
  %v2894 = vld [vmem:[%s2876 + $0x44] sm:$0xf]
  %v2895 = vld [vmem:[%s2876 + $0x48] sm:$0xf]
  %v2896 = vld [vmem:[%s2876 + $0x4c] sm:$0xf]
  %v2897 = vpack.c.bf16 %v2369, %v2369
  %v2898 = vpack.c.bf16 %v2370, %v2370
  %v2919 = vunpack.c.l.b16 %v2877
  %v2920 = vunpack.c.l.b16 %v2878
  %v2921 = vunpack.c.l.b16 %v2879
  %v2922 = vunpack.c.l.b16 %v2880
  %v2923 = vunpack.c.l.b16 %v2881
  %v2924 = vunpack.c.l.b16 %v2882
  %v2925 = vunpack.c.l.b16 %v2883
  %v2926 = vunpack.c.l.b16 %v2884
  %v2927 = vunpack.c.l.b16 %v2885
  %v2928 = vunpack.c.l.b16 %v2886
  %v2929 = vunpack.c.l.b16 %v2887
  %v2930 = vunpack.c.l.b16 %v2888
  %v2931 = vunpack.c.l.b16 %v2889
  %v2932 = vunpack.c.l.b16 %v2890
  %v2933 = vunpack.c.l.b16 %v2891
  %v2934 = vunpack.c.l.b16 %v2892
  %v2935 = vunpack.c.l.b16 %v2893
  %v2936 = vunpack.c.l.b16 %v2894
  %v2937 = vunpack.c.l.b16 %v2895
  %v2938 = vunpack.c.l.b16 %v2896
  %v2939 = vpack.c.b16 %v2920, %v2919
  %v2940 = vpack.c.b16 %v2922, %v2921
  %v2941 = vpack.c.b16 %v2924, %v2923
  %v2942 = vpack.c.b16 %v2926, %v2925
  %v2943 = vpack.c.b16 %v2928, %v2927
  %v2944 = vpack.c.b16 %v2930, %v2929
  %v2945 = vpack.c.b16 %v2932, %v2931
  %v2946 = vpack.c.b16 %v2934, %v2933
  %v2947 = vpack.c.b16 %v2936, %v2935
  %v2948 = vpack.c.b16 %v2938, %v2937
  %v2960 = vsel %vm519, %v2898, 0
  %2962 = vmatprep.subr.bf16.mxu0 0
  %2963 = vmatpush1.bf16.msra.mxu0 %v2939
  %2964 = vmatprep.subr.bf16.mxu0 0
  %2965 = vmatpush1.bf16.msra.mxu0 %v2940
  %2966 = vmatprep.subr.bf16.mxu0 0
  %2967 = vmatpush1.bf16.msra.mxu0 %v2941
  %2968 = vmatprep.subr.bf16.mxu0 0
  %2969 = vmatpush1.bf16.msra.mxu0 %v2942
  %2970 = vmatprep.subr.bf16.mxu0 0
  %2971 = vmatpush1.bf16.msra.mxu0 %v2943
  %2972 = vmatprep.subr.bf16.mxu0 0
  %2973 = vmatpush1.bf16.msra.mxu0 %v2944
  %2974 = vmatprep.subr.bf16.mxu0 0
  %2975 = vmatpush1.bf16.msra.mxu0 %v2945
  %2976 = vmatprep.subr.bf16.mxu0 0
  %2977 = vmatpush1.bf16.msra.mxu0 %v2946
  %2978 = vmatprep.subr.bf16.mxu0 0
  %2979 = vmatpush1.bf16.msra.mxu0 %v2947
  %2980 = vmatprep.subr.bf16.mxu0 0
  %2981 = vmatpush1.bf16.msra.mxu0 %v2948
  %2982 = vmatprep.subr.bf16.mxu0 0
  %2983 = vmatpush1.bf16.msra.mxu0 0
  %2984 = vmatprep.subr.bf16.mxu0 0
  %2985 = vmatpush1.bf16.msra.mxu0 0
  %2986 = vmatprep.subr.bf16.mxu0 0
  %2987 = vmatpush1.bf16.msra.mxu0 0
  %2988 = vmatprep.subr.bf16.mxu0 0
  %2989 = vmatpush1.bf16.msra.mxu0 0
  %2990 = vmatprep.subr.bf16.mxu0 0
  %2991 = vmatpush1.bf16.msra.mxu0 0
  %2992 = vmatprep.subr.bf16.mxu0 0
  %2993 = vmatpush1.bf16.msra.mxu0 0
  %2994 = vmatprep.mubr.bf16.mxu0 %v2960
  %2995 = vmatmul.mubr.bf16.gmra.mrb[0].mxu0 %v2897
  %v2996 = vpop.f32.mrb[0].mxu0
  %v2997 = vadd.f32 0.0, %v2996
  %v2998 = vpop.f32.mrb[0].mxu0
  %v2999 = vpop.f32.mrb[0].mxu0
  %v3000 = vpop.f32.mrb[0].mxu0
  %3001 = vdwg.mxu0
  %v3002 = vadd.f32 %v2875, %v2997
  %v3003 = vld [vmem:[%s6] sm:$0x1]
  %v3005 = vlaneseq
  %v3006 = vshrl.u32 %v3005, 7
  %v3007 = vsub.s32 0, %v3006
  %v3008 = vrot.slane %v3003, %v3007
  %v3010 = vadd.f32 %v3002, %v3008
  %v3011 = vtanh.pop %v3010
  %v3012 = vld [vmem:[%s7] sm:$0xf]
  %v3013 = vld [vmem:[%s7 + $0x4] sm:$0xf]
  %v3014 = vld [vmem:[%s7 + $0x8] sm:$0xf]
  %v3015 = vld [vmem:[%s7 + $0xc] sm:$0xf]
  %v3016 = vld [vmem:[%s7 + $0x10] sm:$0xf]
  %v3017 = vld [vmem:[%s7 + $0x14] sm:$0xf]
  %v3018 = vld [vmem:[%s7 + $0x18] sm:$0xf]
  %v3019 = vld [vmem:[%s7 + $0x1c] sm:$0xf]
  %v3020 = vld [vmem:[%s7 + $0x20] sm:$0xf]
  %v3021 = vld [vmem:[%s7 + $0x24] sm:$0xf]
  %v3022 = vld [vmem:[%s7 + $0x28] sm:$0xf]
  %v3023 = vld [vmem:[%s7 + $0x2c] sm:$0xf]
  %v3024 = vld [vmem:[%s7 + $0x30] sm:$0xf]
  %v3025 = vld [vmem:[%s7 + $0x34] sm:$0xf]
  %v3026 = vld [vmem:[%s7 + $0x38] sm:$0xf]
  %v3027 = vld [vmem:[%s7 + $0x3c] sm:$0xf]
  %v3028 = vpack.c.bf16 %v3011, %v3011
  %v3029 = vld [vmem:[%s8] sm:$0x1]
  %v3031 = vlaneseq
  %v3032 = vshrl.u32 %v3031, 7
  %v3033 = vsub.s32 0, %v3032
  %v3034 = vrot.slane %v3029, %v3033
  %v3052 = vunpack.c.l.b16 %v3012
  %v3053 = vunpack.c.l.b16 %v3013
  %v3054 = vunpack.c.l.b16 %v3014
  %v3055 = vunpack.c.l.b16 %v3015
  %v3056 = vunpack.c.l.b16 %v3016
  %v3057 = vunpack.c.l.b16 %v3017
  %v3058 = vunpack.c.l.b16 %v3018
  %v3059 = vunpack.c.l.b16 %v3019
  %v3060 = vunpack.c.l.b16 %v3020
  %v3061 = vunpack.c.l.b16 %v3021
  %v3062 = vunpack.c.l.b16 %v3022
  %v3063 = vunpack.c.l.b16 %v3023
  %v3064 = vunpack.c.l.b16 %v3024
  %v3065 = vunpack.c.l.b16 %v3025
  %v3066 = vunpack.c.l.b16 %v3026
  %v3067 = vunpack.c.l.b16 %v3027
  %v3068 = vpack.c.b16 %v3053, %v3052
  %v3069 = vpack.c.b16 %v3055, %v3054
  %v3070 = vpack.c.b16 %v3057, %v3056
  %v3071 = vpack.c.b16 %v3059, %v3058
  %v3072 = vpack.c.b16 %v3061, %v3060
  %v3073 = vpack.c.b16 %v3063, %v3062
  %v3074 = vpack.c.b16 %v3065, %v3064
  %v3075 = vpack.c.b16 %v3067, %v3066
  %3084 = vmatprep.subr.bf16.mxu0 0
  %3085 = vmatpush1.bf16.msra.mxu0 %v3068
  %3086 = vmatprep.subr.bf16.mxu0 0
  %3087 = vmatpush1.bf16.msra.mxu0 %v3069
  %3088 = vmatprep.subr.bf16.mxu0 0
  %3089 = vmatpush1.bf16.msra.mxu0 %v3070
  %3090 = vmatprep.subr.bf16.mxu0 0
  %3091 = vmatpush1.bf16.msra.mxu0 %v3071
  %3092 = vmatprep.subr.bf16.mxu0 0
  %3093 = vmatpush1.bf16.msra.mxu0 %v3072
  %3094 = vmatprep.subr.bf16.mxu0 0
  %3095 = vmatpush1.bf16.msra.mxu0 %v3073
  %3096 = vmatprep.subr.bf16.mxu0 0
  %3097 = vmatpush1.bf16.msra.mxu0 %v3074
  %3098 = vmatprep.subr.bf16.mxu0 0
  %3099 = vmatpush1.bf16.msra.mxu0 %v3075
  %3100 = vmatprep.subr.bf16.mxu0 0
  %3101 = vmatpush1.bf16.msra.mxu0 0
  %3102 = vmatprep.subr.bf16.mxu0 0
  %3103 = vmatpush1.bf16.msra.mxu0 0
  %3104 = vmatprep.subr.bf16.mxu0 0
  %3105 = vmatpush1.bf16.msra.mxu0 0
  %3106 = vmatprep.subr.bf16.mxu0 0
  %3107 = vmatpush1.bf16.msra.mxu0 0
  %3108 = vmatprep.subr.bf16.mxu0 0
  %3109 = vmatpush1.bf16.msra.mxu0 0
  %3110 = vmatprep.subr.bf16.mxu0 0
  %3111 = vmatpush1.bf16.msra.mxu0 0
  %3112 = vmatprep.subr.bf16.mxu0 0
  %3113 = vmatpush1.bf16.msra.mxu0 0
  %3114 = vmatprep.subr.bf16.mxu0 0
  %3115 = vmatpush1.bf16.msra.mxu0 0
  %3116 = vmatprep.mubr.bf16.mxu0 0
  %3117 = vmatmul.mubr.bf16.gmra.mrb[0].mxu0 %v3028
  %v3118 = vpop.f32.mrb[0].mxu0
  %v3119 = vadd.f32 %v3034, %v3118
  %v3120 = vpop.f32.mrb[0].mxu0
  %v3121 = vpop.f32.mrb[0].mxu0
  %v3122 = vpop.f32.mrb[0].mxu0
  %3123 = vdwg.mxu0
  %v3124 = vtanh.pop %v3119
  %v3125 = vld [vmem:[%s9] sm:$0xf]
  %v3126 = vld [vmem:[%s9 + $0x4] sm:$0xf]
  %v3127 = vld [vmem:[%s9 + $0x8] sm:$0xf]
  %v3128 = vld [vmem:[%s9 + $0xc] sm:$0xf]
  %v3129 = vld [vmem:[%s9 + $0x10] sm:$0xf]
  %v3130 = vld [vmem:[%s9 + $0x14] sm:$0xf]
  %v3131 = vld [vmem:[%s9 + $0x18] sm:$0xf]
  %v3132 = vld [vmem:[%s9 + $0x1c] sm:$0xf]
  %v3133 = vld [vmem:[%s9 + $0x20] sm:$0xf]
  %v3134 = vld [vmem:[%s9 + $0x24] sm:$0xf]
  %v3135 = vld [vmem:[%s9 + $0x28] sm:$0xf]
  %v3136 = vld [vmem:[%s9 + $0x2c] sm:$0xf]
  %v3137 = vld [vmem:[%s9 + $0x30] sm:$0xf]
  %v3138 = vld [vmem:[%s9 + $0x34] sm:$0xf]
  %v3139 = vld [vmem:[%s9 + $0x38] sm:$0xf]
  %v3140 = vld [vmem:[%s9 + $0x3c] sm:$0xf]
  %v3141 = vpack.c.bf16 %v3124, %v3124
  %v3142 = vld [vmem:[%s10] sm:$0x1]
  %v3144 = vlaneseq
  %v3145 = vshrl.u32 %v3144, 7
  %v3146 = vsub.s32 0, %v3145
  %v3147 = vrot.slane %v3142, %v3146
  %v3165 = vunpack.c.l.b16 %v3125
  %v3166 = vunpack.c.l.b16 %v3126
  %v3167 = vunpack.c.l.b16 %v3127
  %v3168 = vunpack.c.l.b16 %v3128
  %v3169 = vunpack.c.l.b16 %v3129
  %v3170 = vunpack.c.l.b16 %v3130
  %v3171 = vunpack.c.l.b16 %v3131
  %v3172 = vunpack.c.l.b16 %v3132
  %v3173 = vunpack.c.l.b16 %v3133
  %v3174 = vunpack.c.l.b16 %v3134
  %v3175 = vunpack.c.l.b16 %v3135
  %v3176 = vunpack.c.l.b16 %v3136
  %v3177 = vunpack.c.l.b16 %v3137
  %v3178 = vunpack.c.l.b16 %v3138
  %v3179 = vunpack.c.l.b16 %v3139
  %v3180 = vunpack.c.l.b16 %v3140
  %v3181 = vpack.c.b16 %v3166, %v3165
  %v3182 = vpack.c.b16 %v3168, %v3167
  %v3183 = vpack.c.b16 %v3170, %v3169
  %v3184 = vpack.c.b16 %v3172, %v3171
  %v3185 = vpack.c.b16 %v3174, %v3173
  %v3186 = vpack.c.b16 %v3176, %v3175
  %v3187 = vpack.c.b16 %v3178, %v3177
  %v3188 = vpack.c.b16 %v3180, %v3179
  %3197 = vmatprep.subr.bf16.mxu0 0
  %3198 = vmatpush1.bf16.msra.mxu0 %v3181
  %3199 = vmatprep.subr.bf16.mxu0 0
  %3200 = vmatpush1.bf16.msra.mxu0 %v3182
  %3201 = vmatprep.subr.bf16.mxu0 0
  %3202 = vmatpush1.bf16.msra.mxu0 %v3183
  %3203 = vmatprep.subr.bf16.mxu0 0
  %3204 = vmatpush1.bf16.msra.mxu0 %v3184
  %3205 = vmatprep.subr.bf16.mxu0 0
  %3206 = vmatpush1.bf16.msra.mxu0 %v3185
  %3207 = vmatprep.subr.bf16.mxu0 0
  %3208 = vmatpush1.bf16.msra.mxu0 %v3186
  %3209 = vmatprep.subr.bf16.mxu0 0
  %3210 = vmatpush1.bf16.msra.mxu0 %v3187
  %3211 = vmatprep.subr.bf16.mxu0 0
  %3212 = vmatpush1.bf16.msra.mxu0 %v3188
  %3213 = vmatprep.subr.bf16.mxu0 0
  %3214 = vmatpush1.bf16.msra.mxu0 0
  %3215 = vmatprep.subr.bf16.mxu0 0
  %3216 = vmatpush1.bf16.msra.mxu0 0
  %3217 = vmatprep.subr.bf16.mxu0 0
  %3218 = vmatpush1.bf16.msra.mxu0 0
  %3219 = vmatprep.subr.bf16.mxu0 0
  %3220 = vmatpush1.bf16.msra.mxu0 0
  %3221 = vmatprep.subr.bf16.mxu0 0
  %3222 = vmatpush1.bf16.msra.mxu0 0
  %3223 = vmatprep.subr.bf16.mxu0 0
  %3224 = vmatpush1.bf16.msra.mxu0 0
  %3225 = vmatprep.subr.bf16.mxu0 0
  %3226 = vmatpush1.bf16.msra.mxu0 0
  %3227 = vmatprep.subr.bf16.mxu0 0
  %3228 = vmatpush1.bf16.msra.mxu0 0
  %3229 = vmatprep.mubr.bf16.mxu0 0
  %3230 = vmatmul.mubr.bf16.gmra.mrb[0].mxu0 %v3141
  %v3231 = vpop.f32.mrb[0].mxu0
  %v3232 = vadd.f32 %v3147, %v3231
  %v3233 = vpop.f32.mrb[0].mxu0
  %v3234 = vpop.f32.mrb[0].mxu0
  %v3235 = vpop.f32.mrb[0].mxu0
  %3236 = vdwg.mxu0
  %3237 = vst [vmem:[%s11] sm:$0xff] %v3232
  // Predicated region
  $region46: #{lenet5_forward.1} parent=0 // pred_check
    _
  $region47: #{lenet5_forward.1} parent=0 // pred_check_branch
    %3239 = sbr.rel (0) target = $region49
  $region48: #{lenet5_forward.1} parent=0 // pred_region
    _
  $region49: #{lenet5_forward.1} parent=0 // pred_fallthru
    _
  // Predicated region
  $region50: #{lenet5_forward.1} parent=0 // pred_check
    _
  $region51: #{lenet5_forward.1} parent=0 // pred_check_branch
    %3241 = sbr.rel (0) target = $region53
  $region52: #{lenet5_forward.1} parent=0 // pred_region
    _
  $region53: #{lenet5_forward.1} parent=0 // pred_fallthru
    _

</llo_original>
